<compile_context>
chip_gen: v5e
topology: v5e:2x2
jax: 0.10.0
libtpu: 0.0.40
codegen_flags: <defaults>
</compile_context>

<pallas_src>
import jax
import jax.numpy as jnp
from jax import lax
from jax.experimental import pallas as pl
from jax.experimental.pallas import tpu as pltpu


# ----------------------------------------------------------------------------
# MobileNetV2 feature extractor (plain JAX glue, NHWC, deterministic weights,
# eval-mode BN folded to identity).
# ----------------------------------------------------------------------------

MBV2_CFG = [
    # (expand_ratio, out_channels, num_blocks, stride)
    (1, 16, 1, 1),
    (6, 24, 2, 2),
    (6, 32, 3, 2),
    (6, 64, 4, 2),
    (6, 96, 3, 1),
    (6, 160, 3, 2),
    (6, 320, 1, 1),
]


def _conv(x, w, stride, groups, pad):
    # NHWC / HWIO: TPU-native conv layout.
    return lax.conv_general_dilated(
        x, w,
        window_strides=(stride, stride),
        padding=((pad, pad), (pad, pad)),
        feature_group_count=groups,
        dimension_numbers=('NHWC', 'HWIO', 'NHWC'))


def _relu6(x):
    return jnp.clip(x, 0.0, 6.0)


def _randw(key, shape, fan_in):
    return (jax.random.normal(key, shape, jnp.float32) /
            jnp.sqrt(jnp.float32(fan_in))).astype(jnp.float32)


def init_mobilenet_v2(key):
    keys = iter(jax.random.split(key, 256))
    layers = []
    # stem: 3x3 s2 conv -> 32ch, (BN), ReLU6       weight HWIO = (3,3,3,32)
    layers.append(('conv', _randw(next(keys), (3, 3, 3, 32), 27), 2, 1, 1))
    in_c = 32
    for t, c, n, s in MBV2_CFG:
        for i in range(n):
            stride = s if i == 0 else 1
            hidden = in_c * t
            blk = {'stride': stride, 'use_res': (stride == 1 and in_c == c)}
            if t != 1:
                blk['expand'] = _randw(next(keys), (1, 1, in_c, hidden), in_c)
            blk['dw'] = _randw(next(keys), (3, 3, 1, hidden), 9)           # depthwise
            blk['project'] = _randw(next(keys), (1, 1, hidden, c), hidden)
            layers.append(('block', blk))
            in_c = c
    # head conv: 1x1 -> 1280, (BN), ReLU6
    layers.append(('conv', _randw(next(keys), (1, 1, in_c, 1280), in_c), 1, 1, 0))
    return layers


def apply_mobilenet_v2(layers, x):
    # x is NHWC
    for entry in layers:
        if entry[0] == 'conv':
            _, w, stride, groups, pad = entry
            x = _relu6(_conv(x, w, stride, groups, pad))
        else:
            blk = entry[1]
            inp = x
            h = x
            if 'expand' in blk:
                h = _relu6(_conv(h, blk['expand'], 1, 1, 0))
            h = _relu6(_conv(h, blk['dw'], blk['stride'], h.shape[-1], 1))
            h = _conv(h, blk['project'], 1, 1, 0)
            x = inp + h if blk['use_res'] else h
    return x


# ----------------------------------------------------------------------------
# Pallas hot path: fused 4-head linear classifier.
#   partial[c, B, 128] = x[B, Kc] @ W[Kc, 128] (+ bias on shard 0)
#   out = sum_c partial[c]
# K is split across a leading "parallel" axis (2 shards -> both v7x TCs) and
# tiled along the trailing "arbitrary" axis; the f32 accumulator is the
# VMEM-resident output block itself.
# ----------------------------------------------------------------------------

def _heads_kernel(x_ref, w_ref, b_ref, o_ref):
    c = pl.program_id(0)          # K-shard (TensorCore) index
    k = pl.program_id(1)          # K-tile index within the shard

    @pl.when(k == 0)
    def _():
        bias = jnp.where(c == 0, b_ref[...], jnp.zeros_like(b_ref[...]))
        o_ref[...] = jnp.broadcast_to(bias, o_ref.shape)

    o_ref[...] += jnp.dot(x_ref[...], w_ref[...],
                          preferred_element_type=jnp.float32)


def multi_head_linear(x_flat, w_all, b_all, *, num_shards=2, tk=6272):
    B, K = x_flat.shape
    Kw, N = w_all.shape
    assert K == Kw and N % 128 == 0 and tk % 128 == 0
    assert K % (num_shards * tk) == 0
    steps = K // (num_shards * tk)

    flops = 2 * B * K * N
    bytes_accessed = (K * N * w_all.dtype.itemsize
                      + B * K * x_flat.dtype.itemsize
                      + num_shards * B * N * 4
                      + N * 4)

    partials = pl.pallas_call(
        _heads_kernel,
        out_shape=jax.ShapeDtypeStruct((num_shards, B, N), jnp.float32),
        grid_spec=pltpu.PrefetchScalarGridSpec(
            num_scalar_prefetch=0,
            grid=(num_shards, steps),
            in_specs=[
                pl.BlockSpec((B, tk), lambda c, k: (0, c * steps + k)),
                pl.BlockSpec((tk, N), lambda c, k: (c * steps + k, 0)),
                pl.BlockSpec((1, N), lambda c, k: (0, 0)),
            ],
            out_specs=pl.BlockSpec((None, B, N), lambda c, k: (c, 0, 0)),
        ),
        compiler_params=pltpu.CompilerParams(
            dimension_semantics=("parallel", "arbitrary")),
        cost_estimate=pl.CostEstimate(flops=flops, transcendentals=0,
                                      bytes_accessed=bytes_accessed),
    )(x_flat, w_all, b_all)

    return partials.sum(axis=0)     # [B, N] f32


# ----------------------------------------------------------------------------
# Full Model forward.
# ----------------------------------------------------------------------------

HEAD_DIMS = [17, 11, 4, 39]            # classification_1..4
FEAT_C, FEAT_H, FEAT_W = 1280, 7, 7
FEAT_DIM = FEAT_C * FEAT_H * FEAT_W    # 62720
N_PAD = 128                            # lane-dense padded head width (>= 71)


def init_heads(key):
    ws, bs = [], []
    keys = jax.random.split(key, 2 * len(HEAD_DIMS))
    bound = 1.0 / (FEAT_DIM ** 0.5)
    for i, d in enumerate(HEAD_DIMS):
        ws.append(jax.random.uniform(keys[2 * i], (FEAT_DIM, d),
                                     jnp.float32, -bound, bound))
        bs.append(jax.random.uniform(keys[2 * i + 1], (d,),
                                     jnp.float32, -bound, bound))
    w_all = jnp.concatenate(ws, axis=1)                       # [62720, 71] (C*H*W rows)
    b_all = jnp.concatenate(bs, axis=0)[None, :]              # [1, 71]
    total = sum(HEAD_DIMS)

    # One-time row permutation: rows are defined in the torch C*H*W flatten
    # order; the NHWC backbone flattens in H*W*C order, so remap rows so the
    # runtime flatten stays a free reshape.
    hh, ww, cc = jnp.meshgrid(jnp.arange(FEAT_H), jnp.arange(FEAT_W),
                              jnp.arange(FEAT_C), indexing='ij')
    perm = (cc * (FEAT_H * FEAT_W) + hh * FEAT_W + ww).reshape(-1)
    w_all = w_all[perm]

    w_all = jnp.pad(w_all, ((0, 0), (0, N_PAD - total)))      # [62720, 128]
    b_all = jnp.pad(b_all, ((0, 0), (0, N_PAD - total)))      # [1, 128]
    # bf16 weights (f32 accumulation happens in-kernel on the MXU).
    return w_all.astype(jnp.bfloat16), b_all.astype(jnp.float32)


def make_forward(backbone_layers, w_all, b_all):
    @jax.jit
    def forward(x):                                            # NCHW like PyTorch
        x = jnp.transpose(x, (0, 2, 3, 1))                     # -> NHWC once
        feat = apply_mobilenet_v2(backbone_layers, x)          # [B, 7, 7, 1280]
        flat = feat.reshape(feat.shape[0], -1)                 # [B, 62720] (H*W*C)
        flat = flat.astype(jnp.bfloat16)
        out = multi_head_linear(flat, w_all, b_all)            # [B, 128] f32 (Pallas)
        o1 = out[:, 0:17]
        o2 = out[:, 17:28]
        o3 = out[:, 28:32]
        o4 = out[:, 32:71]
        return o1, o2, o3, o4
    return forward


if __name__ == "__main__":
    key = jax.random.PRNGKey(0)
    k_backbone, k_heads, k_x = jax.random.split(key, 3)

    backbone_layers = init_mobilenet_v2(k_backbone)
    w_all, b_all = init_heads(k_heads)

    # MobileNetV2 geometry requires 224x224 input to yield 1280*7*7 features.
    x = jax.random.normal(k_x, (2, 3, 224, 224), jnp.float32)

    forward = make_forward(backbone_layers, w_all, b_all)
    out1, out2, out3, out4 = forward(x)
    jax.block_until_ready((out1, out2, out3, out4))

    # mirrors the PyTorch module's debug print of flattened argmaxes
    print('forward:', int(jnp.argmax(out1)), int(jnp.argmax(out2)),
          int(jnp.argmax(out3)), int(jnp.argmax(out4)))

    assert out1.shape == (2, 17) and out2.shape == (2, 11)
    assert out3.shape == (2, 4) and out4.shape == (2, 39)
    print("KERNEL_OK")
</pallas_src>

<mosaic_0001>
module attributes {stable_mosaic.version = 11 : i64} {
  func.func @_heads_kernel(%arg0: i32, %arg1: i32, %arg2: memref<2x6272xbf16, #tpu.memory_space<vmem>>, %arg3: memref<6272x128xbf16, #tpu.memory_space<vmem>>, %arg4: memref<1x128xf32, #tpu.memory_space<vmem>>, %arg5: memref<1x2x128xf32, #tpu.memory_space<vmem>>) attributes {dimension_semantics = [#tpu.dimension_semantics<parallel>, #tpu.dimension_semantics<arbitrary>], iteration_bounds = array<i64: 2, 5>, scalar_prefetch = 0 : i64, scratch_operands = 0 : i64, tpu.core_type = #tpu.core_type<tc>, window_params = [{transform_indices = @transform_0, window_bounds = array<i64: 2, 6272>}, {transform_indices = @transform_1, window_bounds = array<i64: 6272, 128>}, {pipeline_mode = #tpu.pipeline_mode<synchronous>, transform_indices = @transform_2, window_bounds = array<i64: 1, 128>}, {transform_indices = @transform_3, window_bounds = array<i64: 1, 2, 128>}]} {
    %c0_i32 = arith.constant 0 : i32
    %0 = arith.cmpi eq, %arg1, %c0_i32 : i32
    %1 = arith.extui %0 : i1 to i32
    %c0_i32_0 = arith.constant 0 : i32
    %2 = arith.cmpi ne, %1, %c0_i32_0 : i32
    scf.if %2 {
      %c0_i32_10 = arith.constant 0 : i32
      %12 = arith.cmpi eq, %arg0, %c0_i32_10 : i32
      %c0_11 = arith.constant 0 : index
      %c0_12 = arith.constant 0 : index
      %13 = vector.load %arg4[%c0_11, %c0_12] : memref<1x128xf32, #tpu.memory_space<vmem>>, vector<1x128xf32>
      %cst_13 = arith.constant 0.000000e+00 : f32
      %14 = vector.broadcast %cst_13 : f32 to vector<1x128xf32>
      %15 = arith.select %12, %13, %14 : vector<1x128xf32>
      %16 = vector.shape_cast %15 : vector<1x128xf32> to vector<1x128xf32>
      %17 = vector.broadcast %16 : vector<1x128xf32> to vector<2x128xf32>
      %c0_14 = arith.constant 0 : index
      %c0_15 = arith.constant 0 : index
      %c0_16 = arith.constant 0 : index
      %18 = vector.load %arg5[%c0_14, %c0_15, %c0_16] : memref<1x2x128xf32, #tpu.memory_space<vmem>>, vector<1x2x128xf32>
      %19 = vector.shape_cast %18 : vector<1x2x128xf32> to vector<2x128xf32>
      %20 = vector.shape_cast %17 : vector<2x128xf32> to vector<1x2x128xf32>
      tpu.vector_store %arg5[%c0_14, %c0_15, %c0_16], %20 {strides = array<i32>} : memref<1x2x128xf32, #tpu.memory_space<vmem>>, vector<1x2x128xf32>,
    } else {
    }
    %c0 = arith.constant 0 : index
    %c0_1 = arith.constant 0 : index
    %c0_2 = arith.constant 0 : index
    %3 = vector.load %arg5[%c0, %c0_1, %c0_2] : memref<1x2x128xf32, #tpu.memory_space<vmem>>, vector<1x2x128xf32>
    %4 = vector.shape_cast %3 : vector<1x2x128xf32> to vector<2x128xf32>
    %c0_3 = arith.constant 0 : index
    %c0_4 = arith.constant 0 : index
    %5 = vector.load %arg2[%c0_3, %c0_4] : memref<2x6272xbf16, #tpu.memory_space<vmem>>, vector<2x6272xbf16>
    %c0_5 = arith.constant 0 : index
    %c0_6 = arith.constant 0 : index
    %6 = vector.load %arg3[%c0_5, %c0_6] : memref<6272x128xbf16, #tpu.memory_space<vmem>>, vector<6272x128xbf16>
    %cst = arith.constant dense<0.000000e+00> : vector<2x128xf32>
    %7 = tpu.matmul %5, %6, %cst {dimension_numbers = #tpu.dot_dimension_numbers<[1], [0], [0], [1], [0, 0, 1, 1], [], []>} : vector<2x6272xbf16>, vector<6272x128xbf16>, vector<2x128xf32> -> vector<2x128xf32>
    %8 = arith.addf %4, %7 : vector<2x128xf32>
    %c0_7 = arith.constant 0 : index
    %c0_8 = arith.constant 0 : index
    %c0_9 = arith.constant 0 : index
    %9 = vector.load %arg5[%c0_7, %c0_8, %c0_9] : memref<1x2x128xf32, #tpu.memory_space<vmem>>, vector<1x2x128xf32>
    %10 = vector.shape_cast %9 : vector<1x2x128xf32> to vector<2x128xf32>
    %11 = vector.shape_cast %8 : vector<2x128xf32> to vector<1x2x128xf32>
    tpu.vector_store %arg5[%c0_7, %c0_8, %c0_9], %11 {strides = array<i32>} : memref<1x2x128xf32, #tpu.memory_space<vmem>>, vector<1x2x128xf32>,
    return
  }
  func.func @transform_0(%arg0: i32, %arg1: i32) -> (i32, i32) {
    %c5_i32 = arith.constant 5 : i32
    %0 = arith.muli %arg0, %c5_i32 : i32
    %1 = arith.addi %0, %arg1 : i32
    %c0_i32 = arith.constant 0 : i32
    %c0_i32_0 = arith.constant 0 : i32
    return %c0_i32, %1 : i32, i32
  }
  func.func @transform_1(%arg0: i32, %arg1: i32) -> (i32, i32) {
    %c5_i32 = arith.constant 5 : i32
    %0 = arith.muli %arg0, %c5_i32 : i32
    %1 = arith.addi %0, %arg1 : i32
    %c0_i32 = arith.constant 0 : i32
    %c0_i32_0 = arith.constant 0 : i32
    return %1, %c0_i32 : i32, i32
  }
  func.func @transform_2(%arg0: i32, %arg1: i32) -> (i32, i32) {
    %c0_i32 = arith.constant 0 : i32
    %c0_i32_0 = arith.constant 0 : i32
    %c0_i32_1 = arith.constant 0 : i32
    return %c0_i32, %c0_i32_0 : i32, i32
  }
  func.func @transform_3(%arg0: i32, %arg1: i32) -> (i32, i32, i32) {
    %c0_i32 = arith.constant 0 : i32
    %c0_i32_0 = arith.constant 0 : i32
    %c0_i32_1 = arith.constant 0 : i32
    return %arg0, %c0_i32, %c0_i32_0 : i32, i32, i32
  }
}

</mosaic_0001>

<llo_original>
// kernel: forward.1
$region0: #{forward.1}
  #allocation0 [shape = 'u32[]', space=smem, size = 0x4, offset = 0x4, fixed_abs, tag = 'smem constant byte address 0x4 - core index']
  #allocation1 [shape = 'u32[72,128]{1,0:T(1,128)}', space=vmem, size = 0x9000, scoped, tag = 'internal scratch']
  %s0 = inlined_call_operand.vmem [shape: bf16[2,62720], index: 0, kind: input, shape index: {}]
  %s1 = inlined_call_operand.vmem [shape: bf16[62720,128], index: 1, kind: input, shape index: {}]
  %s2 = inlined_call_operand.vmem [shape: f32[1,128], index: 2, kind: input, shape index: {}]
  %s3 = inlined_call_operand.vmem [shape: f32[2,2,128], index: 3, kind: output, shape index: {}]
  %s4 = sld [smem:[#allocation0]]
  $region49: #{forward.1} parent=0
    _
  %s6 = ssub.s32 1, %s4
  %s7 = scalar_select 0, %s6, %s4
  loop: start=0, step=1, limit=12
  $region2: #{forward.1} parent=0 // loop_pre_header
    _
  $region3: #{forward.1} parent=0 // loop_header
    %s9 = sphi 0, %s13
    %p10 = scmp.ge.s32.totalorder %s9, 12
    %s16 = sphi 0, %s28
    %s17 = sphi 0, %s24
    %s18 = sphi 0, %s16
    %s19 = sphi 0, %s17
    %s20 = sphi 0, %s18
    %s21 = sphi 0, %s19
    %s35 = sphi 0, %s37
    %s38 = sphi 0, %s35
    %s39 = sphi 0, %s38
    %s55 = sphi 0, %s39
    %s65 = sphi 0, %s67
    %s68 = sphi 0, %s65
    %s69 = sphi 0, %s68
    %s85 = sphi 0, %s69
    %s89 = sphi 0, %s89
    %s91 = sphi 0, %s89
    %s92 = sphi 0, %s91
    %s106 = sphi 0, %s92
    %s112 = sphi 0, %s114
    %s115 = sphi 0, %s112
    %s116 = sphi 0, %s115
    %s132 = sphi 0, %s116
  $region4: #{forward.1} parent=0 // loop_header_branch
    %12 = sbr.rel (%p10) target = $region8
  $region5: #{forward.1} parent=0 // loop_body
    %s14 = ssub.s32 %s9, 1
    %s15 = ssub.s32 %s9, 2
    %s22 = sadd.s32 1, %s17
    %p23 = scmp.ge.s32.totalorder %s22, 5
    %s24 = scalar_select %p23, 0, %s22
    %s25 = sadd.s32 1, %s16
    %s26 = scalar_select %p23, %s25, %s16
    %p27 = scmp.ge.s32.totalorder %s26, 2
    %s28 = scalar_select %p27, 0, %s26
    %s29 = smul.u32 %s16, 5
    %s30 = sadd.s32 %s29, %s17
    %s31 = smul.u32 %s28, 5
    %s32 = sadd.s32 %s31, %s24
    %s33 = ssub.s32 %s30, %s32
    %p34 = scmp.eq.s32.totalorder %s33, 0
    %s36 = sadd.s32 %s35, 1
    %s37 = scalar_select %p34, %s35, %s36
    %p40 = pneg %p34
    %p41 = scmp.eq.s32.totalorder %s9, 9
    %p42 = por %p40, %p41
    %p43 = scmp.ne.s32.totalorder %s35, %s38
    %p44 = scmp.eq.s32.totalorder %s9, 0
    %p45 = por %p43, %p44
    %p46 = scmp.ne.s32.totalorder %s35, %s38
    %p47 = scmp.eq.s32.totalorder %s14, 9
    %p48 = por %p46, %p47
    %p49 = scmp.ne.s32.totalorder %s38, %s39
    %p50 = scmp.eq.s32.totalorder %s14, 0
    %p51 = por %p49, %p50
    %p52 = scmp.ne.s32.totalorder %s38, %s39
    %p53 = scmp.eq.s32.totalorder %s15, 9
    %p54 = por %p52, %p53
    %p56 = scmp.ne.s32.totalorder %s39, %s55
    %p57 = scmp.eq.s32.totalorder %s15, 0
    %p58 = por %p56, %p57
    %s59 = smul.u32 %s16, 5
    %s60 = sadd.s32 %s59, %s17
    %s61 = smul.u32 %s28, 5
    %s62 = sadd.s32 %s61, %s24
    %s63 = ssub.s32 %s60, %s62
    %p64 = scmp.eq.s32.totalorder %s63, 0
    %s66 = sadd.s32 %s65, 1
    %s67 = scalar_select %p64, %s65, %s66
    %p70 = pneg %p64
    %p71 = scmp.eq.s32.totalorder %s9, 9
    %p72 = por %p70, %p71
    %p73 = scmp.ne.s32.totalorder %s65, %s68
    %p74 = scmp.eq.s32.totalorder %s9, 0
    %p75 = por %p73, %p74
    %p76 = scmp.ne.s32.totalorder %s65, %s68
    %p77 = scmp.eq.s32.totalorder %s14, 9
    %p78 = por %p76, %p77
    %p79 = scmp.ne.s32.totalorder %s68, %s69
    %p80 = scmp.eq.s32.totalorder %s14, 0
    %p81 = por %p79, %p80
    %p82 = scmp.ne.s32.totalorder %s68, %s69
    %p83 = scmp.eq.s32.totalorder %s15, 9
    %p84 = por %p82, %p83
    %p86 = scmp.ne.s32.totalorder %s69, %s85
    %p87 = scmp.eq.s32.totalorder %s15, 0
    %p88 = por %p86, %p87
    %s90 = sadd.s32 %s89, 1
    %p93 = scmp.eq.s32.totalorder %s9, 9
    %p94 = scmp.ne.s32.totalorder %s89, %s91
    %p95 = scmp.eq.s32.totalorder %s9, 0
    %p96 = por %p94, %p95
    %p97 = scmp.ne.s32.totalorder %s89, %s91
    %p98 = scmp.eq.s32.totalorder %s14, 9
    %p99 = por %p97, %p98
    %p100 = scmp.ne.s32.totalorder %s91, %s92
    %p101 = scmp.eq.s32.totalorder %s14, 0
    %p102 = por %p100, %p101
    %p103 = scmp.ne.s32.totalorder %s91, %s92
    %p104 = scmp.eq.s32.totalorder %s15, 9
    %p105 = por %p103, %p104
    %p107 = scmp.ne.s32.totalorder %s92, %s106
    %p108 = scmp.eq.s32.totalorder %s15, 0
    %p109 = por %p107, %p108
    %s110 = ssub.s32 %s16, %s28
    %p111 = scmp.eq.s32.totalorder %s110, 0
    %s113 = sadd.s32 %s112, 1
    %s114 = scalar_select %p111, %s112, %s113
    %p117 = pneg %p111
    %p118 = scmp.eq.s32.totalorder %s9, 9
    %p119 = por %p117, %p118
    %p120 = scmp.ne.s32.totalorder %s112, %s115
    %p121 = scmp.eq.s32.totalorder %s9, 0
    %p122 = por %p120, %p121
    %p123 = scmp.ne.s32.totalorder %s112, %s115
    %p124 = scmp.eq.s32.totalorder %s14, 9
    %p125 = por %p123, %p124
    %p126 = scmp.ne.s32.totalorder %s115, %s116
    %p127 = scmp.eq.s32.totalorder %s14, 0
    %p128 = por %p126, %p127
    %p129 = scmp.ne.s32.totalorder %s115, %s116
    %p130 = scmp.eq.s32.totalorder %s15, 9
    %p131 = por %p129, %p130
    %p133 = scmp.ne.s32.totalorder %s116, %s132
    %p134 = scmp.eq.s32.totalorder %s15, 0
    %p135 = por %p133, %p134
    %p136 = scmp.le.s32.totalorder 1, %s9
    %p137 = scmp.lt.s32.totalorder %s9, 11
    %p138 = pnand %p136, %p137
    %p139 = pneg %p138
    // Predicated region
    $region9: #{forward.1} parent=5 // pred_check
      _
    $region10: #{forward.1} parent=5 // pred_check_branch
      %141 = sbr.rel (%p138) target = $region12
    $region11: #{forward.1} parent=5 // pred_region
      %s142 = ssub.s32 %s9, 1
      // Predicated region
      $region13: #{forward.1} parent=11 // pred_check
        %p143 = pneg %p102
      $region14: #{forward.1} parent=11 // pred_check_branch
        %145 = sbr.rel (%p143) target = $region16
      $region15: #{forward.1} parent=11 // pred_region
        _
      $region16: #{forward.1} parent=11 // pred_fallthru
        _
    $region12: #{forward.1} parent=5 // pred_fallthru
      _
    %p146 = scmp.lt.s32.totalorder %s9, 10
    // Predicated region
    $region17: #{forward.1} parent=5 // pred_check
      %p147 = pneg %p146
    $region18: #{forward.1} parent=5 // pred_check_branch
      %149 = sbr.rel (%p147) target = $region20
    $region19: #{forward.1} parent=5 // pred_region
      // Predicated region
      $region21: #{forward.1} parent=19 // pred_check
        %p150 = pneg %p45
      $region22: #{forward.1} parent=19 // pred_check_branch
        %152 = sbr.rel (%p150) target = $region24
      $region23: #{forward.1} parent=19 // pred_region
        %s153 = smul.u32 %s16, 5
        %s154 = sadd.s32 %s153, %s17
        %s155 = smul.u32 49, %s154
        %p156 = scmp.lt.s32.totalorder %s155, 489
        %s157 = scalar_select %p156, %s155, 489
        %s158 = scalar_lea.vmem %s0, %s157
        %s159 = smul.u32 %s16, 5
        %s160 = sadd.s32 %s159, %s17
        %s161 = smul.u32 49, %s160
      $region24: #{forward.1} parent=19 // pred_fallthru
        _
      // Predicated region
      $region25: #{forward.1} parent=19 // pred_check
        %p162 = pneg %p75
      $region26: #{forward.1} parent=19 // pred_check_branch
        %164 = sbr.rel (%p162) target = $region28
      $region27: #{forward.1} parent=19 // pred_region
        %s165 = smul.u32 %s16, 5
        %s166 = sadd.s32 %s165, %s17
        %s167 = smul.u32 784, %s166
        %p168 = scmp.lt.s32.totalorder %s167, 7839
        %s169 = scalar_select %p168, %s167, 7839
        %s170 = smul.addr %s169, 4
        %s171 = scalar_lea.vmem %s1, %s170
        %s172 = smul.u32 %s16, 5
        %s173 = sadd.s32 %s172, %s17
        %s174 = smul.u32 784, %s173
      $region28: #{forward.1} parent=19 // pred_fallthru
        _
    $region20: #{forward.1} parent=5 // pred_fallthru
      _
    %p175 = scmp.le.s32.totalorder 1, %s9
    %p176 = scmp.lt.s32.totalorder %s9, 11
    %p177 = pnand %p175, %p176
    %p178 = pneg %p177
    // Predicated region
    $region29: #{forward.1} parent=5 // pred_check
      _
    $region30: #{forward.1} parent=5 // pred_check_branch
      %180 = sbr.rel (%p177) target = $region32
    $region31: #{forward.1} parent=5 // pred_region
      %s181 = ssub.s32 %s9, 1
      %s182 = smul.u32 %s18, 5
      %s183 = sadd.s32 %s182, %s19
      %s184 = smul.u32 49, %s183
      %p185 = scmp.lt.s32.totalorder %s184, 489
      %s186 = scalar_select %p185, %s184, 489
      %s187 = scalar_lea.vmem %s0, %s186
      %p188 = pneg %p51
      %p189 = pneg %p48
      %s190 = smul.u32 %s18, 5
      %s191 = sadd.s32 %s190, %s19
      %s192 = smul.u32 784, %s191
      %p193 = scmp.lt.s32.totalorder %s192, 7839
      %s194 = scalar_select %p193, %s192, 7839
      %s195 = smul.addr %s194, 4
      %s196 = scalar_lea.vmem %s1, %s195
      %p197 = pneg %p81
      %p198 = pneg %p78
      %p199 = pneg %p102
      %p200 = pneg %p99
      %p201 = pneg %p128
      %p202 = pneg %p125
      %p203 = scmp.lt.s32.totalorder %s18, 1
      %s204 = scalar_select %p203, %s18, 1
      %s205 = smul.addr %s204, 2
      %s206 = scalar_lea.vmem %s3, %s205
      %s207 = smul.u32 %s18, 5
      %s208 = sadd.s32 %s207, %s19
      %s209 = smul.u32 49, %s208
      %p210 = scmp.lt.s32.totalorder %s209, 489
      %s211 = scalar_select %p210, %s209, 489
      %s212 = scalar_lea.vmem %s0, %s211
      %s213 = smul.u32 %s18, 5
      %s214 = sadd.s32 %s213, %s19
      %s215 = smul.u32 49, %s214
      %s216 = smul.u32 %s18, 5
      %s217 = sadd.s32 %s216, %s19
      %s218 = smul.u32 784, %s217
      %p219 = scmp.lt.s32.totalorder %s218, 7839
      %s220 = scalar_select %p219, %s218, 7839
      %s221 = smul.addr %s220, 4
      %s222 = scalar_lea.vmem %s1, %s221
      %s223 = smul.u32 %s18, 5
      %s224 = sadd.s32 %s223, %s19
      %s225 = smul.u32 784, %s224
      %p226 = scmp.lt.s32.totalorder %s18, 1
      %s227 = scalar_select %p226, %s18, 1
      %s228 = smul.addr %s227, 2
      %s229 = scalar_lea.vmem %s3, %s228
      %p230 = scmp.eq.s32.totalorder %s19, 0
      // Predicated region
      $region33: #{forward.1} parent=31 // pred_check
        %p231 = pneg %p230
      $region34: #{forward.1} parent=31 // pred_check_branch
        %233 = sbr.rel (%p231) target = $region36
      $region35: #{forward.1} parent=31 // pred_region
        %p234 = scmp.eq.s32.totalorder %s18, 0
        %v235 = vld [vmem:[%s2] sm:$0x1]
        %s236 = scalar_select %p234, 1, 0
        %v237 = vstv %s236
        %vm238 = vcmp.eq.s32.totalorder %v237, 1
        %v239 = vsel %vm238, %v235, 0.0
        %v241 = vperm.slane %v239, 0
        %243 = vst [vmem:[%s229] sm:$0x3] %v241
      $region36: #{forward.1} parent=31 // pred_fallthru
        _
      %v244 = vld [vmem:[%s229] sm:$0x3]
      %v245 = vld [vmem:[%s212] sm:$0xff]
      %v246 = vld [vmem:[%s212 + $0x8] sm:$0xff]
      %v247 = vld [vmem:[%s212 + $0x10] sm:$0xff]
      %v248 = vld [vmem:[%s212 + $0x18] sm:$0xff]
      %v249 = vld [vmem:[%s212 + $0x20] sm:$0xff]
      %v250 = vld [vmem:[%s212 + $0x28] sm:$0xff]
      %v251 = vld [vmem:[%s212 + $0x30] sm:$0x1]
      %v252 = vld [vmem:[%s222] sm:$0xf]
      %v253 = vld [vmem:[%s222 + $0x4] sm:$0xf]
      %v254 = vld [vmem:[%s222 + $0x8] sm:$0xf]
      %v255 = vld [vmem:[%s222 + $0xc] sm:$0xf]
      %v256 = vld [vmem:[%s222 + $0x10] sm:$0xf]
      %v257 = vld [vmem:[%s222 + $0x14] sm:$0xf]
      %v258 = vld [vmem:[%s222 + $0x18] sm:$0xf]
      %v259 = vld [vmem:[%s222 + $0x1c] sm:$0xf]
      %v260 = vld [vmem:[%s222 + $0x20] sm:$0xf]
      %v261 = vld [vmem:[%s222 + $0x24] sm:$0xf]
      %v262 = vld [vmem:[%s222 + $0x28] sm:$0xf]
      %v263 = vld [vmem:[%s222 + $0x2c] sm:$0xf]
      %v264 = vld [vmem:[%s222 + $0x30] sm:$0xf]
      %v265 = vld [vmem:[%s222 + $0x34] sm:$0xf]
      %v266 = vld [vmem:[%s222 + $0x38] sm:$0xf]
      %v267 = vld [vmem:[%s222 + $0x3c] sm:$0xf]
      %v268 = vld [vmem:[%s222 + $0x40] sm:$0xf]
      %v269 = vld [vmem:[%s222 + $0x44] sm:$0xf]
      %v270 = vld [vmem:[%s222 + $0x48] sm:$0xf]
      %v271 = vld [vmem:[%s222 + $0x4c] sm:$0xf]
      %v272 = vld [vmem:[%s222 + $0x50] sm:$0xf]
      %v273 = vld [vmem:[%s222 + $0x54] sm:$0xf]
      %v274 = vld [vmem:[%s222 + $0x58] sm:$0xf]
      %v275 = vld [vmem:[%s222 + $0x5c] sm:$0xf]
      %v276 = vld [vmem:[%s222 + $0x60] sm:$0xf]
      %v277 = vld [vmem:[%s222 + $0x64] sm:$0xf]
      %v278 = vld [vmem:[%s222 + $0x68] sm:$0xf]
      %v279 = vld [vmem:[%s222 + $0x6c] sm:$0xf]
      %v280 = vld [vmem:[%s222 + $0x70] sm:$0xf]
      %v281 = vld [vmem:[%s222 + $0x74] sm:$0xf]
      %v282 = vld [vmem:[%s222 + $0x78] sm:$0xf]
      %v283 = vld [vmem:[%s222 + $0x7c] sm:$0xf]
      %v284 = vld [vmem:[%s222 + $0x80] sm:$0xf]
      %v285 = vld [vmem:[%s222 + $0x84] sm:$0xf]
      %v286 = vld [vmem:[%s222 + $0x88] sm:$0xf]
      %v287 = vld [vmem:[%s222 + $0x8c] sm:$0xf]
      %v288 = vld [vmem:[%s222 + $0x90] sm:$0xf]
      %v289 = vld [vmem:[%s222 + $0x94] sm:$0xf]
      %v290 = vld [vmem:[%s222 + $0x98] sm:$0xf]
      %v291 = vld [vmem:[%s222 + $0x9c] sm:$0xf]
      %v292 = vld [vmem:[%s222 + $0xa0] sm:$0xf]
      %v293 = vld [vmem:[%s222 + $0xa4] sm:$0xf]
      %v294 = vld [vmem:[%s222 + $0xa8] sm:$0xf]
      %v295 = vld [vmem:[%s222 + $0xac] sm:$0xf]
      %v296 = vld [vmem:[%s222 + $0xb0] sm:$0xf]
      %v297 = vld [vmem:[%s222 + $0xb4] sm:$0xf]
      %v298 = vld [vmem:[%s222 + $0xb8] sm:$0xf]
      %v299 = vld [vmem:[%s222 + $0xbc] sm:$0xf]
      %v300 = vld [vmem:[%s222 + $0xc0] sm:$0xf]
      %v301 = vld [vmem:[%s222 + $0xc4] sm:$0xf]
      %v302 = vld [vmem:[%s222 + $0xc8] sm:$0xf]
      %v303 = vld [vmem:[%s222 + $0xcc] sm:$0xf]
      %v304 = vld [vmem:[%s222 + $0xd0] sm:$0xf]
      %v305 = vld [vmem:[%s222 + $0xd4] sm:$0xf]
      %v306 = vld [vmem:[%s222 + $0xd8] sm:$0xf]
      %v307 = vld [vmem:[%s222 + $0xdc] sm:$0xf]
      %v308 = vld [vmem:[%s222 + $0xe0] sm:$0xf]
      %v309 = vld [vmem:[%s222 + $0xe4] sm:$0xf]
      %v310 = vld [vmem:[%s222 + $0xe8] sm:$0xf]
      %v311 = vld [vmem:[%s222 + $0xec] sm:$0xf]
      %v312 = vld [vmem:[%s222 + $0xf0] sm:$0xf]
      %v313 = vld [vmem:[%s222 + $0xf4] sm:$0xf]
      %v314 = vld [vmem:[%s222 + $0xf8] sm:$0xf]
      %v315 = vld [vmem:[%s222 + $0xfc] sm:$0xf]
      %v316 = vld [vmem:[%s222 + $0x100] sm:$0xf]
      %v317 = vld [vmem:[%s222 + $0x104] sm:$0xf]
      %v318 = vld [vmem:[%s222 + $0x108] sm:$0xf]
      %v319 = vld [vmem:[%s222 + $0x10c] sm:$0xf]
      %v320 = vld [vmem:[%s222 + $0x110] sm:$0xf]
      %v321 = vld [vmem:[%s222 + $0x114] sm:$0xf]
      %v322 = vld [vmem:[%s222 + $0x118] sm:$0xf]
      %v323 = vld [vmem:[%s222 + $0x11c] sm:$0xf]
      %v324 = vld [vmem:[%s222 + $0x120] sm:$0xf]
      %v325 = vld [vmem:[%s222 + $0x124] sm:$0xf]
      %v326 = vld [vmem:[%s222 + $0x128] sm:$0xf]
      %v327 = vld [vmem:[%s222 + $0x12c] sm:$0xf]
      %v328 = vld [vmem:[%s222 + $0x130] sm:$0xf]
      %v329 = vld [vmem:[%s222 + $0x134] sm:$0xf]
      %v330 = vld [vmem:[%s222 + $0x138] sm:$0xf]
      %v331 = vld [vmem:[%s222 + $0x13c] sm:$0xf]
      %v332 = vld [vmem:[%s222 + $0x140] sm:$0xf]
      %v333 = vld [vmem:[%s222 + $0x144] sm:$0xf]
      %v334 = vld [vmem:[%s222 + $0x148] sm:$0xf]
      %v335 = vld [vmem:[%s222 + $0x14c] sm:$0xf]
      %v336 = vld [vmem:[%s222 + $0x150] sm:$0xf]
      %v337 = vld [vmem:[%s222 + $0x154] sm:$0xf]
      %v338 = vld [vmem:[%s222 + $0x158] sm:$0xf]
      %v339 = vld [vmem:[%s222 + $0x15c] sm:$0xf]
      %v340 = vld [vmem:[%s222 + $0x160] sm:$0xf]
      %v341 = vld [vmem:[%s222 + $0x164] sm:$0xf]
      %v342 = vld [vmem:[%s222 + $0x168] sm:$0xf]
      %v343 = vld [vmem:[%s222 + $0x16c] sm:$0xf]
      %v344 = vld [vmem:[%s222 + $0x170] sm:$0xf]
      %v345 = vld [vmem:[%s222 + $0x174] sm:$0xf]
      %v346 = vld [vmem:[%s222 + $0x178] sm:$0xf]
      %v347 = vld [vmem:[%s222 + $0x17c] sm:$0xf]
      %v348 = vld [vmem:[%s222 + $0x180] sm:$0xf]
      %v349 = vld [vmem:[%s222 + $0x184] sm:$0xf]
      %v350 = vld [vmem:[%s222 + $0x188] sm:$0xf]
      %v351 = vld [vmem:[%s222 + $0x18c] sm:$0xf]
      %v352 = vld [vmem:[%s222 + $0x190] sm:$0xf]
      %v353 = vld [vmem:[%s222 + $0x194] sm:$0xf]
      %v354 = vld [vmem:[%s222 + $0x198] sm:$0xf]
      %v355 = vld [vmem:[%s222 + $0x19c] sm:$0xf]
      %v356 = vld [vmem:[%s222 + $0x1a0] sm:$0xf]
      %v357 = vld [vmem:[%s222 + $0x1a4] sm:$0xf]
      %v358 = vld [vmem:[%s222 + $0x1a8] sm:$0xf]
      %v359 = vld [vmem:[%s222 + $0x1ac] sm:$0xf]
      %v360 = vld [vmem:[%s222 + $0x1b0] sm:$0xf]
      %v361 = vld [vmem:[%s222 + $0x1b4] sm:$0xf]
      %v362 = vld [vmem:[%s222 + $0x1b8] sm:$0xf]
      %v363 = vld [vmem:[%s222 + $0x1bc] sm:$0xf]
      %v364 = vld [vmem:[%s222 + $0x1c0] sm:$0xf]
      %v365 = vld [vmem:[%s222 + $0x1c4] sm:$0xf]
      %v366 = vld [vmem:[%s222 + $0x1c8] sm:$0xf]
      %v367 = vld [vmem:[%s222 + $0x1cc] sm:$0xf]
      %v368 = vld [vmem:[%s222 + $0x1d0] sm:$0xf]
      %v369 = vld [vmem:[%s222 + $0x1d4] sm:$0xf]
      %v370 = vld [vmem:[%s222 + $0x1d8] sm:$0xf]
      %v371 = vld [vmem:[%s222 + $0x1dc] sm:$0xf]
      %v372 = vld [vmem:[%s222 + $0x1e0] sm:$0xf]
      %v373 = vld [vmem:[%s222 + $0x1e4] sm:$0xf]
      %v374 = vld [vmem:[%s222 + $0x1e8] sm:$0xf]
      %v375 = vld [vmem:[%s222 + $0x1ec] sm:$0xf]
      %v376 = vld [vmem:[%s222 + $0x1f0] sm:$0xf]
      %v377 = vld [vmem:[%s222 + $0x1f4] sm:$0xf]
      %v378 = vld [vmem:[%s222 + $0x1f8] sm:$0xf]
      %v379 = vld [vmem:[%s222 + $0x1fc] sm:$0xf]
      %v380 = vld [vmem:[%s222 + $0x200] sm:$0xf]
      %v381 = vld [vmem:[%s222 + $0x204] sm:$0xf]
      %v382 = vld [vmem:[%s222 + $0x208] sm:$0xf]
      %v383 = vld [vmem:[%s222 + $0x20c] sm:$0xf]
      %v384 = vld [vmem:[%s222 + $0x210] sm:$0xf]
      %v385 = vld [vmem:[%s222 + $0x214] sm:$0xf]
      %v386 = vld [vmem:[%s222 + $0x218] sm:$0xf]
      %v387 = vld [vmem:[%s222 + $0x21c] sm:$0xf]
      %v388 = vld [vmem:[%s222 + $0x220] sm:$0xf]
      %v389 = vld [vmem:[%s222 + $0x224] sm:$0xf]
      %v390 = vld [vmem:[%s222 + $0x228] sm:$0xf]
      %v391 = vld [vmem:[%s222 + $0x22c] sm:$0xf]
      %v392 = vld [vmem:[%s222 + $0x230] sm:$0xf]
      %v393 = vld [vmem:[%s222 + $0x234] sm:$0xf]
      %v394 = vld [vmem:[%s222 + $0x238] sm:$0xf]
      %v395 = vld [vmem:[%s222 + $0x23c] sm:$0xf]
      %v396 = vld [vmem:[%s222 + $0x240] sm:$0xf]
      %v397 = vld [vmem:[%s222 + $0x244] sm:$0xf]
      %v398 = vld [vmem:[%s222 + $0x248] sm:$0xf]
      %v399 = vld [vmem:[%s222 + $0x24c] sm:$0xf]
      %v400 = vld [vmem:[%s222 + $0x250] sm:$0xf]
      %v401 = vld [vmem:[%s222 + $0x254] sm:$0xf]
      %v402 = vld [vmem:[%s222 + $0x258] sm:$0xf]
      %v403 = vld [vmem:[%s222 + $0x25c] sm:$0xf]
      %v404 = vld [vmem:[%s222 + $0x260] sm:$0xf]
      %v405 = vld [vmem:[%s222 + $0x264] sm:$0xf]
      %v406 = vld [vmem:[%s222 + $0x268] sm:$0xf]
      %v407 = vld [vmem:[%s222 + $0x26c] sm:$0xf]
      %v408 = vld [vmem:[%s222 + $0x270] sm:$0xf]
      %v409 = vld [vmem:[%s222 + $0x274] sm:$0xf]
      %v410 = vld [vmem:[%s222 + $0x278] sm:$0xf]
      %v411 = vld [vmem:[%s222 + $0x27c] sm:$0xf]
      %v412 = vld [vmem:[%s222 + $0x280] sm:$0xf]
      %v413 = vld [vmem:[%s222 + $0x284] sm:$0xf]
      %v414 = vld [vmem:[%s222 + $0x288] sm:$0xf]
      %v415 = vld [vmem:[%s222 + $0x28c] sm:$0xf]
      %v416 = vld [vmem:[%s222 + $0x290] sm:$0xf]
      %v417 = vld [vmem:[%s222 + $0x294] sm:$0xf]
      %v418 = vld [vmem:[%s222 + $0x298] sm:$0xf]
      %v419 = vld [vmem:[%s222 + $0x29c] sm:$0xf]
      %v420 = vld [vmem:[%s222 + $0x2a0] sm:$0xf]
      %v421 = vld [vmem:[%s222 + $0x2a4] sm:$0xf]
      %v422 = vld [vmem:[%s222 + $0x2a8] sm:$0xf]
      %v423 = vld [vmem:[%s222 + $0x2ac] sm:$0xf]
      %v424 = vld [vmem:[%s222 + $0x2b0] sm:$0xf]
      %v425 = vld [vmem:[%s222 + $0x2b4] sm:$0xf]
      %v426 = vld [vmem:[%s222 + $0x2b8] sm:$0xf]
      %v427 = vld [vmem:[%s222 + $0x2bc] sm:$0xf]
      %v428 = vld [vmem:[%s222 + $0x2c0] sm:$0xf]
      %v429 = vld [vmem:[%s222 + $0x2c4] sm:$0xf]
      %v430 = vld [vmem:[%s222 + $0x2c8] sm:$0xf]
      %v431 = vld [vmem:[%s222 + $0x2cc] sm:$0xf]
      %v432 = vld [vmem:[%s222 + $0x2d0] sm:$0xf]
      %v433 = vld [vmem:[%s222 + $0x2d4] sm:$0xf]
      %v434 = vld [vmem:[%s222 + $0x2d8] sm:$0xf]
      %v435 = vld [vmem:[%s222 + $0x2dc] sm:$0xf]
      %v436 = vld [vmem:[%s222 + $0x2e0] sm:$0xf]
      %v437 = vld [vmem:[%s222 + $0x2e4] sm:$0xf]
      %v438 = vld [vmem:[%s222 + $0x2e8] sm:$0xf]
      %v439 = vld [vmem:[%s222 + $0x2ec] sm:$0xf]
      %v440 = vld [vmem:[%s222 + $0x2f0] sm:$0xf]
      %v441 = vld [vmem:[%s222 + $0x2f4] sm:$0xf]
      %v442 = vld [vmem:[%s222 + $0x2f8] sm:$0xf]
      %v443 = vld [vmem:[%s222 + $0x2fc] sm:$0xf]
      %v444 = vld [vmem:[%s222 + $0x300] sm:$0xf]
      %v445 = vld [vmem:[%s222 + $0x304] sm:$0xf]
      %v446 = vld [vmem:[%s222 + $0x308] sm:$0xf]
      %v447 = vld [vmem:[%s222 + $0x30c] sm:$0xf]
      %v448 = vld [vmem:[%s222 + $0x310] sm:$0xf]
      %v449 = vld [vmem:[%s222 + $0x314] sm:$0xf]
      %v450 = vld [vmem:[%s222 + $0x318] sm:$0xf]
      %v451 = vld [vmem:[%s222 + $0x31c] sm:$0xf]
      %v452 = vld [vmem:[%s222 + $0x320] sm:$0xf]
      %v453 = vld [vmem:[%s222 + $0x324] sm:$0xf]
      %v454 = vld [vmem:[%s222 + $0x328] sm:$0xf]
      %v455 = vld [vmem:[%s222 + $0x32c] sm:$0xf]
      %v456 = vld [vmem:[%s222 + $0x330] sm:$0xf]
      %v457 = vld [vmem:[%s222 + $0x334] sm:$0xf]
      %v458 = vld [vmem:[%s222 + $0x338] sm:$0xf]
      %v459 = vld [vmem:[%s222 + $0x33c] sm:$0xf]
      %v460 = vld [vmem:[%s222 + $0x340] sm:$0xf]
      %v461 = vld [vmem:[%s222 + $0x344] sm:$0xf]
      %v462 = vld [vmem:[%s222 + $0x348] sm:$0xf]
      %v463 = vld [vmem:[%s222 + $0x34c] sm:$0xf]
      %v464 = vld [vmem:[%s222 + $0x350] sm:$0xf]
      %v465 = vld [vmem:[%s222 + $0x354] sm:$0xf]
      %v466 = vld [vmem:[%s222 + $0x358] sm:$0xf]
      %v467 = vld [vmem:[%s222 + $0x35c] sm:$0xf]
      %v468 = vld [vmem:[%s222 + $0x360] sm:$0xf]
      %v469 = vld [vmem:[%s222 + $0x364] sm:$0xf]
      %v470 = vld [vmem:[%s222 + $0x368] sm:$0xf]
      %v471 = vld [vmem:[%s222 + $0x36c] sm:$0xf]
      %v472 = vld [vmem:[%s222 + $0x370] sm:$0xf]
      %v473 = vld [vmem:[%s222 + $0x374] sm:$0xf]
      %v474 = vld [vmem:[%s222 + $0x378] sm:$0xf]
      %v475 = vld [vmem:[%s222 + $0x37c] sm:$0xf]
      %v476 = vld [vmem:[%s222 + $0x380] sm:$0xf]
      %v477 = vld [vmem:[%s222 + $0x384] sm:$0xf]
      %v478 = vld [vmem:[%s222 + $0x388] sm:$0xf]
      %v479 = vld [vmem:[%s222 + $0x38c] sm:$0xf]
      %v480 = vld [vmem:[%s222 + $0x390] sm:$0xf]
      %v481 = vld [vmem:[%s222 + $0x394] sm:$0xf]
      %v482 = vld [vmem:[%s222 + $0x398] sm:$0xf]
      %v483 = vld [vmem:[%s222 + $0x39c] sm:$0xf]
      %v484 = vld [vmem:[%s222 + $0x3a0] sm:$0xf]
      %v485 = vld [vmem:[%s222 + $0x3a4] sm:$0xf]
      %v486 = vld [vmem:[%s222 + $0x3a8] sm:$0xf]
      %v487 = vld [vmem:[%s222 + $0x3ac] sm:$0xf]
      %v488 = vld [vmem:[%s222 + $0x3b0] sm:$0xf]
      %v489 = vld [vmem:[%s222 + $0x3b4] sm:$0xf]
      %v490 = vld [vmem:[%s222 + $0x3b8] sm:$0xf]
      %v491 = vld [vmem:[%s222 + $0x3bc] sm:$0xf]
      %v492 = vld [vmem:[%s222 + $0x3c0] sm:$0xf]
      %v493 = vld [vmem:[%s222 + $0x3c4] sm:$0xf]
      %v494 = vld [vmem:[%s222 + $0x3c8] sm:$0xf]
      %v495 = vld [vmem:[%s222 + $0x3cc] sm:$0xf]
      %v496 = vld [vmem:[%s222 + $0x3d0] sm:$0xf]
      %v497 = vld [vmem:[%s222 + $0x3d4] sm:$0xf]
      %v498 = vld [vmem:[%s222 + $0x3d8] sm:$0xf]
      %v499 = vld [vmem:[%s222 + $0x3dc] sm:$0xf]
      %v500 = vld [vmem:[%s222 + $0x3e0] sm:$0xf]
      %v501 = vld [vmem:[%s222 + $0x3e4] sm:$0xf]
      %v502 = vld [vmem:[%s222 + $0x3e8] sm:$0xf]
      %v503 = vld [vmem:[%s222 + $0x3ec] sm:$0xf]
      %v504 = vld [vmem:[%s222 + $0x3f0] sm:$0xf]
      %v505 = vld [vmem:[%s222 + $0x3f4] sm:$0xf]
      %v506 = vld [vmem:[%s222 + $0x3f8] sm:$0xf]
      %v507 = vld [vmem:[%s222 + $0x3fc] sm:$0xf]
      %v508 = vld [vmem:[%s222 + $0x400] sm:$0xf]
      %v509 = vld [vmem:[%s222 + $0x404] sm:$0xf]
      %v510 = vld [vmem:[%s222 + $0x408] sm:$0xf]
      %v511 = vld [vmem:[%s222 + $0x40c] sm:$0xf]
      %v512 = vld [vmem:[%s222 + $0x410] sm:$0xf]
      %v513 = vld [vmem:[%s222 + $0x414] sm:$0xf]
      %v514 = vld [vmem:[%s222 + $0x418] sm:$0xf]
      %v515 = vld [vmem:[%s222 + $0x41c] sm:$0xf]
      %v516 = vld [vmem:[%s222 + $0x420] sm:$0xf]
      %v517 = vld [vmem:[%s222 + $0x424] sm:$0xf]
      %v518 = vld [vmem:[%s222 + $0x428] sm:$0xf]
      %v519 = vld [vmem:[%s222 + $0x42c] sm:$0xf]
      %v520 = vld [vmem:[%s222 + $0x430] sm:$0xf]
      %v521 = vld [vmem:[%s222 + $0x434] sm:$0xf]
      %v522 = vld [vmem:[%s222 + $0x438] sm:$0xf]
      %v523 = vld [vmem:[%s222 + $0x43c] sm:$0xf]
      %v524 = vld [vmem:[%s222 + $0x440] sm:$0xf]
      %v525 = vld [vmem:[%s222 + $0x444] sm:$0xf]
      %v526 = vld [vmem:[%s222 + $0x448] sm:$0xf]
      %v527 = vld [vmem:[%s222 + $0x44c] sm:$0xf]
      %v528 = vld [vmem:[%s222 + $0x450] sm:$0xf]
      %v529 = vld [vmem:[%s222 + $0x454] sm:$0xf]
      %v530 = vld [vmem:[%s222 + $0x458] sm:$0xf]
      %v531 = vld [vmem:[%s222 + $0x45c] sm:$0xf]
      %v532 = vld [vmem:[%s222 + $0x460] sm:$0xf]
      %v533 = vld [vmem:[%s222 + $0x464] sm:$0xf]
      %v534 = vld [vmem:[%s222 + $0x468] sm:$0xf]
      %v535 = vld [vmem:[%s222 + $0x46c] sm:$0xf]
      %v536 = vld [vmem:[%s222 + $0x470] sm:$0xf]
      %v537 = vld [vmem:[%s222 + $0x474] sm:$0xf]
      %v538 = vld [vmem:[%s222 + $0x478] sm:$0xf]
      %v539 = vld [vmem:[%s222 + $0x47c] sm:$0xf]
      %v540 = vld [vmem:[%s222 + $0x480] sm:$0xf]
      %v541 = vld [vmem:[%s222 + $0x484] sm:$0xf]
      %v542 = vld [vmem:[%s222 + $0x488] sm:$0xf]
      %v543 = vld [vmem:[%s222 + $0x48c] sm:$0xf]
      %v544 = vld [vmem:[%s222 + $0x490] sm:$0xf]
      %v545 = vld [vmem:[%s222 + $0x494] sm:$0xf]
      %v546 = vld [vmem:[%s222 + $0x498] sm:$0xf]
      %v547 = vld [vmem:[%s222 + $0x49c] sm:$0xf]
      %v548 = vld [vmem:[%s222 + $0x4a0] sm:$0xf]
      %v549 = vld [vmem:[%s222 + $0x4a4] sm:$0xf]
      %v550 = vld [vmem:[%s222 + $0x4a8] sm:$0xf]
      %v551 = vld [vmem:[%s222 + $0x4ac] sm:$0xf]
      %v552 = vld [vmem:[%s222 + $0x4b0] sm:$0xf]
      %v553 = vld [vmem:[%s222 + $0x4b4] sm:$0xf]
      %v554 = vld [vmem:[%s222 + $0x4b8] sm:$0xf]
      %v555 = vld [vmem:[%s222 + $0x4bc] sm:$0xf]
      %v556 = vld [vmem:[%s222 + $0x4c0] sm:$0xf]
      %v557 = vld [vmem:[%s222 + $0x4c4] sm:$0xf]
      %v558 = vld [vmem:[%s222 + $0x4c8] sm:$0xf]
      %v559 = vld [vmem:[%s222 + $0x4cc] sm:$0xf]
      %v560 = vld [vmem:[%s222 + $0x4d0] sm:$0xf]
      %v561 = vld [vmem:[%s222 + $0x4d4] sm:$0xf]
      %v562 = vld [vmem:[%s222 + $0x4d8] sm:$0xf]
      %v563 = vld [vmem:[%s222 + $0x4dc] sm:$0xf]
      %v564 = vld [vmem:[%s222 + $0x4e0] sm:$0xf]
      %v565 = vld [vmem:[%s222 + $0x4e4] sm:$0xf]
      %v566 = vld [vmem:[%s222 + $0x4e8] sm:$0xf]
      %v567 = vld [vmem:[%s222 + $0x4ec] sm:$0xf]
      %v568 = vld [vmem:[%s222 + $0x4f0] sm:$0xf]
      %v569 = vld [vmem:[%s222 + $0x4f4] sm:$0xf]
      %v570 = vld [vmem:[%s222 + $0x4f8] sm:$0xf]
      %v571 = vld [vmem:[%s222 + $0x4fc] sm:$0xf]
      %v572 = vld [vmem:[%s222 + $0x500] sm:$0xf]
      %v573 = vld [vmem:[%s222 + $0x504] sm:$0xf]
      %v574 = vld [vmem:[%s222 + $0x508] sm:$0xf]
      %v575 = vld [vmem:[%s222 + $0x50c] sm:$0xf]
      %v576 = vld [vmem:[%s222 + $0x510] sm:$0xf]
      %v577 = vld [vmem:[%s222 + $0x514] sm:$0xf]
      %v578 = vld [vmem:[%s222 + $0x518] sm:$0xf]
      %v579 = vld [vmem:[%s222 + $0x51c] sm:$0xf]
      %v580 = vld [vmem:[%s222 + $0x520] sm:$0xf]
      %v581 = vld [vmem:[%s222 + $0x524] sm:$0xf]
      %v582 = vld [vmem:[%s222 + $0x528] sm:$0xf]
      %v583 = vld [vmem:[%s222 + $0x52c] sm:$0xf]
      %v584 = vld [vmem:[%s222 + $0x530] sm:$0xf]
      %v585 = vld [vmem:[%s222 + $0x534] sm:$0xf]
      %v586 = vld [vmem:[%s222 + $0x538] sm:$0xf]
      %v587 = vld [vmem:[%s222 + $0x53c] sm:$0xf]
      %v588 = vld [vmem:[%s222 + $0x540] sm:$0xf]
      %v589 = vld [vmem:[%s222 + $0x544] sm:$0xf]
      %v590 = vld [vmem:[%s222 + $0x548] sm:$0xf]
      %v591 = vld [vmem:[%s222 + $0x54c] sm:$0xf]
      %v592 = vld [vmem:[%s222 + $0x550] sm:$0xf]
      %v593 = vld [vmem:[%s222 + $0x554] sm:$0xf]
      %v594 = vld [vmem:[%s222 + $0x558] sm:$0xf]
      %v595 = vld [vmem:[%s222 + $0x55c] sm:$0xf]
      %v596 = vld [vmem:[%s222 + $0x560] sm:$0xf]
      %v597 = vld [vmem:[%s222 + $0x564] sm:$0xf]
      %v598 = vld [vmem:[%s222 + $0x568] sm:$0xf]
      %v599 = vld [vmem:[%s222 + $0x56c] sm:$0xf]
      %v600 = vld [vmem:[%s222 + $0x570] sm:$0xf]
      %v601 = vld [vmem:[%s222 + $0x574] sm:$0xf]
      %v602 = vld [vmem:[%s222 + $0x578] sm:$0xf]
      %v603 = vld [vmem:[%s222 + $0x57c] sm:$0xf]
      %v604 = vld [vmem:[%s222 + $0x580] sm:$0xf]
      %v605 = vld [vmem:[%s222 + $0x584] sm:$0xf]
      %v606 = vld [vmem:[%s222 + $0x588] sm:$0xf]
      %v607 = vld [vmem:[%s222 + $0x58c] sm:$0xf]
      %v608 = vld [vmem:[%s222 + $0x590] sm:$0xf]
      %v609 = vld [vmem:[%s222 + $0x594] sm:$0xf]
      %v610 = vld [vmem:[%s222 + $0x598] sm:$0xf]
      %v611 = vld [vmem:[%s222 + $0x59c] sm:$0xf]
      %v612 = vld [vmem:[%s222 + $0x5a0] sm:$0xf]
      %v613 = vld [vmem:[%s222 + $0x5a4] sm:$0xf]
      %v614 = vld [vmem:[%s222 + $0x5a8] sm:$0xf]
      %v615 = vld [vmem:[%s222 + $0x5ac] sm:$0xf]
      %v616 = vld [vmem:[%s222 + $0x5b0] sm:$0xf]
      %v617 = vld [vmem:[%s222 + $0x5b4] sm:$0xf]
      %v618 = vld [vmem:[%s222 + $0x5b8] sm:$0xf]
      %v619 = vld [vmem:[%s222 + $0x5bc] sm:$0xf]
      %v620 = vld [vmem:[%s222 + $0x5c0] sm:$0xf]
      %v621 = vld [vmem:[%s222 + $0x5c4] sm:$0xf]
      %v622 = vld [vmem:[%s222 + $0x5c8] sm:$0xf]
      %v623 = vld [vmem:[%s222 + $0x5cc] sm:$0xf]
      %v624 = vld [vmem:[%s222 + $0x5d0] sm:$0xf]
      %v625 = vld [vmem:[%s222 + $0x5d4] sm:$0xf]
      %v626 = vld [vmem:[%s222 + $0x5d8] sm:$0xf]
      %v627 = vld [vmem:[%s222 + $0x5dc] sm:$0xf]
      %v628 = vld [vmem:[%s222 + $0x5e0] sm:$0xf]
      %v629 = vld [vmem:[%s222 + $0x5e4] sm:$0xf]
      %v630 = vld [vmem:[%s222 + $0x5e8] sm:$0xf]
      %v631 = vld [vmem:[%s222 + $0x5ec] sm:$0xf]
      %v632 = vld [vmem:[%s222 + $0x5f0] sm:$0xf]
      %v633 = vld [vmem:[%s222 + $0x5f4] sm:$0xf]
      %v634 = vld [vmem:[%s222 + $0x5f8] sm:$0xf]
      %v635 = vld [vmem:[%s222 + $0x5fc] sm:$0xf]
      %v636 = vld [vmem:[%s222 + $0x600] sm:$0xf]
      %v637 = vld [vmem:[%s222 + $0x604] sm:$0xf]
      %v638 = vld [vmem:[%s222 + $0x608] sm:$0xf]
      %v639 = vld [vmem:[%s222 + $0x60c] sm:$0xf]
      %v640 = vld [vmem:[%s222 + $0x610] sm:$0xf]
      %v641 = vld [vmem:[%s222 + $0x614] sm:$0xf]
      %v642 = vld [vmem:[%s222 + $0x618] sm:$0xf]
      %v643 = vld [vmem:[%s222 + $0x61c] sm:$0xf]
      %v644 = vld [vmem:[%s222 + $0x620] sm:$0xf]
      %v645 = vld [vmem:[%s222 + $0x624] sm:$0xf]
      %v646 = vld [vmem:[%s222 + $0x628] sm:$0xf]
      %v647 = vld [vmem:[%s222 + $0x62c] sm:$0xf]
      %v648 = vld [vmem:[%s222 + $0x630] sm:$0xf]
      %v649 = vld [vmem:[%s222 + $0x634] sm:$0xf]
      %v650 = vld [vmem:[%s222 + $0x638] sm:$0xf]
      %v651 = vld [vmem:[%s222 + $0x63c] sm:$0xf]
      %v652 = vld [vmem:[%s222 + $0x640] sm:$0xf]
      %v653 = vld [vmem:[%s222 + $0x644] sm:$0xf]
      %v654 = vld [vmem:[%s222 + $0x648] sm:$0xf]
      %v655 = vld [vmem:[%s222 + $0x64c] sm:$0xf]
      %v656 = vld [vmem:[%s222 + $0x650] sm:$0xf]
      %v657 = vld [vmem:[%s222 + $0x654] sm:$0xf]
      %v658 = vld [vmem:[%s222 + $0x658] sm:$0xf]
      %v659 = vld [vmem:[%s222 + $0x65c] sm:$0xf]
      %v660 = vld [vmem:[%s222 + $0x660] sm:$0xf]
      %v661 = vld [vmem:[%s222 + $0x664] sm:$0xf]
      %v662 = vld [vmem:[%s222 + $0x668] sm:$0xf]
      %v663 = vld [vmem:[%s222 + $0x66c] sm:$0xf]
      %v664 = vld [vmem:[%s222 + $0x670] sm:$0xf]
      %v665 = vld [vmem:[%s222 + $0x674] sm:$0xf]
      %v666 = vld [vmem:[%s222 + $0x678] sm:$0xf]
      %v667 = vld [vmem:[%s222 + $0x67c] sm:$0xf]
      %v668 = vld [vmem:[%s222 + $0x680] sm:$0xf]
      %v669 = vld [vmem:[%s222 + $0x684] sm:$0xf]
      %v670 = vld [vmem:[%s222 + $0x688] sm:$0xf]
      %v671 = vld [vmem:[%s222 + $0x68c] sm:$0xf]
      %v672 = vld [vmem:[%s222 + $0x690] sm:$0xf]
      %v673 = vld [vmem:[%s222 + $0x694] sm:$0xf]
      %v674 = vld [vmem:[%s222 + $0x698] sm:$0xf]
      %v675 = vld [vmem:[%s222 + $0x69c] sm:$0xf]
      %v676 = vld [vmem:[%s222 + $0x6a0] sm:$0xf]
      %v677 = vld [vmem:[%s222 + $0x6a4] sm:$0xf]
      %v678 = vld [vmem:[%s222 + $0x6a8] sm:$0xf]
      %v679 = vld [vmem:[%s222 + $0x6ac] sm:$0xf]
      %v680 = vld [vmem:[%s222 + $0x6b0] sm:$0xf]
      %v681 = vld [vmem:[%s222 + $0x6b4] sm:$0xf]
      %v682 = vld [vmem:[%s222 + $0x6b8] sm:$0xf]
      %v683 = vld [vmem:[%s222 + $0x6bc] sm:$0xf]
      %v684 = vld [vmem:[%s222 + $0x6c0] sm:$0xf]
      %v685 = vld [vmem:[%s222 + $0x6c4] sm:$0xf]
      %v686 = vld [vmem:[%s222 + $0x6c8] sm:$0xf]
      %v687 = vld [vmem:[%s222 + $0x6cc] sm:$0xf]
      %v688 = vld [vmem:[%s222 + $0x6d0] sm:$0xf]
      %v689 = vld [vmem:[%s222 + $0x6d4] sm:$0xf]
      %v690 = vld [vmem:[%s222 + $0x6d8] sm:$0xf]
      %v691 = vld [vmem:[%s222 + $0x6dc] sm:$0xf]
      %v692 = vld [vmem:[%s222 + $0x6e0] sm:$0xf]
      %v693 = vld [vmem:[%s222 + $0x6e4] sm:$0xf]
      %v694 = vld [vmem:[%s222 + $0x6e8] sm:$0xf]
      %v695 = vld [vmem:[%s222 + $0x6ec] sm:$0xf]
      %v696 = vld [vmem:[%s222 + $0x6f0] sm:$0xf]
      %v697 = vld [vmem:[%s222 + $0x6f4] sm:$0xf]
      %v698 = vld [vmem:[%s222 + $0x6f8] sm:$0xf]
      %v699 = vld [vmem:[%s222 + $0x6fc] sm:$0xf]
      %v700 = vld [vmem:[%s222 + $0x700] sm:$0xf]
      %v701 = vld [vmem:[%s222 + $0x704] sm:$0xf]
      %v702 = vld [vmem:[%s222 + $0x708] sm:$0xf]
      %v703 = vld [vmem:[%s222 + $0x70c] sm:$0xf]
      %v704 = vld [vmem:[%s222 + $0x710] sm:$0xf]
      %v705 = vld [vmem:[%s222 + $0x714] sm:$0xf]
      %v706 = vld [vmem:[%s222 + $0x718] sm:$0xf]
      %v707 = vld [vmem:[%s222 + $0x71c] sm:$0xf]
      %v708 = vld [vmem:[%s222 + $0x720] sm:$0xf]
      %v709 = vld [vmem:[%s222 + $0x724] sm:$0xf]
      %v710 = vld [vmem:[%s222 + $0x728] sm:$0xf]
      %v711 = vld [vmem:[%s222 + $0x72c] sm:$0xf]
      %v712 = vld [vmem:[%s222 + $0x730] sm:$0xf]
      %v713 = vld [vmem:[%s222 + $0x734] sm:$0xf]
      %v714 = vld [vmem:[%s222 + $0x738] sm:$0xf]
      %v715 = vld [vmem:[%s222 + $0x73c] sm:$0xf]
      %v716 = vld [vmem:[%s222 + $0x740] sm:$0xf]
      %v717 = vld [vmem:[%s222 + $0x744] sm:$0xf]
      %v718 = vld [vmem:[%s222 + $0x748] sm:$0xf]
      %v719 = vld [vmem:[%s222 + $0x74c] sm:$0xf]
      %v720 = vld [vmem:[%s222 + $0x750] sm:$0xf]
      %v721 = vld [vmem:[%s222 + $0x754] sm:$0xf]
      %v722 = vld [vmem:[%s222 + $0x758] sm:$0xf]
      %v723 = vld [vmem:[%s222 + $0x75c] sm:$0xf]
      %v724 = vld [vmem:[%s222 + $0x760] sm:$0xf]
      %v725 = vld [vmem:[%s222 + $0x764] sm:$0xf]
      %v726 = vld [vmem:[%s222 + $0x768] sm:$0xf]
      %v727 = vld [vmem:[%s222 + $0x76c] sm:$0xf]
      %v728 = vld [vmem:[%s222 + $0x770] sm:$0xf]
      %v729 = vld [vmem:[%s222 + $0x774] sm:$0xf]
      %v730 = vld [vmem:[%s222 + $0x778] sm:$0xf]
      %v731 = vld [vmem:[%s222 + $0x77c] sm:$0xf]
      %v732 = vld [vmem:[%s222 + $0x780] sm:$0xf]
      %v733 = vld [vmem:[%s222 + $0x784] sm:$0xf]
      %v734 = vld [vmem:[%s222 + $0x788] sm:$0xf]
      %v735 = vld [vmem:[%s222 + $0x78c] sm:$0xf]
      %v736 = vld [vmem:[%s222 + $0x790] sm:$0xf]
      %v737 = vld [vmem:[%s222 + $0x794] sm:$0xf]
      %v738 = vld [vmem:[%s222 + $0x798] sm:$0xf]
      %v739 = vld [vmem:[%s222 + $0x79c] sm:$0xf]
      %v740 = vld [vmem:[%s222 + $0x7a0] sm:$0xf]
      %v741 = vld [vmem:[%s222 + $0x7a4] sm:$0xf]
      %v742 = vld [vmem:[%s222 + $0x7a8] sm:$0xf]
      %v743 = vld [vmem:[%s222 + $0x7ac] sm:$0xf]
      %v744 = vld [vmem:[%s222 + $0x7b0] sm:$0xf]
      %v745 = vld [vmem:[%s222 + $0x7b4] sm:$0xf]
      %v746 = vld [vmem:[%s222 + $0x7b8] sm:$0xf]
      %v747 = vld [vmem:[%s222 + $0x7bc] sm:$0xf]
      %v748 = vld [vmem:[%s222 + $0x7c0] sm:$0xf]
      %v749 = vld [vmem:[%s222 + $0x7c4] sm:$0xf]
      %v750 = vld [vmem:[%s222 + $0x7c8] sm:$0xf]
      %v751 = vld [vmem:[%s222 + $0x7cc] sm:$0xf]
      %v752 = vld [vmem:[%s222 + $0x7d0] sm:$0xf]
      %v753 = vld [vmem:[%s222 + $0x7d4] sm:$0xf]
      %v754 = vld [vmem:[%s222 + $0x7d8] sm:$0xf]
      %v755 = vld [vmem:[%s222 + $0x7dc] sm:$0xf]
      %v756 = vld [vmem:[%s222 + $0x7e0] sm:$0xf]
      %v757 = vld [vmem:[%s222 + $0x7e4] sm:$0xf]
      %v758 = vld [vmem:[%s222 + $0x7e8] sm:$0xf]
      %v759 = vld [vmem:[%s222 + $0x7ec] sm:$0xf]
      %v760 = vld [vmem:[%s222 + $0x7f0] sm:$0xf]
      %v761 = vld [vmem:[%s222 + $0x7f4] sm:$0xf]
      %v762 = vld [vmem:[%s222 + $0x7f8] sm:$0xf]
      %v763 = vld [vmem:[%s222 + $0x7fc] sm:$0xf]
      %v764 = vld [vmem:[%s222 + $0x800] sm:$0xf]
      %v765 = vld [vmem:[%s222 + $0x804] sm:$0xf]
      %v766 = vld [vmem:[%s222 + $0x808] sm:$0xf]
      %v767 = vld [vmem:[%s222 + $0x80c] sm:$0xf]
      %v768 = vld [vmem:[%s222 + $0x810] sm:$0xf]
      %v769 = vld [vmem:[%s222 + $0x814] sm:$0xf]
      %v770 = vld [vmem:[%s222 + $0x818] sm:$0xf]
      %v771 = vld [vmem:[%s222 + $0x81c] sm:$0xf]
      %v772 = vld [vmem:[%s222 + $0x820] sm:$0xf]
      %v773 = vld [vmem:[%s222 + $0x824] sm:$0xf]
      %v774 = vld [vmem:[%s222 + $0x828] sm:$0xf]
      %v775 = vld [vmem:[%s222 + $0x82c] sm:$0xf]
      %v776 = vld [vmem:[%s222 + $0x830] sm:$0xf]
      %v777 = vld [vmem:[%s222 + $0x834] sm:$0xf]
      %v778 = vld [vmem:[%s222 + $0x838] sm:$0xf]
      %v779 = vld [vmem:[%s222 + $0x83c] sm:$0xf]
      %v780 = vld [vmem:[%s222 + $0x840] sm:$0xf]
      %v781 = vld [vmem:[%s222 + $0x844] sm:$0xf]
      %v782 = vld [vmem:[%s222 + $0x848] sm:$0xf]
      %v783 = vld [vmem:[%s222 + $0x84c] sm:$0xf]
      %v784 = vld [vmem:[%s222 + $0x850] sm:$0xf]
      %v785 = vld [vmem:[%s222 + $0x854] sm:$0xf]
      %v786 = vld [vmem:[%s222 + $0x858] sm:$0xf]
      %v787 = vld [vmem:[%s222 + $0x85c] sm:$0xf]
      %v788 = vld [vmem:[%s222 + $0x860] sm:$0xf]
      %v789 = vld [vmem:[%s222 + $0x864] sm:$0xf]
      %v790 = vld [vmem:[%s222 + $0x868] sm:$0xf]
      %v791 = vld [vmem:[%s222 + $0x86c] sm:$0xf]
      %v792 = vld [vmem:[%s222 + $0x870] sm:$0xf]
      %v793 = vld [vmem:[%s222 + $0x874] sm:$0xf]
      %v794 = vld [vmem:[%s222 + $0x878] sm:$0xf]
      %v795 = vld [vmem:[%s222 + $0x87c] sm:$0xf]
      %v796 = vld [vmem:[%s222 + $0x880] sm:$0xf]
      %v797 = vld [vmem:[%s222 + $0x884] sm:$0xf]
      %v798 = vld [vmem:[%s222 + $0x888] sm:$0xf]
      %v799 = vld [vmem:[%s222 + $0x88c] sm:$0xf]
      %v800 = vld [vmem:[%s222 + $0x890] sm:$0xf]
      %v801 = vld [vmem:[%s222 + $0x894] sm:$0xf]
      %v802 = vld [vmem:[%s222 + $0x898] sm:$0xf]
      %v803 = vld [vmem:[%s222 + $0x89c] sm:$0xf]
      %v804 = vld [vmem:[%s222 + $0x8a0] sm:$0xf]
      %v805 = vld [vmem:[%s222 + $0x8a4] sm:$0xf]
      %v806 = vld [vmem:[%s222 + $0x8a8] sm:$0xf]
      %v807 = vld [vmem:[%s222 + $0x8ac] sm:$0xf]
      %v808 = vld [vmem:[%s222 + $0x8b0] sm:$0xf]
      %v809 = vld [vmem:[%s222 + $0x8b4] sm:$0xf]
      %v810 = vld [vmem:[%s222 + $0x8b8] sm:$0xf]
      %v811 = vld [vmem:[%s222 + $0x8bc] sm:$0xf]
      %v812 = vld [vmem:[%s222 + $0x8c0] sm:$0xf]
      %v813 = vld [vmem:[%s222 + $0x8c4] sm:$0xf]
      %v814 = vld [vmem:[%s222 + $0x8c8] sm:$0xf]
      %v815 = vld [vmem:[%s222 + $0x8cc] sm:$0xf]
      %v816 = vld [vmem:[%s222 + $0x8d0] sm:$0xf]
      %v817 = vld [vmem:[%s222 + $0x8d4] sm:$0xf]
      %v818 = vld [vmem:[%s222 + $0x8d8] sm:$0xf]
      %v819 = vld [vmem:[%s222 + $0x8dc] sm:$0xf]
      %v820 = vld [vmem:[%s222 + $0x8e0] sm:$0xf]
      %v821 = vld [vmem:[%s222 + $0x8e4] sm:$0xf]
      %v822 = vld [vmem:[%s222 + $0x8e8] sm:$0xf]
      %v823 = vld [vmem:[%s222 + $0x8ec] sm:$0xf]
      %v824 = vld [vmem:[%s222 + $0x8f0] sm:$0xf]
      %v825 = vld [vmem:[%s222 + $0x8f4] sm:$0xf]
      %v826 = vld [vmem:[%s222 + $0x8f8] sm:$0xf]
      %v827 = vld [vmem:[%s222 + $0x8fc] sm:$0xf]
      %v828 = vld [vmem:[%s222 + $0x900] sm:$0xf]
      %v829 = vld [vmem:[%s222 + $0x904] sm:$0xf]
      %v830 = vld [vmem:[%s222 + $0x908] sm:$0xf]
      %v831 = vld [vmem:[%s222 + $0x90c] sm:$0xf]
      %v832 = vld [vmem:[%s222 + $0x910] sm:$0xf]
      %v833 = vld [vmem:[%s222 + $0x914] sm:$0xf]
      %v834 = vld [vmem:[%s222 + $0x918] sm:$0xf]
      %v835 = vld [vmem:[%s222 + $0x91c] sm:$0xf]
      %v836 = vld [vmem:[%s222 + $0x920] sm:$0xf]
      %v837 = vld [vmem:[%s222 + $0x924] sm:$0xf]
      %v838 = vld [vmem:[%s222 + $0x928] sm:$0xf]
      %v839 = vld [vmem:[%s222 + $0x92c] sm:$0xf]
      %v840 = vld [vmem:[%s222 + $0x930] sm:$0xf]
      %v841 = vld [vmem:[%s222 + $0x934] sm:$0xf]
      %v842 = vld [vmem:[%s222 + $0x938] sm:$0xf]
      %v843 = vld [vmem:[%s222 + $0x93c] sm:$0xf]
      %v844 = vld [vmem:[%s222 + $0x940] sm:$0xf]
      %v845 = vld [vmem:[%s222 + $0x944] sm:$0xf]
      %v846 = vld [vmem:[%s222 + $0x948] sm:$0xf]
      %v847 = vld [vmem:[%s222 + $0x94c] sm:$0xf]
      %v848 = vld [vmem:[%s222 + $0x950] sm:$0xf]
      %v849 = vld [vmem:[%s222 + $0x954] sm:$0xf]
      %v850 = vld [vmem:[%s222 + $0x958] sm:$0xf]
      %v851 = vld [vmem:[%s222 + $0x95c] sm:$0xf]
      %v852 = vld [vmem:[%s222 + $0x960] sm:$0xf]
      %v853 = vld [vmem:[%s222 + $0x964] sm:$0xf]
      %v854 = vld [vmem:[%s222 + $0x968] sm:$0xf]
      %v855 = vld [vmem:[%s222 + $0x96c] sm:$0xf]
      %v856 = vld [vmem:[%s222 + $0x970] sm:$0xf]
      %v857 = vld [vmem:[%s222 + $0x974] sm:$0xf]
      %v858 = vld [vmem:[%s222 + $0x978] sm:$0xf]
      %v859 = vld [vmem:[%s222 + $0x97c] sm:$0xf]
      %v860 = vld [vmem:[%s222 + $0x980] sm:$0xf]
      %v861 = vld [vmem:[%s222 + $0x984] sm:$0xf]
      %v862 = vld [vmem:[%s222 + $0x988] sm:$0xf]
      %v863 = vld [vmem:[%s222 + $0x98c] sm:$0xf]
      %v864 = vld [vmem:[%s222 + $0x990] sm:$0xf]
      %v865 = vld [vmem:[%s222 + $0x994] sm:$0xf]
      %v866 = vld [vmem:[%s222 + $0x998] sm:$0xf]
      %v867 = vld [vmem:[%s222 + $0x99c] sm:$0xf]
      %v868 = vld [vmem:[%s222 + $0x9a0] sm:$0xf]
      %v869 = vld [vmem:[%s222 + $0x9a4] sm:$0xf]
      %v870 = vld [vmem:[%s222 + $0x9a8] sm:$0xf]
      %v871 = vld [vmem:[%s222 + $0x9ac] sm:$0xf]
      %v872 = vld [vmem:[%s222 + $0x9b0] sm:$0xf]
      %v873 = vld [vmem:[%s222 + $0x9b4] sm:$0xf]
      %v874 = vld [vmem:[%s222 + $0x9b8] sm:$0xf]
      %v875 = vld [vmem:[%s222 + $0x9bc] sm:$0xf]
      %v876 = vld [vmem:[%s222 + $0x9c0] sm:$0xf]
      %v877 = vld [vmem:[%s222 + $0x9c4] sm:$0xf]
      %v878 = vld [vmem:[%s222 + $0x9c8] sm:$0xf]
      %v879 = vld [vmem:[%s222 + $0x9cc] sm:$0xf]
      %v880 = vld [vmem:[%s222 + $0x9d0] sm:$0xf]
      %v881 = vld [vmem:[%s222 + $0x9d4] sm:$0xf]
      %v882 = vld [vmem:[%s222 + $0x9d8] sm:$0xf]
      %v883 = vld [vmem:[%s222 + $0x9dc] sm:$0xf]
      %v884 = vld [vmem:[%s222 + $0x9e0] sm:$0xf]
      %v885 = vld [vmem:[%s222 + $0x9e4] sm:$0xf]
      %v886 = vld [vmem:[%s222 + $0x9e8] sm:$0xf]
      %v887 = vld [vmem:[%s222 + $0x9ec] sm:$0xf]
      %v888 = vld [vmem:[%s222 + $0x9f0] sm:$0xf]
      %v889 = vld [vmem:[%s222 + $0x9f4] sm:$0xf]
      %v890 = vld [vmem:[%s222 + $0x9f8] sm:$0xf]
      %v891 = vld [vmem:[%s222 + $0x9fc] sm:$0xf]
      %v892 = vld [vmem:[%s222 + $0xa00] sm:$0xf]
      %v893 = vld [vmem:[%s222 + $0xa04] sm:$0xf]
      %v894 = vld [vmem:[%s222 + $0xa08] sm:$0xf]
      %v895 = vld [vmem:[%s222 + $0xa0c] sm:$0xf]
      %v896 = vld [vmem:[%s222 + $0xa10] sm:$0xf]
      %v897 = vld [vmem:[%s222 + $0xa14] sm:$0xf]
      %v898 = vld [vmem:[%s222 + $0xa18] sm:$0xf]
      %v899 = vld [vmem:[%s222 + $0xa1c] sm:$0xf]
      %v900 = vld [vmem:[%s222 + $0xa20] sm:$0xf]
      %v901 = vld [vmem:[%s222 + $0xa24] sm:$0xf]
      %v902 = vld [vmem:[%s222 + $0xa28] sm:$0xf]
      %v903 = vld [vmem:[%s222 + $0xa2c] sm:$0xf]
      %v904 = vld [vmem:[%s222 + $0xa30] sm:$0xf]
      %v905 = vld [vmem:[%s222 + $0xa34] sm:$0xf]
      %v906 = vld [vmem:[%s222 + $0xa38] sm:$0xf]
      %v907 = vld [vmem:[%s222 + $0xa3c] sm:$0xf]
      %v908 = vld [vmem:[%s222 + $0xa40] sm:$0xf]
      %v909 = vld [vmem:[%s222 + $0xa44] sm:$0xf]
      %v910 = vld [vmem:[%s222 + $0xa48] sm:$0xf]
      %v911 = vld [vmem:[%s222 + $0xa4c] sm:$0xf]
      %v912 = vld [vmem:[%s222 + $0xa50] sm:$0xf]
      %v913 = vld [vmem:[%s222 + $0xa54] sm:$0xf]
      %v914 = vld [vmem:[%s222 + $0xa58] sm:$0xf]
      %v915 = vld [vmem:[%s222 + $0xa5c] sm:$0xf]
      %v916 = vld [vmem:[%s222 + $0xa60] sm:$0xf]
      %v917 = vld [vmem:[%s222 + $0xa64] sm:$0xf]
      %v918 = vld [vmem:[%s222 + $0xa68] sm:$0xf]
      %v919 = vld [vmem:[%s222 + $0xa6c] sm:$0xf]
      %v920 = vld [vmem:[%s222 + $0xa70] sm:$0xf]
      %v921 = vld [vmem:[%s222 + $0xa74] sm:$0xf]
      %v922 = vld [vmem:[%s222 + $0xa78] sm:$0xf]
      %v923 = vld [vmem:[%s222 + $0xa7c] sm:$0xf]
      %v924 = vld [vmem:[%s222 + $0xa80] sm:$0xf]
      %v925 = vld [vmem:[%s222 + $0xa84] sm:$0xf]
      %v926 = vld [vmem:[%s222 + $0xa88] sm:$0xf]
      %v927 = vld [vmem:[%s222 + $0xa8c] sm:$0xf]
      %v928 = vld [vmem:[%s222 + $0xa90] sm:$0xf]
      %v929 = vld [vmem:[%s222 + $0xa94] sm:$0xf]
      %v930 = vld [vmem:[%s222 + $0xa98] sm:$0xf]
      %v931 = vld [vmem:[%s222 + $0xa9c] sm:$0xf]
      %v932 = vld [vmem:[%s222 + $0xaa0] sm:$0xf]
      %v933 = vld [vmem:[%s222 + $0xaa4] sm:$0xf]
      %v934 = vld [vmem:[%s222 + $0xaa8] sm:$0xf]
      %v935 = vld [vmem:[%s222 + $0xaac] sm:$0xf]
      %v936 = vld [vmem:[%s222 + $0xab0] sm:$0xf]
      %v937 = vld [vmem:[%s222 + $0xab4] sm:$0xf]
      %v938 = vld [vmem:[%s222 + $0xab8] sm:$0xf]
      %v939 = vld [vmem:[%s222 + $0xabc] sm:$0xf]
      %v940 = vld [vmem:[%s222 + $0xac0] sm:$0xf]
      %v941 = vld [vmem:[%s222 + $0xac4] sm:$0xf]
      %v942 = vld [vmem:[%s222 + $0xac8] sm:$0xf]
      %v943 = vld [vmem:[%s222 + $0xacc] sm:$0xf]
      %v944 = vld [vmem:[%s222 + $0xad0] sm:$0xf]
      %v945 = vld [vmem:[%s222 + $0xad4] sm:$0xf]
      %v946 = vld [vmem:[%s222 + $0xad8] sm:$0xf]
      %v947 = vld [vmem:[%s222 + $0xadc] sm:$0xf]
      %v948 = vld [vmem:[%s222 + $0xae0] sm:$0xf]
      %v949 = vld [vmem:[%s222 + $0xae4] sm:$0xf]
      %v950 = vld [vmem:[%s222 + $0xae8] sm:$0xf]
      %v951 = vld [vmem:[%s222 + $0xaec] sm:$0xf]
      %v952 = vld [vmem:[%s222 + $0xaf0] sm:$0xf]
      %v953 = vld [vmem:[%s222 + $0xaf4] sm:$0xf]
      %v954 = vld [vmem:[%s222 + $0xaf8] sm:$0xf]
      %v955 = vld [vmem:[%s222 + $0xafc] sm:$0xf]
      %v956 = vld [vmem:[%s222 + $0xb00] sm:$0xf]
      %v957 = vld [vmem:[%s222 + $0xb04] sm:$0xf]
      %v958 = vld [vmem:[%s222 + $0xb08] sm:$0xf]
      %v959 = vld [vmem:[%s222 + $0xb0c] sm:$0xf]
      %v960 = vld [vmem:[%s222 + $0xb10] sm:$0xf]
      %v961 = vld [vmem:[%s222 + $0xb14] sm:$0xf]
      %v962 = vld [vmem:[%s222 + $0xb18] sm:$0xf]
      %v963 = vld [vmem:[%s222 + $0xb1c] sm:$0xf]
      %v964 = vld [vmem:[%s222 + $0xb20] sm:$0xf]
      %v965 = vld [vmem:[%s222 + $0xb24] sm:$0xf]
      %v966 = vld [vmem:[%s222 + $0xb28] sm:$0xf]
      %v967 = vld [vmem:[%s222 + $0xb2c] sm:$0xf]
      %v968 = vld [vmem:[%s222 + $0xb30] sm:$0xf]
      %v969 = vld [vmem:[%s222 + $0xb34] sm:$0xf]
      %v970 = vld [vmem:[%s222 + $0xb38] sm:$0xf]
      %v971 = vld [vmem:[%s222 + $0xb3c] sm:$0xf]
      %v972 = vld [vmem:[%s222 + $0xb40] sm:$0xf]
      %v973 = vld [vmem:[%s222 + $0xb44] sm:$0xf]
      %v974 = vld [vmem:[%s222 + $0xb48] sm:$0xf]
      %v975 = vld [vmem:[%s222 + $0xb4c] sm:$0xf]
      %v976 = vld [vmem:[%s222 + $0xb50] sm:$0xf]
      %v977 = vld [vmem:[%s222 + $0xb54] sm:$0xf]
      %v978 = vld [vmem:[%s222 + $0xb58] sm:$0xf]
      %v979 = vld [vmem:[%s222 + $0xb5c] sm:$0xf]
      %v980 = vld [vmem:[%s222 + $0xb60] sm:$0xf]
      %v981 = vld [vmem:[%s222 + $0xb64] sm:$0xf]
      %v982 = vld [vmem:[%s222 + $0xb68] sm:$0xf]
      %v983 = vld [vmem:[%s222 + $0xb6c] sm:$0xf]
      %v984 = vld [vmem:[%s222 + $0xb70] sm:$0xf]
      %v985 = vld [vmem:[%s222 + $0xb74] sm:$0xf]
      %v986 = vld [vmem:[%s222 + $0xb78] sm:$0xf]
      %v987 = vld [vmem:[%s222 + $0xb7c] sm:$0xf]
      %v988 = vld [vmem:[%s222 + $0xb80] sm:$0xf]
      %v989 = vld [vmem:[%s222 + $0xb84] sm:$0xf]
      %v990 = vld [vmem:[%s222 + $0xb88] sm:$0xf]
      %v991 = vld [vmem:[%s222 + $0xb8c] sm:$0xf]
      %v992 = vld [vmem:[%s222 + $0xb90] sm:$0xf]
      %v993 = vld [vmem:[%s222 + $0xb94] sm:$0xf]
      %v994 = vld [vmem:[%s222 + $0xb98] sm:$0xf]
      %v995 = vld [vmem:[%s222 + $0xb9c] sm:$0xf]
      %v996 = vld [vmem:[%s222 + $0xba0] sm:$0xf]
      %v997 = vld [vmem:[%s222 + $0xba4] sm:$0xf]
      %v998 = vld [vmem:[%s222 + $0xba8] sm:$0xf]
      %v999 = vld [vmem:[%s222 + $0xbac] sm:$0xf]
      %v1000 = vld [vmem:[%s222 + $0xbb0] sm:$0xf]
      %v1001 = vld [vmem:[%s222 + $0xbb4] sm:$0xf]
      %v1002 = vld [vmem:[%s222 + $0xbb8] sm:$0xf]
      %v1003 = vld [vmem:[%s222 + $0xbbc] sm:$0xf]
      %v1004 = vld [vmem:[%s222 + $0xbc0] sm:$0xf]
      %v1005 = vld [vmem:[%s222 + $0xbc4] sm:$0xf]
      %v1006 = vld [vmem:[%s222 + $0xbc8] sm:$0xf]
      %v1007 = vld [vmem:[%s222 + $0xbcc] sm:$0xf]
      %v1008 = vld [vmem:[%s222 + $0xbd0] sm:$0xf]
      %v1009 = vld [vmem:[%s222 + $0xbd4] sm:$0xf]
      %v1010 = vld [vmem:[%s222 + $0xbd8] sm:$0xf]
      %v1011 = vld [vmem:[%s222 + $0xbdc] sm:$0xf]
      %v1012 = vld [vmem:[%s222 + $0xbe0] sm:$0xf]
      %v1013 = vld [vmem:[%s222 + $0xbe4] sm:$0xf]
      %v1014 = vld [vmem:[%s222 + $0xbe8] sm:$0xf]
      %v1015 = vld [vmem:[%s222 + $0xbec] sm:$0xf]
      %v1016 = vld [vmem:[%s222 + $0xbf0] sm:$0xf]
      %v1017 = vld [vmem:[%s222 + $0xbf4] sm:$0xf]
      %v1018 = vld [vmem:[%s222 + $0xbf8] sm:$0xf]
      %v1019 = vld [vmem:[%s222 + $0xbfc] sm:$0xf]
      %v1020 = vld [vmem:[%s222 + $0xc00] sm:$0xf]
      %v1021 = vld [vmem:[%s222 + $0xc04] sm:$0xf]
      %v1022 = vld [vmem:[%s222 + $0xc08] sm:$0xf]
      %v1023 = vld [vmem:[%s222 + $0xc0c] sm:$0xf]
      %v1024 = vld [vmem:[%s222 + $0xc10] sm:$0xf]
      %v1025 = vld [vmem:[%s222 + $0xc14] sm:$0xf]
      %v1026 = vld [vmem:[%s222 + $0xc18] sm:$0xf]
      %v1027 = vld [vmem:[%s222 + $0xc1c] sm:$0xf]
      %v1028 = vld [vmem:[%s222 + $0xc20] sm:$0xf]
      %v1029 = vld [vmem:[%s222 + $0xc24] sm:$0xf]
      %v1030 = vld [vmem:[%s222 + $0xc28] sm:$0xf]
      %v1031 = vld [vmem:[%s222 + $0xc2c] sm:$0xf]
      %v1032 = vld [vmem:[%s222 + $0xc30] sm:$0xf]
      %v1033 = vld [vmem:[%s222 + $0xc34] sm:$0xf]
      %v1034 = vld [vmem:[%s222 + $0xc38] sm:$0xf]
      %v1035 = vld [vmem:[%s222 + $0xc3c] sm:$0xf]
      %1037 = vst [vmem:[#allocation1] ss:$9 sm:$0xff] %v245
      %v1038 = vld [vmem:[#allocation1] sm:$0xff]
      %v1039 = vld [vmem:[#allocation1 + $0x9] sm:$0xff]
      %v1040 = vld [vmem:[#allocation1 + $0x12] sm:$0xff]
      %v1041 = vld [vmem:[#allocation1 + $0x1b] sm:$0xff]
      %v1042 = vld [vmem:[#allocation1 + $0x24] sm:$0xff]
      %v1043 = vld [vmem:[#allocation1 + $0x2d] sm:$0xff]
      %v1044 = vld [vmem:[#allocation1 + $0x36] sm:$0xff]
      %v1045 = vld [vmem:[#allocation1 + $0x3f] sm:$0xff]
      %1047 = vst [vmem:[#allocation1] ss:$9 sm:$0xff] %v246
      %v1048 = vld [vmem:[#allocation1] sm:$0xff]
      %v1049 = vld [vmem:[#allocation1 + $0x9] sm:$0xff]
      %v1050 = vld [vmem:[#allocation1 + $0x12] sm:$0xff]
      %v1051 = vld [vmem:[#allocation1 + $0x1b] sm:$0xff]
      %v1052 = vld [vmem:[#allocation1 + $0x24] sm:$0xff]
      %v1053 = vld [vmem:[#allocation1 + $0x2d] sm:$0xff]
      %v1054 = vld [vmem:[#allocation1 + $0x36] sm:$0xff]
      %v1055 = vld [vmem:[#allocation1 + $0x3f] sm:$0xff]
      %1057 = vst [vmem:[#allocation1] ss:$9 sm:$0xff] %v247
      %v1058 = vld [vmem:[#allocation1] sm:$0xff]
      %v1059 = vld [vmem:[#allocation1 + $0x9] sm:$0xff]
      %v1060 = vld [vmem:[#allocation1 + $0x12] sm:$0xff]
      %v1061 = vld [vmem:[#allocation1 + $0x1b] sm:$0xff]
      %v1062 = vld [vmem:[#allocation1 + $0x24] sm:$0xff]
      %v1063 = vld [vmem:[#allocation1 + $0x2d] sm:$0xff]
      %v1064 = vld [vmem:[#allocation1 + $0x36] sm:$0xff]
      %v1065 = vld [vmem:[#allocation1 + $0x3f] sm:$0xff]
      %1067 = vst [vmem:[#allocation1] ss:$9 sm:$0xff] %v248
      %v1068 = vld [vmem:[#allocation1] sm:$0xff]
      %v1069 = vld [vmem:[#allocation1 + $0x9] sm:$0xff]
      %v1070 = vld [vmem:[#allocation1 + $0x12] sm:$0xff]
      %v1071 = vld [vmem:[#allocation1 + $0x1b] sm:$0xff]
      %v1072 = vld [vmem:[#allocation1 + $0x24] sm:$0xff]
      %v1073 = vld [vmem:[#allocation1 + $0x2d] sm:$0xff]
      %v1074 = vld [vmem:[#allocation1 + $0x36] sm:$0xff]
      %v1075 = vld [vmem:[#allocation1 + $0x3f] sm:$0xff]
      %1077 = vst [vmem:[#allocation1] ss:$9 sm:$0xff] %v249
      %v1078 = vld [vmem:[#allocation1] sm:$0xff]
      %v1079 = vld [vmem:[#allocation1 + $0x9] sm:$0xff]
      %v1080 = vld [vmem:[#allocation1 + $0x12] sm:$0xff]
      %v1081 = vld [vmem:[#allocation1 + $0x1b] sm:$0xff]
      %v1082 = vld [vmem:[#allocation1 + $0x24] sm:$0xff]
      %v1083 = vld [vmem:[#allocation1 + $0x2d] sm:$0xff]
      %v1084 = vld [vmem:[#allocation1 + $0x36] sm:$0xff]
      %v1085 = vld [vmem:[#allocation1 + $0x3f] sm:$0xff]
      %1087 = vst [vmem:[#allocation1] ss:$9 sm:$0xff] %v250
      %v1088 = vld [vmem:[#allocation1] sm:$0xff]
      %v1089 = vld [vmem:[#allocation1 + $0x9] sm:$0xff]
      %v1090 = vld [vmem:[#allocation1 + $0x12] sm:$0xff]
      %v1091 = vld [vmem:[#allocation1 + $0x1b] sm:$0xff]
      %v1092 = vld [vmem:[#allocation1 + $0x24] sm:$0xff]
      %v1093 = vld [vmem:[#allocation1 + $0x2d] sm:$0xff]
      %v1094 = vld [vmem:[#allocation1 + $0x36] sm:$0xff]
      %v1095 = vld [vmem:[#allocation1 + $0x3f] sm:$0xff]
      %1097 = vst [vmem:[#allocation1] ss:$9 sm:$0xff] %v251
      %v1098 = vld [vmem:[#allocation1] sm:$0xff]
      %v1932 = vunpack.c.l.b16 %v252
      %v1933 = vunpack.c.l.b16 %v253
      %v1934 = vunpack.c.l.b16 %v254
      %v1935 = vunpack.c.l.b16 %v255
      %v1936 = vunpack.c.l.b16 %v256
      %v1937 = vunpack.c.l.b16 %v257
      %v1938 = vunpack.c.l.b16 %v258
      %v1939 = vunpack.c.l.b16 %v259
      %v1940 = vunpack.c.l.b16 %v260
      %v1941 = vunpack.c.l.b16 %v261
      %v1942 = vunpack.c.l.b16 %v262
      %v1943 = vunpack.c.l.b16 %v263
      %v1944 = vunpack.c.l.b16 %v264
      %v1945 = vunpack.c.l.b16 %v265
      %v1946 = vunpack.c.l.b16 %v266
      %v1947 = vunpack.c.l.b16 %v267
      %v1948 = vunpack.c.l.b16 %v268
      %v1949 = vunpack.c.l.b16 %v269
      %v1950 = vunpack.c.l.b16 %v270
      %v1951 = vunpack.c.l.b16 %v271
      %v1952 = vunpack.c.l.b16 %v272
      %v1953 = vunpack.c.l.b16 %v273
      %v1954 = vunpack.c.l.b16 %v274
      %v1955 = vunpack.c.l.b16 %v275
      %v1956 = vunpack.c.l.b16 %v276
      %v1957 = vunpack.c.l.b16 %v277
      %v1958 = vunpack.c.l.b16 %v278
      %v1959 = vunpack.c.l.b16 %v279
      %v1960 = vunpack.c.l.b16 %v280
      %v1961 = vunpack.c.l.b16 %v281
      %v1962 = vunpack.c.l.b16 %v282
      %v1963 = vunpack.c.l.b16 %v283
      %v1964 = vunpack.c.l.b16 %v284
      %v1965 = vunpack.c.l.b16 %v285
      %v1966 = vunpack.c.l.b16 %v286
      %v1967 = vunpack.c.l.b16 %v287
      %v1968 = vunpack.c.l.b16 %v288
      %v1969 = vunpack.c.l.b16 %v289
      %v1970 = vunpack.c.l.b16 %v290
      %v1971 = vunpack.c.l.b16 %v291
      %v1972 = vunpack.c.l.b16 %v292
      %v1973 = vunpack.c.l.b16 %v293
      %v1974 = vunpack.c.l.b16 %v294
      %v1975 = vunpack.c.l.b16 %v295
      %v1976 = vunpack.c.l.b16 %v296
      %v1977 = vunpack.c.l.b16 %v297
      %v1978 = vunpack.c.l.b16 %v298
      %v1979 = vunpack.c.l.b16 %v299
      %v1980 = vunpack.c.l.b16 %v300
      %v1981 = vunpack.c.l.b16 %v301
      %v1982 = vunpack.c.l.b16 %v302
      %v1983 = vunpack.c.l.b16 %v303
      %v1984 = vunpack.c.l.b16 %v304
      %v1985 = vunpack.c.l.b16 %v305
      %v1986 = vunpack.c.l.b16 %v306
      %v1987 = vunpack.c.l.b16 %v307
      %v1988 = vunpack.c.l.b16 %v308
      %v1989 = vunpack.c.l.b16 %v309
      %v1990 = vunpack.c.l.b16 %v310
      %v1991 = vunpack.c.l.b16 %v311
      %v1992 = vunpack.c.l.b16 %v312
      %v1993 = vunpack.c.l.b16 %v313
      %v1994 = vunpack.c.l.b16 %v314
      %v1995 = vunpack.c.l.b16 %v315
      %v1996 = vunpack.c.l.b16 %v316
      %v1997 = vunpack.c.l.b16 %v317
      %v1998 = vunpack.c.l.b16 %v318
      %v1999 = vunpack.c.l.b16 %v319
      %v2000 = vunpack.c.l.b16 %v320
      %v2001 = vunpack.c.l.b16 %v321
      %v2002 = vunpack.c.l.b16 %v322
      %v2003 = vunpack.c.l.b16 %v323
      %v2004 = vunpack.c.l.b16 %v324
      %v2005 = vunpack.c.l.b16 %v325
      %v2006 = vunpack.c.l.b16 %v326
      %v2007 = vunpack.c.l.b16 %v327
      %v2008 = vunpack.c.l.b16 %v328
      %v2009 = vunpack.c.l.b16 %v329
      %v2010 = vunpack.c.l.b16 %v330
      %v2011 = vunpack.c.l.b16 %v331
      %v2012 = vunpack.c.l.b16 %v332
      %v2013 = vunpack.c.l.b16 %v333
      %v2014 = vunpack.c.l.b16 %v334
      %v2015 = vunpack.c.l.b16 %v335
      %v2016 = vunpack.c.l.b16 %v336
      %v2017 = vunpack.c.l.b16 %v337
      %v2018 = vunpack.c.l.b16 %v338
      %v2019 = vunpack.c.l.b16 %v339
      %v2020 = vunpack.c.l.b16 %v340
      %v2021 = vunpack.c.l.b16 %v341
      %v2022 = vunpack.c.l.b16 %v342
      %v2023 = vunpack.c.l.b16 %v343
      %v2024 = vunpack.c.l.b16 %v344
      %v2025 = vunpack.c.l.b16 %v345
      %v2026 = vunpack.c.l.b16 %v346
      %v2027 = vunpack.c.l.b16 %v347
      %v2028 = vunpack.c.l.b16 %v348
      %v2029 = vunpack.c.l.b16 %v349
      %v2030 = vunpack.c.l.b16 %v350
      %v2031 = vunpack.c.l.b16 %v351
      %v2032 = vunpack.c.l.b16 %v352
      %v2033 = vunpack.c.l.b16 %v353
      %v2034 = vunpack.c.l.b16 %v354
      %v2035 = vunpack.c.l.b16 %v355
      %v2036 = vunpack.c.l.b16 %v356
      %v2037 = vunpack.c.l.b16 %v357
      %v2038 = vunpack.c.l.b16 %v358
      %v2039 = vunpack.c.l.b16 %v359
      %v2040 = vunpack.c.l.b16 %v360
      %v2041 = vunpack.c.l.b16 %v361
      %v2042 = vunpack.c.l.b16 %v362
      %v2043 = vunpack.c.l.b16 %v363
      %v2044 = vunpack.c.l.b16 %v364
      %v2045 = vunpack.c.l.b16 %v365
      %v2046 = vunpack.c.l.b16 %v366
      %v2047 = vunpack.c.l.b16 %v367
      %v2048 = vunpack.c.l.b16 %v368
      %v2049 = vunpack.c.l.b16 %v369
      %v2050 = vunpack.c.l.b16 %v370
      %v2051 = vunpack.c.l.b16 %v371
      %v2052 = vunpack.c.l.b16 %v372
      %v2053 = vunpack.c.l.b16 %v373
      %v2054 = vunpack.c.l.b16 %v374
      %v2055 = vunpack.c.l.b16 %v375
      %v2056 = vunpack.c.l.b16 %v376
      %v2057 = vunpack.c.l.b16 %v377
      %v2058 = vunpack.c.l.b16 %v378
      %v2059 = vunpack.c.l.b16 %v379
      %v2060 = vunpack.c.l.b16 %v380
      %v2061 = vunpack.c.l.b16 %v381
      %v2062 = vunpack.c.l.b16 %v382
      %v2063 = vunpack.c.l.b16 %v383
      %v2064 = vunpack.c.l.b16 %v384
      %v2065 = vunpack.c.l.b16 %v385
      %v2066 = vunpack.c.l.b16 %v386
      %v2067 = vunpack.c.l.b16 %v387
      %v2068 = vunpack.c.l.b16 %v388
      %v2069 = vunpack.c.l.b16 %v389
      %v2070 = vunpack.c.l.b16 %v390
      %v2071 = vunpack.c.l.b16 %v391
      %v2072 = vunpack.c.l.b16 %v392
      %v2073 = vunpack.c.l.b16 %v393
      %v2074 = vunpack.c.l.b16 %v394
      %v2075 = vunpack.c.l.b16 %v395
      %v2076 = vunpack.c.l.b16 %v396
      %v2077 = vunpack.c.l.b16 %v397
      %v2078 = vunpack.c.l.b16 %v398
      %v2079 = vunpack.c.l.b16 %v399
      %v2080 = vunpack.c.l.b16 %v400
      %v2081 = vunpack.c.l.b16 %v401
      %v2082 = vunpack.c.l.b16 %v402
      %v2083 = vunpack.c.l.b16 %v403
      %v2084 = vunpack.c.l.b16 %v404
      %v2085 = vunpack.c.l.b16 %v405
      %v2086 = vunpack.c.l.b16 %v406
      %v2087 = vunpack.c.l.b16 %v407
      %v2088 = vunpack.c.l.b16 %v408
      %v2089 = vunpack.c.l.b16 %v409
      %v2090 = vunpack.c.l.b16 %v410
      %v2091 = vunpack.c.l.b16 %v411
      %v2092 = vunpack.c.l.b16 %v412
      %v2093 = vunpack.c.l.b16 %v413
      %v2094 = vunpack.c.l.b16 %v414
      %v2095 = vunpack.c.l.b16 %v415
      %v2096 = vunpack.c.l.b16 %v416
      %v2097 = vunpack.c.l.b16 %v417
      %v2098 = vunpack.c.l.b16 %v418
      %v2099 = vunpack.c.l.b16 %v419
      %v2100 = vunpack.c.l.b16 %v420
      %v2101 = vunpack.c.l.b16 %v421
      %v2102 = vunpack.c.l.b16 %v422
      %v2103 = vunpack.c.l.b16 %v423
      %v2104 = vunpack.c.l.b16 %v424
      %v2105 = vunpack.c.l.b16 %v425
      %v2106 = vunpack.c.l.b16 %v426
      %v2107 = vunpack.c.l.b16 %v427
      %v2108 = vunpack.c.l.b16 %v428
      %v2109 = vunpack.c.l.b16 %v429
      %v2110 = vunpack.c.l.b16 %v430
      %v2111 = vunpack.c.l.b16 %v431
      %v2112 = vunpack.c.l.b16 %v432
      %v2113 = vunpack.c.l.b16 %v433
      %v2114 = vunpack.c.l.b16 %v434
      %v2115 = vunpack.c.l.b16 %v435
      %v2116 = vunpack.c.l.b16 %v436
      %v2117 = vunpack.c.l.b16 %v437
      %v2118 = vunpack.c.l.b16 %v438
      %v2119 = vunpack.c.l.b16 %v439
      %v2120 = vunpack.c.l.b16 %v440
      %v2121 = vunpack.c.l.b16 %v441
      %v2122 = vunpack.c.l.b16 %v442
      %v2123 = vunpack.c.l.b16 %v443
      %v2124 = vunpack.c.l.b16 %v444
      %v2125 = vunpack.c.l.b16 %v445
      %v2126 = vunpack.c.l.b16 %v446
      %v2127 = vunpack.c.l.b16 %v447
      %v2128 = vunpack.c.l.b16 %v448
      %v2129 = vunpack.c.l.b16 %v449
      %v2130 = vunpack.c.l.b16 %v450
      %v2131 = vunpack.c.l.b16 %v451
      %v2132 = vunpack.c.l.b16 %v452
      %v2133 = vunpack.c.l.b16 %v453
      %v2134 = vunpack.c.l.b16 %v454
      %v2135 = vunpack.c.l.b16 %v455
      %v2136 = vunpack.c.l.b16 %v456
      %v2137 = vunpack.c.l.b16 %v457
      %v2138 = vunpack.c.l.b16 %v458
      %v2139 = vunpack.c.l.b16 %v459
      %v2140 = vunpack.c.l.b16 %v460
      %v2141 = vunpack.c.l.b16 %v461
      %v2142 = vunpack.c.l.b16 %v462
      %v2143 = vunpack.c.l.b16 %v463
      %v2144 = vunpack.c.l.b16 %v464
      %v2145 = vunpack.c.l.b16 %v465
      %v2146 = vunpack.c.l.b16 %v466
      %v2147 = vunpack.c.l.b16 %v467
      %v2148 = vunpack.c.l.b16 %v468
      %v2149 = vunpack.c.l.b16 %v469
      %v2150 = vunpack.c.l.b16 %v470
      %v2151 = vunpack.c.l.b16 %v471
      %v2152 = vunpack.c.l.b16 %v472
      %v2153 = vunpack.c.l.b16 %v473
      %v2154 = vunpack.c.l.b16 %v474
      %v2155 = vunpack.c.l.b16 %v475
      %v2156 = vunpack.c.l.b16 %v476
      %v2157 = vunpack.c.l.b16 %v477
      %v2158 = vunpack.c.l.b16 %v478
      %v2159 = vunpack.c.l.b16 %v479
      %v2160 = vunpack.c.l.b16 %v480
      %v2161 = vunpack.c.l.b16 %v481
      %v2162 = vunpack.c.l.b16 %v482
      %v2163 = vunpack.c.l.b16 %v483
      %v2164 = vunpack.c.l.b16 %v484
      %v2165 = vunpack.c.l.b16 %v485
      %v2166 = vunpack.c.l.b16 %v486
      %v2167 = vunpack.c.l.b16 %v487
      %v2168 = vunpack.c.l.b16 %v488
      %v2169 = vunpack.c.l.b16 %v489
      %v2170 = vunpack.c.l.b16 %v490
      %v2171 = vunpack.c.l.b16 %v491
      %v2172 = vunpack.c.l.b16 %v492
      %v2173 = vunpack.c.l.b16 %v493
      %v2174 = vunpack.c.l.b16 %v494
      %v2175 = vunpack.c.l.b16 %v495
      %v2176 = vunpack.c.l.b16 %v496
      %v2177 = vunpack.c.l.b16 %v497
      %v2178 = vunpack.c.l.b16 %v498
      %v2179 = vunpack.c.l.b16 %v499
      %v2180 = vunpack.c.l.b16 %v500
      %v2181 = vunpack.c.l.b16 %v501
      %v2182 = vunpack.c.l.b16 %v502
      %v2183 = vunpack.c.l.b16 %v503
      %v2184 = vunpack.c.l.b16 %v504
      %v2185 = vunpack.c.l.b16 %v505
      %v2186 = vunpack.c.l.b16 %v506
      %v2187 = vunpack.c.l.b16 %v507
      %v2188 = vunpack.c.l.b16 %v508
      %v2189 = vunpack.c.l.b16 %v509
      %v2190 = vunpack.c.l.b16 %v510
      %v2191 = vunpack.c.l.b16 %v511
      %v2192 = vunpack.c.l.b16 %v512
      %v2193 = vunpack.c.l.b16 %v513
      %v2194 = vunpack.c.l.b16 %v514
      %v2195 = vunpack.c.l.b16 %v515
      %v2196 = vunpack.c.l.b16 %v516
      %v2197 = vunpack.c.l.b16 %v517
      %v2198 = vunpack.c.l.b16 %v518
      %v2199 = vunpack.c.l.b16 %v519
      %v2200 = vunpack.c.l.b16 %v520
      %v2201 = vunpack.c.l.b16 %v521
      %v2202 = vunpack.c.l.b16 %v522
      %v2203 = vunpack.c.l.b16 %v523
      %v2204 = vunpack.c.l.b16 %v524
      %v2205 = vunpack.c.l.b16 %v525
      %v2206 = vunpack.c.l.b16 %v526
      %v2207 = vunpack.c.l.b16 %v527
      %v2208 = vunpack.c.l.b16 %v528
      %v2209 = vunpack.c.l.b16 %v529
      %v2210 = vunpack.c.l.b16 %v530
      %v2211 = vunpack.c.l.b16 %v531
      %v2212 = vunpack.c.l.b16 %v532
      %v2213 = vunpack.c.l.b16 %v533
      %v2214 = vunpack.c.l.b16 %v534
      %v2215 = vunpack.c.l.b16 %v535
      %v2216 = vunpack.c.l.b16 %v536
      %v2217 = vunpack.c.l.b16 %v537
      %v2218 = vunpack.c.l.b16 %v538
      %v2219 = vunpack.c.l.b16 %v539
      %v2220 = vunpack.c.l.b16 %v540
      %v2221 = vunpack.c.l.b16 %v541
      %v2222 = vunpack.c.l.b16 %v542
      %v2223 = vunpack.c.l.b16 %v543
      %v2224 = vunpack.c.l.b16 %v544
      %v2225 = vunpack.c.l.b16 %v545
      %v2226 = vunpack.c.l.b16 %v546
      %v2227 = vunpack.c.l.b16 %v547
      %v2228 = vunpack.c.l.b16 %v548
      %v2229 = vunpack.c.l.b16 %v549
      %v2230 = vunpack.c.l.b16 %v550
      %v2231 = vunpack.c.l.b16 %v551
      %v2232 = vunpack.c.l.b16 %v552
      %v2233 = vunpack.c.l.b16 %v553
      %v2234 = vunpack.c.l.b16 %v554
      %v2235 = vunpack.c.l.b16 %v555
      %v2236 = vunpack.c.l.b16 %v556
      %v2237 = vunpack.c.l.b16 %v557
      %v2238 = vunpack.c.l.b16 %v558
      %v2239 = vunpack.c.l.b16 %v559
      %v2240 = vunpack.c.l.b16 %v560
      %v2241 = vunpack.c.l.b16 %v561
      %v2242 = vunpack.c.l.b16 %v562
      %v2243 = vunpack.c.l.b16 %v563
      %v2244 = vunpack.c.l.b16 %v564
      %v2245 = vunpack.c.l.b16 %v565
      %v2246 = vunpack.c.l.b16 %v566
      %v2247 = vunpack.c.l.b16 %v567
      %v2248 = vunpack.c.l.b16 %v568
      %v2249 = vunpack.c.l.b16 %v569
      %v2250 = vunpack.c.l.b16 %v570
      %v2251 = vunpack.c.l.b16 %v571
      %v2252 = vunpack.c.l.b16 %v572
      %v2253 = vunpack.c.l.b16 %v573
      %v2254 = vunpack.c.l.b16 %v574
      %v2255 = vunpack.c.l.b16 %v575
      %v2256 = vunpack.c.l.b16 %v576
      %v2257 = vunpack.c.l.b16 %v577
      %v2258 = vunpack.c.l.b16 %v578
      %v2259 = vunpack.c.l.b16 %v579
      %v2260 = vunpack.c.l.b16 %v580
      %v2261 = vunpack.c.l.b16 %v581
      %v2262 = vunpack.c.l.b16 %v582
      %v2263 = vunpack.c.l.b16 %v583
      %v2264 = vunpack.c.l.b16 %v584
      %v2265 = vunpack.c.l.b16 %v585
      %v2266 = vunpack.c.l.b16 %v586
      %v2267 = vunpack.c.l.b16 %v587
      %v2268 = vunpack.c.l.b16 %v588
      %v2269 = vunpack.c.l.b16 %v589
      %v2270 = vunpack.c.l.b16 %v590
      %v2271 = vunpack.c.l.b16 %v591
      %v2272 = vunpack.c.l.b16 %v592
      %v2273 = vunpack.c.l.b16 %v593
      %v2274 = vunpack.c.l.b16 %v594
      %v2275 = vunpack.c.l.b16 %v595
      %v2276 = vunpack.c.l.b16 %v596
      %v2277 = vunpack.c.l.b16 %v597
      %v2278 = vunpack.c.l.b16 %v598
      %v2279 = vunpack.c.l.b16 %v599
      %v2280 = vunpack.c.l.b16 %v600
      %v2281 = vunpack.c.l.b16 %v601
      %v2282 = vunpack.c.l.b16 %v602
      %v2283 = vunpack.c.l.b16 %v603
      %v2284 = vunpack.c.l.b16 %v604
      %v2285 = vunpack.c.l.b16 %v605
      %v2286 = vunpack.c.l.b16 %v606
      %v2287 = vunpack.c.l.b16 %v607
      %v2288 = vunpack.c.l.b16 %v608
      %v2289 = vunpack.c.l.b16 %v609
      %v2290 = vunpack.c.l.b16 %v610
      %v2291 = vunpack.c.l.b16 %v611
      %v2292 = vunpack.c.l.b16 %v612
      %v2293 = vunpack.c.l.b16 %v613
      %v2294 = vunpack.c.l.b16 %v614
      %v2295 = vunpack.c.l.b16 %v615
      %v2296 = vunpack.c.l.b16 %v616
      %v2297 = vunpack.c.l.b16 %v617
      %v2298 = vunpack.c.l.b16 %v618
      %v2299 = vunpack.c.l.b16 %v619
      %v2300 = vunpack.c.l.b16 %v620
      %v2301 = vunpack.c.l.b16 %v621
      %v2302 = vunpack.c.l.b16 %v622
      %v2303 = vunpack.c.l.b16 %v623
      %v2304 = vunpack.c.l.b16 %v624
      %v2305 = vunpack.c.l.b16 %v625
      %v2306 = vunpack.c.l.b16 %v626
      %v2307 = vunpack.c.l.b16 %v627
      %v2308 = vunpack.c.l.b16 %v628
      %v2309 = vunpack.c.l.b16 %v629
      %v2310 = vunpack.c.l.b16 %v630
      %v2311 = vunpack.c.l.b16 %v631
      %v2312 = vunpack.c.l.b16 %v632
      %v2313 = vunpack.c.l.b16 %v633
      %v2314 = vunpack.c.l.b16 %v634
      %v2315 = vunpack.c.l.b16 %v635
      %v2316 = vunpack.c.l.b16 %v636
      %v2317 = vunpack.c.l.b16 %v637
      %v2318 = vunpack.c.l.b16 %v638
      %v2319 = vunpack.c.l.b16 %v639
      %v2320 = vunpack.c.l.b16 %v640
      %v2321 = vunpack.c.l.b16 %v641
      %v2322 = vunpack.c.l.b16 %v642
      %v2323 = vunpack.c.l.b16 %v643
      %v2324 = vunpack.c.l.b16 %v644
      %v2325 = vunpack.c.l.b16 %v645
      %v2326 = vunpack.c.l.b16 %v646
      %v2327 = vunpack.c.l.b16 %v647
      %v2328 = vunpack.c.l.b16 %v648
      %v2329 = vunpack.c.l.b16 %v649
      %v2330 = vunpack.c.l.b16 %v650
      %v2331 = vunpack.c.l.b16 %v651
      %v2332 = vunpack.c.l.b16 %v652
      %v2333 = vunpack.c.l.b16 %v653
      %v2334 = vunpack.c.l.b16 %v654
      %v2335 = vunpack.c.l.b16 %v655
      %v2336 = vunpack.c.l.b16 %v656
      %v2337 = vunpack.c.l.b16 %v657
      %v2338 = vunpack.c.l.b16 %v658
      %v2339 = vunpack.c.l.b16 %v659
      %v2340 = vunpack.c.l.b16 %v660
      %v2341 = vunpack.c.l.b16 %v661
      %v2342 = vunpack.c.l.b16 %v662
      %v2343 = vunpack.c.l.b16 %v663
      %v2344 = vunpack.c.l.b16 %v664
      %v2345 = vunpack.c.l.b16 %v665
      %v2346 = vunpack.c.l.b16 %v666
      %v2347 = vunpack.c.l.b16 %v667
      %v2348 = vunpack.c.l.b16 %v668
      %v2349 = vunpack.c.l.b16 %v669
      %v2350 = vunpack.c.l.b16 %v670
      %v2351 = vunpack.c.l.b16 %v671
      %v2352 = vunpack.c.l.b16 %v672
      %v2353 = vunpack.c.l.b16 %v673
      %v2354 = vunpack.c.l.b16 %v674
      %v2355 = vunpack.c.l.b16 %v675
      %v2356 = vunpack.c.l.b16 %v676
      %v2357 = vunpack.c.l.b16 %v677
      %v2358 = vunpack.c.l.b16 %v678
      %v2359 = vunpack.c.l.b16 %v679
      %v2360 = vunpack.c.l.b16 %v680
      %v2361 = vunpack.c.l.b16 %v681
      %v2362 = vunpack.c.l.b16 %v682
      %v2363 = vunpack.c.l.b16 %v683
      %v2364 = vunpack.c.l.b16 %v684
      %v2365 = vunpack.c.l.b16 %v685
      %v2366 = vunpack.c.l.b16 %v686
      %v2367 = vunpack.c.l.b16 %v687
      %v2368 = vunpack.c.l.b16 %v688
      %v2369 = vunpack.c.l.b16 %v689
      %v2370 = vunpack.c.l.b16 %v690
      %v2371 = vunpack.c.l.b16 %v691
      %v2372 = vunpack.c.l.b16 %v692
      %v2373 = vunpack.c.l.b16 %v693
      %v2374 = vunpack.c.l.b16 %v694
      %v2375 = vunpack.c.l.b16 %v695
      %v2376 = vunpack.c.l.b16 %v696
      %v2377 = vunpack.c.l.b16 %v697
      %v2378 = vunpack.c.l.b16 %v698
      %v2379 = vunpack.c.l.b16 %v699
      %v2380 = vunpack.c.l.b16 %v700
      %v2381 = vunpack.c.l.b16 %v701
      %v2382 = vunpack.c.l.b16 %v702
      %v2383 = vunpack.c.l.b16 %v703
      %v2384 = vunpack.c.l.b16 %v704
      %v2385 = vunpack.c.l.b16 %v705
      %v2386 = vunpack.c.l.b16 %v706
      %v2387 = vunpack.c.l.b16 %v707
      %v2388 = vunpack.c.l.b16 %v708
      %v2389 = vunpack.c.l.b16 %v709
      %v2390 = vunpack.c.l.b16 %v710
      %v2391 = vunpack.c.l.b16 %v711
      %v2392 = vunpack.c.l.b16 %v712
      %v2393 = vunpack.c.l.b16 %v713
      %v2394 = vunpack.c.l.b16 %v714
      %v2395 = vunpack.c.l.b16 %v715
      %v2396 = vunpack.c.l.b16 %v716
      %v2397 = vunpack.c.l.b16 %v717
      %v2398 = vunpack.c.l.b16 %v718
      %v2399 = vunpack.c.l.b16 %v719
      %v2400 = vunpack.c.l.b16 %v720
      %v2401 = vunpack.c.l.b16 %v721
      %v2402 = vunpack.c.l.b16 %v722
      %v2403 = vunpack.c.l.b16 %v723
      %v2404 = vunpack.c.l.b16 %v724
      %v2405 = vunpack.c.l.b16 %v725
      %v2406 = vunpack.c.l.b16 %v726
      %v2407 = vunpack.c.l.b16 %v727
      %v2408 = vunpack.c.l.b16 %v728
      %v2409 = vunpack.c.l.b16 %v729
      %v2410 = vunpack.c.l.b16 %v730
      %v2411 = vunpack.c.l.b16 %v731
      %v2412 = vunpack.c.l.b16 %v732
      %v2413 = vunpack.c.l.b16 %v733
      %v2414 = vunpack.c.l.b16 %v734
      %v2415 = vunpack.c.l.b16 %v735
      %v2416 = vunpack.c.l.b16 %v736
      %v2417 = vunpack.c.l.b16 %v737
      %v2418 = vunpack.c.l.b16 %v738
      %v2419 = vunpack.c.l.b16 %v739
      %v2420 = vunpack.c.l.b16 %v740
      %v2421 = vunpack.c.l.b16 %v741
      %v2422 = vunpack.c.l.b16 %v742
      %v2423 = vunpack.c.l.b16 %v743
      %v2424 = vunpack.c.l.b16 %v744
      %v2425 = vunpack.c.l.b16 %v745
      %v2426 = vunpack.c.l.b16 %v746
      %v2427 = vunpack.c.l.b16 %v747
      %v2428 = vunpack.c.l.b16 %v748
      %v2429 = vunpack.c.l.b16 %v749
      %v2430 = vunpack.c.l.b16 %v750
      %v2431 = vunpack.c.l.b16 %v751
      %v2432 = vunpack.c.l.b16 %v752
      %v2433 = vunpack.c.l.b16 %v753
      %v2434 = vunpack.c.l.b16 %v754
      %v2435 = vunpack.c.l.b16 %v755
      %v2436 = vunpack.c.l.b16 %v756
      %v2437 = vunpack.c.l.b16 %v757
      %v2438 = vunpack.c.l.b16 %v758
      %v2439 = vunpack.c.l.b16 %v759
      %v2440 = vunpack.c.l.b16 %v760
      %v2441 = vunpack.c.l.b16 %v761
      %v2442 = vunpack.c.l.b16 %v762
      %v2443 = vunpack.c.l.b16 %v763
      %v2444 = vunpack.c.l.b16 %v764
      %v2445 = vunpack.c.l.b16 %v765
      %v2446 = vunpack.c.l.b16 %v766
      %v2447 = vunpack.c.l.b16 %v767
      %v2448 = vunpack.c.l.b16 %v768
      %v2449 = vunpack.c.l.b16 %v769
      %v2450 = vunpack.c.l.b16 %v770
      %v2451 = vunpack.c.l.b16 %v771
      %v2452 = vunpack.c.l.b16 %v772
      %v2453 = vunpack.c.l.b16 %v773
      %v2454 = vunpack.c.l.b16 %v774
      %v2455 = vunpack.c.l.b16 %v775
      %v2456 = vunpack.c.l.b16 %v776
      %v2457 = vunpack.c.l.b16 %v777
      %v2458 = vunpack.c.l.b16 %v778
      %v2459 = vunpack.c.l.b16 %v779
      %v2460 = vunpack.c.l.b16 %v780
      %v2461 = vunpack.c.l.b16 %v781
      %v2462 = vunpack.c.l.b16 %v782
      %v2463 = vunpack.c.l.b16 %v783
      %v2464 = vunpack.c.l.b16 %v784
      %v2465 = vunpack.c.l.b16 %v785
      %v2466 = vunpack.c.l.b16 %v786
      %v2467 = vunpack.c.l.b16 %v787
      %v2468 = vunpack.c.l.b16 %v788
      %v2469 = vunpack.c.l.b16 %v789
      %v2470 = vunpack.c.l.b16 %v790
      %v2471 = vunpack.c.l.b16 %v791
      %v2472 = vunpack.c.l.b16 %v792
      %v2473 = vunpack.c.l.b16 %v793
      %v2474 = vunpack.c.l.b16 %v794
      %v2475 = vunpack.c.l.b16 %v795
      %v2476 = vunpack.c.l.b16 %v796
      %v2477 = vunpack.c.l.b16 %v797
      %v2478 = vunpack.c.l.b16 %v798
      %v2479 = vunpack.c.l.b16 %v799
      %v2480 = vunpack.c.l.b16 %v800
      %v2481 = vunpack.c.l.b16 %v801
      %v2482 = vunpack.c.l.b16 %v802
      %v2483 = vunpack.c.l.b16 %v803
      %v2484 = vunpack.c.l.b16 %v804
      %v2485 = vunpack.c.l.b16 %v805
      %v2486 = vunpack.c.l.b16 %v806
      %v2487 = vunpack.c.l.b16 %v807
      %v2488 = vunpack.c.l.b16 %v808
      %v2489 = vunpack.c.l.b16 %v809
      %v2490 = vunpack.c.l.b16 %v810
      %v2491 = vunpack.c.l.b16 %v811
      %v2492 = vunpack.c.l.b16 %v812
      %v2493 = vunpack.c.l.b16 %v813
      %v2494 = vunpack.c.l.b16 %v814
      %v2495 = vunpack.c.l.b16 %v815
      %v2496 = vunpack.c.l.b16 %v816
      %v2497 = vunpack.c.l.b16 %v817
      %v2498 = vunpack.c.l.b16 %v818
      %v2499 = vunpack.c.l.b16 %v819
      %v2500 = vunpack.c.l.b16 %v820
      %v2501 = vunpack.c.l.b16 %v821
      %v2502 = vunpack.c.l.b16 %v822
      %v2503 = vunpack.c.l.b16 %v823
      %v2504 = vunpack.c.l.b16 %v824
      %v2505 = vunpack.c.l.b16 %v825
      %v2506 = vunpack.c.l.b16 %v826
      %v2507 = vunpack.c.l.b16 %v827
      %v2508 = vunpack.c.l.b16 %v828
      %v2509 = vunpack.c.l.b16 %v829
      %v2510 = vunpack.c.l.b16 %v830
      %v2511 = vunpack.c.l.b16 %v831
      %v2512 = vunpack.c.l.b16 %v832
      %v2513 = vunpack.c.l.b16 %v833
      %v2514 = vunpack.c.l.b16 %v834
      %v2515 = vunpack.c.l.b16 %v835
      %v2516 = vunpack.c.l.b16 %v836
      %v2517 = vunpack.c.l.b16 %v837
      %v2518 = vunpack.c.l.b16 %v838
      %v2519 = vunpack.c.l.b16 %v839
      %v2520 = vunpack.c.l.b16 %v840
      %v2521 = vunpack.c.l.b16 %v841
      %v2522 = vunpack.c.l.b16 %v842
      %v2523 = vunpack.c.l.b16 %v843
      %v2524 = vunpack.c.l.b16 %v844
      %v2525 = vunpack.c.l.b16 %v845
      %v2526 = vunpack.c.l.b16 %v846
      %v2527 = vunpack.c.l.b16 %v847
      %v2528 = vunpack.c.l.b16 %v848
      %v2529 = vunpack.c.l.b16 %v849
      %v2530 = vunpack.c.l.b16 %v850
      %v2531 = vunpack.c.l.b16 %v851
      %v2532 = vunpack.c.l.b16 %v852
      %v2533 = vunpack.c.l.b16 %v853
      %v2534 = vunpack.c.l.b16 %v854
      %v2535 = vunpack.c.l.b16 %v855
      %v2536 = vunpack.c.l.b16 %v856
      %v2537 = vunpack.c.l.b16 %v857
      %v2538 = vunpack.c.l.b16 %v858
      %v2539 = vunpack.c.l.b16 %v859
      %v2540 = vunpack.c.l.b16 %v860
      %v2541 = vunpack.c.l.b16 %v861
      %v2542 = vunpack.c.l.b16 %v862
      %v2543 = vunpack.c.l.b16 %v863
      %v2544 = vunpack.c.l.b16 %v864
      %v2545 = vunpack.c.l.b16 %v865
      %v2546 = vunpack.c.l.b16 %v866
      %v2547 = vunpack.c.l.b16 %v867
      %v2548 = vunpack.c.l.b16 %v868
      %v2549 = vunpack.c.l.b16 %v869
      %v2550 = vunpack.c.l.b16 %v870
      %v2551 = vunpack.c.l.b16 %v871
      %v2552 = vunpack.c.l.b16 %v872
      %v2553 = vunpack.c.l.b16 %v873
      %v2554 = vunpack.c.l.b16 %v874
      %v2555 = vunpack.c.l.b16 %v875
      %v2556 = vunpack.c.l.b16 %v876
      %v2557 = vunpack.c.l.b16 %v877
      %v2558 = vunpack.c.l.b16 %v878
      %v2559 = vunpack.c.l.b16 %v879
      %v2560 = vunpack.c.l.b16 %v880
      %v2561 = vunpack.c.l.b16 %v881
      %v2562 = vunpack.c.l.b16 %v882
      %v2563 = vunpack.c.l.b16 %v883
      %v2564 = vunpack.c.l.b16 %v884
      %v2565 = vunpack.c.l.b16 %v885
      %v2566 = vunpack.c.l.b16 %v886
      %v2567 = vunpack.c.l.b16 %v887
      %v2568 = vunpack.c.l.b16 %v888
      %v2569 = vunpack.c.l.b16 %v889
      %v2570 = vunpack.c.l.b16 %v890
      %v2571 = vunpack.c.l.b16 %v891
      %v2572 = vunpack.c.l.b16 %v892
      %v2573 = vunpack.c.l.b16 %v893
      %v2574 = vunpack.c.l.b16 %v894
      %v2575 = vunpack.c.l.b16 %v895
      %v2576 = vunpack.c.l.b16 %v896
      %v2577 = vunpack.c.l.b16 %v897
      %v2578 = vunpack.c.l.b16 %v898
      %v2579 = vunpack.c.l.b16 %v899
      %v2580 = vunpack.c.l.b16 %v900
      %v2581 = vunpack.c.l.b16 %v901
      %v2582 = vunpack.c.l.b16 %v902
      %v2583 = vunpack.c.l.b16 %v903
      %v2584 = vunpack.c.l.b16 %v904
      %v2585 = vunpack.c.l.b16 %v905
      %v2586 = vunpack.c.l.b16 %v906
      %v2587 = vunpack.c.l.b16 %v907
      %v2588 = vunpack.c.l.b16 %v908
      %v2589 = vunpack.c.l.b16 %v909
      %v2590 = vunpack.c.l.b16 %v910
      %v2591 = vunpack.c.l.b16 %v911
      %v2592 = vunpack.c.l.b16 %v912
      %v2593 = vunpack.c.l.b16 %v913
      %v2594 = vunpack.c.l.b16 %v914
      %v2595 = vunpack.c.l.b16 %v915
      %v2596 = vunpack.c.l.b16 %v916
      %v2597 = vunpack.c.l.b16 %v917
      %v2598 = vunpack.c.l.b16 %v918
      %v2599 = vunpack.c.l.b16 %v919
      %v2600 = vunpack.c.l.b16 %v920
      %v2601 = vunpack.c.l.b16 %v921
      %v2602 = vunpack.c.l.b16 %v922
      %v2603 = vunpack.c.l.b16 %v923
      %v2604 = vunpack.c.l.b16 %v924
      %v2605 = vunpack.c.l.b16 %v925
      %v2606 = vunpack.c.l.b16 %v926
      %v2607 = vunpack.c.l.b16 %v927
      %v2608 = vunpack.c.l.b16 %v928
      %v2609 = vunpack.c.l.b16 %v929
      %v2610 = vunpack.c.l.b16 %v930
      %v2611 = vunpack.c.l.b16 %v931
      %v2612 = vunpack.c.l.b16 %v932
      %v2613 = vunpack.c.l.b16 %v933
      %v2614 = vunpack.c.l.b16 %v934
      %v2615 = vunpack.c.l.b16 %v935
      %v2616 = vunpack.c.l.b16 %v936
      %v2617 = vunpack.c.l.b16 %v937
      %v2618 = vunpack.c.l.b16 %v938
      %v2619 = vunpack.c.l.b16 %v939
      %v2620 = vunpack.c.l.b16 %v940
      %v2621 = vunpack.c.l.b16 %v941
      %v2622 = vunpack.c.l.b16 %v942
      %v2623 = vunpack.c.l.b16 %v943
      %v2624 = vunpack.c.l.b16 %v944
      %v2625 = vunpack.c.l.b16 %v945
      %v2626 = vunpack.c.l.b16 %v946
      %v2627 = vunpack.c.l.b16 %v947
      %v2628 = vunpack.c.l.b16 %v948
      %v2629 = vunpack.c.l.b16 %v949
      %v2630 = vunpack.c.l.b16 %v950
      %v2631 = vunpack.c.l.b16 %v951
      %v2632 = vunpack.c.l.b16 %v952
      %v2633 = vunpack.c.l.b16 %v953
      %v2634 = vunpack.c.l.b16 %v954
      %v2635 = vunpack.c.l.b16 %v955
      %v2636 = vunpack.c.l.b16 %v956
      %v2637 = vunpack.c.l.b16 %v957
      %v2638 = vunpack.c.l.b16 %v958
      %v2639 = vunpack.c.l.b16 %v959
      %v2640 = vunpack.c.l.b16 %v960
      %v2641 = vunpack.c.l.b16 %v961
      %v2642 = vunpack.c.l.b16 %v962
      %v2643 = vunpack.c.l.b16 %v963
      %v2644 = vunpack.c.l.b16 %v964
      %v2645 = vunpack.c.l.b16 %v965
      %v2646 = vunpack.c.l.b16 %v966
      %v2647 = vunpack.c.l.b16 %v967
      %v2648 = vunpack.c.l.b16 %v968
      %v2649 = vunpack.c.l.b16 %v969
      %v2650 = vunpack.c.l.b16 %v970
      %v2651 = vunpack.c.l.b16 %v971
      %v2652 = vunpack.c.l.b16 %v972
      %v2653 = vunpack.c.l.b16 %v973
      %v2654 = vunpack.c.l.b16 %v974
      %v2655 = vunpack.c.l.b16 %v975
      %v2656 = vunpack.c.l.b16 %v976
      %v2657 = vunpack.c.l.b16 %v977
      %v2658 = vunpack.c.l.b16 %v978
      %v2659 = vunpack.c.l.b16 %v979
      %v2660 = vunpack.c.l.b16 %v980
      %v2661 = vunpack.c.l.b16 %v981
      %v2662 = vunpack.c.l.b16 %v982
      %v2663 = vunpack.c.l.b16 %v983
      %v2664 = vunpack.c.l.b16 %v984
      %v2665 = vunpack.c.l.b16 %v985
      %v2666 = vunpack.c.l.b16 %v986
      %v2667 = vunpack.c.l.b16 %v987
      %v2668 = vunpack.c.l.b16 %v988
      %v2669 = vunpack.c.l.b16 %v989
      %v2670 = vunpack.c.l.b16 %v990
      %v2671 = vunpack.c.l.b16 %v991
      %v2672 = vunpack.c.l.b16 %v992
      %v2673 = vunpack.c.l.b16 %v993
      %v2674 = vunpack.c.l.b16 %v994
      %v2675 = vunpack.c.l.b16 %v995
      %v2676 = vunpack.c.l.b16 %v996
      %v2677 = vunpack.c.l.b16 %v997
      %v2678 = vunpack.c.l.b16 %v998
      %v2679 = vunpack.c.l.b16 %v999
      %v2680 = vunpack.c.l.b16 %v1000
      %v2681 = vunpack.c.l.b16 %v1001
      %v2682 = vunpack.c.l.b16 %v1002
      %v2683 = vunpack.c.l.b16 %v1003
      %v2684 = vunpack.c.l.b16 %v1004
      %v2685 = vunpack.c.l.b16 %v1005
      %v2686 = vunpack.c.l.b16 %v1006
      %v2687 = vunpack.c.l.b16 %v1007
      %v2688 = vunpack.c.l.b16 %v1008
      %v2689 = vunpack.c.l.b16 %v1009
      %v2690 = vunpack.c.l.b16 %v1010
      %v2691 = vunpack.c.l.b16 %v1011
      %v2692 = vunpack.c.l.b16 %v1012
      %v2693 = vunpack.c.l.b16 %v1013
      %v2694 = vunpack.c.l.b16 %v1014
      %v2695 = vunpack.c.l.b16 %v1015
      %v2696 = vunpack.c.l.b16 %v1016
      %v2697 = vunpack.c.l.b16 %v1017
      %v2698 = vunpack.c.l.b16 %v1018
      %v2699 = vunpack.c.l.b16 %v1019
      %v2700 = vunpack.c.l.b16 %v1020
      %v2701 = vunpack.c.l.b16 %v1021
      %v2702 = vunpack.c.l.b16 %v1022
      %v2703 = vunpack.c.l.b16 %v1023
      %v2704 = vunpack.c.l.b16 %v1024
      %v2705 = vunpack.c.l.b16 %v1025
      %v2706 = vunpack.c.l.b16 %v1026
      %v2707 = vunpack.c.l.b16 %v1027
      %v2708 = vunpack.c.l.b16 %v1028
      %v2709 = vunpack.c.l.b16 %v1029
      %v2710 = vunpack.c.l.b16 %v1030
      %v2711 = vunpack.c.l.b16 %v1031
      %v2712 = vunpack.c.l.b16 %v1032
      %v2713 = vunpack.c.l.b16 %v1033
      %v2714 = vunpack.c.l.b16 %v1034
      %v2715 = vunpack.c.l.b16 %v1035
      %v2716 = vpack.c.b16 %v1933, %v1932
      %v2717 = vpack.c.b16 %v1935, %v1934
      %v2718 = vpack.c.b16 %v1937, %v1936
      %v2719 = vpack.c.b16 %v1939, %v1938
      %v2720 = vpack.c.b16 %v1941, %v1940
      %v2721 = vpack.c.b16 %v1943, %v1942
      %v2722 = vpack.c.b16 %v1945, %v1944
      %v2723 = vpack.c.b16 %v1947, %v1946
      %v2724 = vpack.c.b16 %v1949, %v1948
      %v2725 = vpack.c.b16 %v1951, %v1950
      %v2726 = vpack.c.b16 %v1953, %v1952
      %v2727 = vpack.c.b16 %v1955, %v1954
      %v2728 = vpack.c.b16 %v1957, %v1956
      %v2729 = vpack.c.b16 %v1959, %v1958
      %v2730 = vpack.c.b16 %v1961, %v1960
      %v2731 = vpack.c.b16 %v1963, %v1962
      %v2732 = vpack.c.b16 %v1965, %v1964
      %v2733 = vpack.c.b16 %v1967, %v1966
      %v2734 = vpack.c.b16 %v1969, %v1968
      %v2735 = vpack.c.b16 %v1971, %v1970
      %v2736 = vpack.c.b16 %v1973, %v1972
      %v2737 = vpack.c.b16 %v1975, %v1974
      %v2738 = vpack.c.b16 %v1977, %v1976
      %v2739 = vpack.c.b16 %v1979, %v1978
      %v2740 = vpack.c.b16 %v1981, %v1980
      %v2741 = vpack.c.b16 %v1983, %v1982
      %v2742 = vpack.c.b16 %v1985, %v1984
      %v2743 = vpack.c.b16 %v1987, %v1986
      %v2744 = vpack.c.b16 %v1989, %v1988
      %v2745 = vpack.c.b16 %v1991, %v1990
      %v2746 = vpack.c.b16 %v1993, %v1992
      %v2747 = vpack.c.b16 %v1995, %v1994
      %v2748 = vpack.c.b16 %v1997, %v1996
      %v2749 = vpack.c.b16 %v1999, %v1998
      %v2750 = vpack.c.b16 %v2001, %v2000
      %v2751 = vpack.c.b16 %v2003, %v2002
      %v2752 = vpack.c.b16 %v2005, %v2004
      %v2753 = vpack.c.b16 %v2007, %v2006
      %v2754 = vpack.c.b16 %v2009, %v2008
      %v2755 = vpack.c.b16 %v2011, %v2010
      %v2756 = vpack.c.b16 %v2013, %v2012
      %v2757 = vpack.c.b16 %v2015, %v2014
      %v2758 = vpack.c.b16 %v2017, %v2016
      %v2759 = vpack.c.b16 %v2019, %v2018
      %v2760 = vpack.c.b16 %v2021, %v2020
      %v2761 = vpack.c.b16 %v2023, %v2022
      %v2762 = vpack.c.b16 %v2025, %v2024
      %v2763 = vpack.c.b16 %v2027, %v2026
      %v2764 = vpack.c.b16 %v2029, %v2028
      %v2765 = vpack.c.b16 %v2031, %v2030
      %v2766 = vpack.c.b16 %v2033, %v2032
      %v2767 = vpack.c.b16 %v2035, %v2034
      %v2768 = vpack.c.b16 %v2037, %v2036
      %v2769 = vpack.c.b16 %v2039, %v2038
      %v2770 = vpack.c.b16 %v2041, %v2040
      %v2771 = vpack.c.b16 %v2043, %v2042
      %v2772 = vpack.c.b16 %v2045, %v2044
      %v2773 = vpack.c.b16 %v2047, %v2046
      %v2774 = vpack.c.b16 %v2049, %v2048
      %v2775 = vpack.c.b16 %v2051, %v2050
      %v2776 = vpack.c.b16 %v2053, %v2052
      %v2777 = vpack.c.b16 %v2055, %v2054
      %v2778 = vpack.c.b16 %v2057, %v2056
      %v2779 = vpack.c.b16 %v2059, %v2058
      %v2780 = vpack.c.b16 %v2061, %v2060
      %v2781 = vpack.c.b16 %v2063, %v2062
      %v2782 = vpack.c.b16 %v2065, %v2064
      %v2783 = vpack.c.b16 %v2067, %v2066
      %v2784 = vpack.c.b16 %v2069, %v2068
      %v2785 = vpack.c.b16 %v2071, %v2070
      %v2786 = vpack.c.b16 %v2073, %v2072
      %v2787 = vpack.c.b16 %v2075, %v2074
      %v2788 = vpack.c.b16 %v2077, %v2076
      %v2789 = vpack.c.b16 %v2079, %v2078
      %v2790 = vpack.c.b16 %v2081, %v2080
      %v2791 = vpack.c.b16 %v2083, %v2082
      %v2792 = vpack.c.b16 %v2085, %v2084
      %v2793 = vpack.c.b16 %v2087, %v2086
      %v2794 = vpack.c.b16 %v2089, %v2088
      %v2795 = vpack.c.b16 %v2091, %v2090
      %v2796 = vpack.c.b16 %v2093, %v2092
      %v2797 = vpack.c.b16 %v2095, %v2094
      %v2798 = vpack.c.b16 %v2097, %v2096
      %v2799 = vpack.c.b16 %v2099, %v2098
      %v2800 = vpack.c.b16 %v2101, %v2100
      %v2801 = vpack.c.b16 %v2103, %v2102
      %v2802 = vpack.c.b16 %v2105, %v2104
      %v2803 = vpack.c.b16 %v2107, %v2106
      %v2804 = vpack.c.b16 %v2109, %v2108
      %v2805 = vpack.c.b16 %v2111, %v2110
      %v2806 = vpack.c.b16 %v2113, %v2112
      %v2807 = vpack.c.b16 %v2115, %v2114
      %v2808 = vpack.c.b16 %v2117, %v2116
      %v2809 = vpack.c.b16 %v2119, %v2118
      %v2810 = vpack.c.b16 %v2121, %v2120
      %v2811 = vpack.c.b16 %v2123, %v2122
      %v2812 = vpack.c.b16 %v2125, %v2124
      %v2813 = vpack.c.b16 %v2127, %v2126
      %v2814 = vpack.c.b16 %v2129, %v2128
      %v2815 = vpack.c.b16 %v2131, %v2130
      %v2816 = vpack.c.b16 %v2133, %v2132
      %v2817 = vpack.c.b16 %v2135, %v2134
      %v2818 = vpack.c.b16 %v2137, %v2136
      %v2819 = vpack.c.b16 %v2139, %v2138
      %v2820 = vpack.c.b16 %v2141, %v2140
      %v2821 = vpack.c.b16 %v2143, %v2142
      %v2822 = vpack.c.b16 %v2145, %v2144
      %v2823 = vpack.c.b16 %v2147, %v2146
      %v2824 = vpack.c.b16 %v2149, %v2148
      %v2825 = vpack.c.b16 %v2151, %v2150
      %v2826 = vpack.c.b16 %v2153, %v2152
      %v2827 = vpack.c.b16 %v2155, %v2154
      %v2828 = vpack.c.b16 %v2157, %v2156
      %v2829 = vpack.c.b16 %v2159, %v2158
      %v2830 = vpack.c.b16 %v2161, %v2160
      %v2831 = vpack.c.b16 %v2163, %v2162
      %v2832 = vpack.c.b16 %v2165, %v2164
      %v2833 = vpack.c.b16 %v2167, %v2166
      %v2834 = vpack.c.b16 %v2169, %v2168
      %v2835 = vpack.c.b16 %v2171, %v2170
      %v2836 = vpack.c.b16 %v2173, %v2172
      %v2837 = vpack.c.b16 %v2175, %v2174
      %v2838 = vpack.c.b16 %v2177, %v2176
      %v2839 = vpack.c.b16 %v2179, %v2178
      %v2840 = vpack.c.b16 %v2181, %v2180
      %v2841 = vpack.c.b16 %v2183, %v2182
      %v2842 = vpack.c.b16 %v2185, %v2184
      %v2843 = vpack.c.b16 %v2187, %v2186
      %v2844 = vpack.c.b16 %v2189, %v2188
      %v2845 = vpack.c.b16 %v2191, %v2190
      %v2846 = vpack.c.b16 %v2193, %v2192
      %v2847 = vpack.c.b16 %v2195, %v2194
      %v2848 = vpack.c.b16 %v2197, %v2196
      %v2849 = vpack.c.b16 %v2199, %v2198
      %v2850 = vpack.c.b16 %v2201, %v2200
      %v2851 = vpack.c.b16 %v2203, %v2202
      %v2852 = vpack.c.b16 %v2205, %v2204
      %v2853 = vpack.c.b16 %v2207, %v2206
      %v2854 = vpack.c.b16 %v2209, %v2208
      %v2855 = vpack.c.b16 %v2211, %v2210
      %v2856 = vpack.c.b16 %v2213, %v2212
      %v2857 = vpack.c.b16 %v2215, %v2214
      %v2858 = vpack.c.b16 %v2217, %v2216
      %v2859 = vpack.c.b16 %v2219, %v2218
      %v2860 = vpack.c.b16 %v2221, %v2220
      %v2861 = vpack.c.b16 %v2223, %v2222
      %v2862 = vpack.c.b16 %v2225, %v2224
      %v2863 = vpack.c.b16 %v2227, %v2226
      %v2864 = vpack.c.b16 %v2229, %v2228
      %v2865 = vpack.c.b16 %v2231, %v2230
      %v2866 = vpack.c.b16 %v2233, %v2232
      %v2867 = vpack.c.b16 %v2235, %v2234
      %v2868 = vpack.c.b16 %v2237, %v2236
      %v2869 = vpack.c.b16 %v2239, %v2238
      %v2870 = vpack.c.b16 %v2241, %v2240
      %v2871 = vpack.c.b16 %v2243, %v2242
      %v2872 = vpack.c.b16 %v2245, %v2244
      %v2873 = vpack.c.b16 %v2247, %v2246
      %v2874 = vpack.c.b16 %v2249, %v2248
      %v2875 = vpack.c.b16 %v2251, %v2250
      %v2876 = vpack.c.b16 %v2253, %v2252
      %v2877 = vpack.c.b16 %v2255, %v2254
      %v2878 = vpack.c.b16 %v2257, %v2256
      %v2879 = vpack.c.b16 %v2259, %v2258
      %v2880 = vpack.c.b16 %v2261, %v2260
      %v2881 = vpack.c.b16 %v2263, %v2262
      %v2882 = vpack.c.b16 %v2265, %v2264
      %v2883 = vpack.c.b16 %v2267, %v2266
      %v2884 = vpack.c.b16 %v2269, %v2268
      %v2885 = vpack.c.b16 %v2271, %v2270
      %v2886 = vpack.c.b16 %v2273, %v2272
      %v2887 = vpack.c.b16 %v2275, %v2274
      %v2888 = vpack.c.b16 %v2277, %v2276
      %v2889 = vpack.c.b16 %v2279, %v2278
      %v2890 = vpack.c.b16 %v2281, %v2280
      %v2891 = vpack.c.b16 %v2283, %v2282
      %v2892 = vpack.c.b16 %v2285, %v2284
      %v2893 = vpack.c.b16 %v2287, %v2286
      %v2894 = vpack.c.b16 %v2289, %v2288
      %v2895 = vpack.c.b16 %v2291, %v2290
      %v2896 = vpack.c.b16 %v2293, %v2292
      %v2897 = vpack.c.b16 %v2295, %v2294
      %v2898 = vpack.c.b16 %v2297, %v2296
      %v2899 = vpack.c.b16 %v2299, %v2298
      %v2900 = vpack.c.b16 %v2301, %v2300
      %v2901 = vpack.c.b16 %v2303, %v2302
      %v2902 = vpack.c.b16 %v2305, %v2304
      %v2903 = vpack.c.b16 %v2307, %v2306
      %v2904 = vpack.c.b16 %v2309, %v2308
      %v2905 = vpack.c.b16 %v2311, %v2310
      %v2906 = vpack.c.b16 %v2313, %v2312
      %v2907 = vpack.c.b16 %v2315, %v2314
      %v2908 = vpack.c.b16 %v2317, %v2316
      %v2909 = vpack.c.b16 %v2319, %v2318
      %v2910 = vpack.c.b16 %v2321, %v2320
      %v2911 = vpack.c.b16 %v2323, %v2322
      %v2912 = vpack.c.b16 %v2325, %v2324
      %v2913 = vpack.c.b16 %v2327, %v2326
      %v2914 = vpack.c.b16 %v2329, %v2328
      %v2915 = vpack.c.b16 %v2331, %v2330
      %v2916 = vpack.c.b16 %v2333, %v2332
      %v2917 = vpack.c.b16 %v2335, %v2334
      %v2918 = vpack.c.b16 %v2337, %v2336
      %v2919 = vpack.c.b16 %v2339, %v2338
      %v2920 = vpack.c.b16 %v2341, %v2340
      %v2921 = vpack.c.b16 %v2343, %v2342
      %v2922 = vpack.c.b16 %v2345, %v2344
      %v2923 = vpack.c.b16 %v2347, %v2346
      %v2924 = vpack.c.b16 %v2349, %v2348
      %v2925 = vpack.c.b16 %v2351, %v2350
      %v2926 = vpack.c.b16 %v2353, %v2352
      %v2927 = vpack.c.b16 %v2355, %v2354
      %v2928 = vpack.c.b16 %v2357, %v2356
      %v2929 = vpack.c.b16 %v2359, %v2358
      %v2930 = vpack.c.b16 %v2361, %v2360
      %v2931 = vpack.c.b16 %v2363, %v2362
      %v2932 = vpack.c.b16 %v2365, %v2364
      %v2933 = vpack.c.b16 %v2367, %v2366
      %v2934 = vpack.c.b16 %v2369, %v2368
      %v2935 = vpack.c.b16 %v2371, %v2370
      %v2936 = vpack.c.b16 %v2373, %v2372
      %v2937 = vpack.c.b16 %v2375, %v2374
      %v2938 = vpack.c.b16 %v2377, %v2376
      %v2939 = vpack.c.b16 %v2379, %v2378
      %v2940 = vpack.c.b16 %v2381, %v2380
      %v2941 = vpack.c.b16 %v2383, %v2382
      %v2942 = vpack.c.b16 %v2385, %v2384
      %v2943 = vpack.c.b16 %v2387, %v2386
      %v2944 = vpack.c.b16 %v2389, %v2388
      %v2945 = vpack.c.b16 %v2391, %v2390
      %v2946 = vpack.c.b16 %v2393, %v2392
      %v2947 = vpack.c.b16 %v2395, %v2394
      %v2948 = vpack.c.b16 %v2397, %v2396
      %v2949 = vpack.c.b16 %v2399, %v2398
      %v2950 = vpack.c.b16 %v2401, %v2400
      %v2951 = vpack.c.b16 %v2403, %v2402
      %v2952 = vpack.c.b16 %v2405, %v2404
      %v2953 = vpack.c.b16 %v2407, %v2406
      %v2954 = vpack.c.b16 %v2409, %v2408
      %v2955 = vpack.c.b16 %v2411, %v2410
      %v2956 = vpack.c.b16 %v2413, %v2412
      %v2957 = vpack.c.b16 %v2415, %v2414
      %v2958 = vpack.c.b16 %v2417, %v2416
      %v2959 = vpack.c.b16 %v2419, %v2418
      %v2960 = vpack.c.b16 %v2421, %v2420
      %v2961 = vpack.c.b16 %v2423, %v2422
      %v2962 = vpack.c.b16 %v2425, %v2424
      %v2963 = vpack.c.b16 %v2427, %v2426
      %v2964 = vpack.c.b16 %v2429, %v2428
      %v2965 = vpack.c.b16 %v2431, %v2430
      %v2966 = vpack.c.b16 %v2433, %v2432
      %v2967 = vpack.c.b16 %v2435, %v2434
      %v2968 = vpack.c.b16 %v2437, %v2436
      %v2969 = vpack.c.b16 %v2439, %v2438
      %v2970 = vpack.c.b16 %v2441, %v2440
      %v2971 = vpack.c.b16 %v2443, %v2442
      %v2972 = vpack.c.b16 %v2445, %v2444
      %v2973 = vpack.c.b16 %v2447, %v2446
      %v2974 = vpack.c.b16 %v2449, %v2448
      %v2975 = vpack.c.b16 %v2451, %v2450
      %v2976 = vpack.c.b16 %v2453, %v2452
      %v2977 = vpack.c.b16 %v2455, %v2454
      %v2978 = vpack.c.b16 %v2457, %v2456
      %v2979 = vpack.c.b16 %v2459, %v2458
      %v2980 = vpack.c.b16 %v2461, %v2460
      %v2981 = vpack.c.b16 %v2463, %v2462
      %v2982 = vpack.c.b16 %v2465, %v2464
      %v2983 = vpack.c.b16 %v2467, %v2466
      %v2984 = vpack.c.b16 %v2469, %v2468
      %v2985 = vpack.c.b16 %v2471, %v2470
      %v2986 = vpack.c.b16 %v2473, %v2472
      %v2987 = vpack.c.b16 %v2475, %v2474
      %v2988 = vpack.c.b16 %v2477, %v2476
      %v2989 = vpack.c.b16 %v2479, %v2478
      %v2990 = vpack.c.b16 %v2481, %v2480
      %v2991 = vpack.c.b16 %v2483, %v2482
      %v2992 = vpack.c.b16 %v2485, %v2484
      %v2993 = vpack.c.b16 %v2487, %v2486
      %v2994 = vpack.c.b16 %v2489, %v2488
      %v2995 = vpack.c.b16 %v2491, %v2490
      %v2996 = vpack.c.b16 %v2493, %v2492
      %v2997 = vpack.c.b16 %v2495, %v2494
      %v2998 = vpack.c.b16 %v2497, %v2496
      %v2999 = vpack.c.b16 %v2499, %v2498
      %v3000 = vpack.c.b16 %v2501, %v2500
      %v3001 = vpack.c.b16 %v2503, %v2502
      %v3002 = vpack.c.b16 %v2505, %v2504
      %v3003 = vpack.c.b16 %v2507, %v2506
      %v3004 = vpack.c.b16 %v2509, %v2508
      %v3005 = vpack.c.b16 %v2511, %v2510
      %v3006 = vpack.c.b16 %v2513, %v2512
      %v3007 = vpack.c.b16 %v2515, %v2514
      %v3008 = vpack.c.b16 %v2517, %v2516
      %v3009 = vpack.c.b16 %v2519, %v2518
      %v3010 = vpack.c.b16 %v2521, %v2520
      %v3011 = vpack.c.b16 %v2523, %v2522
      %v3012 = vpack.c.b16 %v2525, %v2524
      %v3013 = vpack.c.b16 %v2527, %v2526
      %v3014 = vpack.c.b16 %v2529, %v2528
      %v3015 = vpack.c.b16 %v2531, %v2530
      %v3016 = vpack.c.b16 %v2533, %v2532
      %v3017 = vpack.c.b16 %v2535, %v2534
      %v3018 = vpack.c.b16 %v2537, %v2536
      %v3019 = vpack.c.b16 %v2539, %v2538
      %v3020 = vpack.c.b16 %v2541, %v2540
      %v3021 = vpack.c.b16 %v2543, %v2542
      %v3022 = vpack.c.b16 %v2545, %v2544
      %v3023 = vpack.c.b16 %v2547, %v2546
      %v3024 = vpack.c.b16 %v2549, %v2548
      %v3025 = vpack.c.b16 %v2551, %v2550
      %v3026 = vpack.c.b16 %v2553, %v2552
      %v3027 = vpack.c.b16 %v2555, %v2554
      %v3028 = vpack.c.b16 %v2557, %v2556
      %v3029 = vpack.c.b16 %v2559, %v2558
      %v3030 = vpack.c.b16 %v2561, %v2560
      %v3031 = vpack.c.b16 %v2563, %v2562
      %v3032 = vpack.c.b16 %v2565, %v2564
      %v3033 = vpack.c.b16 %v2567, %v2566
      %v3034 = vpack.c.b16 %v2569, %v2568
      %v3035 = vpack.c.b16 %v2571, %v2570
      %v3036 = vpack.c.b16 %v2573, %v2572
      %v3037 = vpack.c.b16 %v2575, %v2574
      %v3038 = vpack.c.b16 %v2577, %v2576
      %v3039 = vpack.c.b16 %v2579, %v2578
      %v3040 = vpack.c.b16 %v2581, %v2580
      %v3041 = vpack.c.b16 %v2583, %v2582
      %v3042 = vpack.c.b16 %v2585, %v2584
      %v3043 = vpack.c.b16 %v2587, %v2586
      %v3044 = vpack.c.b16 %v2589, %v2588
      %v3045 = vpack.c.b16 %v2591, %v2590
      %v3046 = vpack.c.b16 %v2593, %v2592
      %v3047 = vpack.c.b16 %v2595, %v2594
      %v3048 = vpack.c.b16 %v2597, %v2596
      %v3049 = vpack.c.b16 %v2599, %v2598
      %v3050 = vpack.c.b16 %v2601, %v2600
      %v3051 = vpack.c.b16 %v2603, %v2602
      %v3052 = vpack.c.b16 %v2605, %v2604
      %v3053 = vpack.c.b16 %v2607, %v2606
      %v3054 = vpack.c.b16 %v2609, %v2608
      %v3055 = vpack.c.b16 %v2611, %v2610
      %v3056 = vpack.c.b16 %v2613, %v2612
      %v3057 = vpack.c.b16 %v2615, %v2614
      %v3058 = vpack.c.b16 %v2617, %v2616
      %v3059 = vpack.c.b16 %v2619, %v2618
      %v3060 = vpack.c.b16 %v2621, %v2620
      %v3061 = vpack.c.b16 %v2623, %v2622
      %v3062 = vpack.c.b16 %v2625, %v2624
      %v3063 = vpack.c.b16 %v2627, %v2626
      %v3064 = vpack.c.b16 %v2629, %v2628
      %v3065 = vpack.c.b16 %v2631, %v2630
      %v3066 = vpack.c.b16 %v2633, %v2632
      %v3067 = vpack.c.b16 %v2635, %v2634
      %v3068 = vpack.c.b16 %v2637, %v2636
      %v3069 = vpack.c.b16 %v2639, %v2638
      %v3070 = vpack.c.b16 %v2641, %v2640
      %v3071 = vpack.c.b16 %v2643, %v2642
      %v3072 = vpack.c.b16 %v2645, %v2644
      %v3073 = vpack.c.b16 %v2647, %v2646
      %v3074 = vpack.c.b16 %v2649, %v2648
      %v3075 = vpack.c.b16 %v2651, %v2650
      %v3076 = vpack.c.b16 %v2653, %v2652
      %v3077 = vpack.c.b16 %v2655, %v2654
      %v3078 = vpack.c.b16 %v2657, %v2656
      %v3079 = vpack.c.b16 %v2659, %v2658
      %v3080 = vpack.c.b16 %v2661, %v2660
      %v3081 = vpack.c.b16 %v2663, %v2662
      %v3082 = vpack.c.b16 %v2665, %v2664
      %v3083 = vpack.c.b16 %v2667, %v2666
      %v3084 = vpack.c.b16 %v2669, %v2668
      %v3085 = vpack.c.b16 %v2671, %v2670
      %v3086 = vpack.c.b16 %v2673, %v2672
      %v3087 = vpack.c.b16 %v2675, %v2674
      %v3088 = vpack.c.b16 %v2677, %v2676
      %v3089 = vpack.c.b16 %v2679, %v2678
      %v3090 = vpack.c.b16 %v2681, %v2680
      %v3091 = vpack.c.b16 %v2683, %v2682
      %v3092 = vpack.c.b16 %v2685, %v2684
      %v3093 = vpack.c.b16 %v2687, %v2686
      %v3094 = vpack.c.b16 %v2689, %v2688
      %v3095 = vpack.c.b16 %v2691, %v2690
      %v3096 = vpack.c.b16 %v2693, %v2692
      %v3097 = vpack.c.b16 %v2695, %v2694
      %v3098 = vpack.c.b16 %v2697, %v2696
      %v3099 = vpack.c.b16 %v2699, %v2698
      %v3100 = vpack.c.b16 %v2701, %v2700
      %v3101 = vpack.c.b16 %v2703, %v2702
      %v3102 = vpack.c.b16 %v2705, %v2704
      %v3103 = vpack.c.b16 %v2707, %v2706
      %v3104 = vpack.c.b16 %v2709, %v2708
      %v3105 = vpack.c.b16 %v2711, %v2710
      %v3106 = vpack.c.b16 %v2713, %v2712
      %v3107 = vpack.c.b16 %v2715, %v2714
      %3500 = vmatpush.bf16.msra.mxu0 %v2723
      %3501 = vmatpush.bf16.msra.mxu0 %v2722
      %3502 = vmatpush.bf16.msra.mxu0 %v2721
      %3503 = vmatpush.bf16.msra.mxu0 %v2720
      %3504 = vmatpush.bf16.msra.mxu0 %v2719
      %3505 = vmatpush.bf16.msra.mxu0 %v2718
      %3506 = vmatpush.bf16.msra.mxu0 %v2717
      %3507 = vmatpush.bf16.msra.mxu0 %v2716
      %3508 = vmatmul.bf16.gmra.mxu0 %v1038
      %v3509 = vpop.f32.mrf.mxu0
      %v3510 = vadd.f32 0.0, %v3509
      %v3511 = vpop.f32.mrf.mxu0
      %3512 = vdwg.mxu0
      %3513 = vmatpush.bf16.msra.mxu0 %v2731
      %3514 = vmatpush.bf16.msra.mxu0 %v2730
      %3515 = vmatpush.bf16.msra.mxu0 %v2729
      %3516 = vmatpush.bf16.msra.mxu0 %v2728
      %3517 = vmatpush.bf16.msra.mxu0 %v2727
      %3518 = vmatpush.bf16.msra.mxu0 %v2726
      %3519 = vmatpush.bf16.msra.mxu0 %v2725
      %3520 = vmatpush.bf16.msra.mxu0 %v2724
      %3521 = vmatmul.bf16.gmra.mxu0 %v1039
      %v3522 = vpop.f32.mrf.mxu0
      %v3523 = vadd.f32 %v3510, %v3522
      %v3524 = vpop.f32.mrf.mxu0
      %3525 = vdwg.mxu0
      %3526 = vmatpush.bf16.msra.mxu0 %v2739
      %3527 = vmatpush.bf16.msra.mxu0 %v2738
      %3528 = vmatpush.bf16.msra.mxu0 %v2737
      %3529 = vmatpush.bf16.msra.mxu0 %v2736
      %3530 = vmatpush.bf16.msra.mxu0 %v2735
      %3531 = vmatpush.bf16.msra.mxu0 %v2734
      %3532 = vmatpush.bf16.msra.mxu0 %v2733
      %3533 = vmatpush.bf16.msra.mxu0 %v2732
      %3534 = vmatmul.bf16.gmra.mxu0 %v1040
      %v3535 = vpop.f32.mrf.mxu0
      %v3536 = vadd.f32 %v3523, %v3535
      %v3537 = vpop.f32.mrf.mxu0
      %3538 = vdwg.mxu0
      %3539 = vmatpush.bf16.msra.mxu0 %v2747
      %3540 = vmatpush.bf16.msra.mxu0 %v2746
      %3541 = vmatpush.bf16.msra.mxu0 %v2745
      %3542 = vmatpush.bf16.msra.mxu0 %v2744
      %3543 = vmatpush.bf16.msra.mxu0 %v2743
      %3544 = vmatpush.bf16.msra.mxu0 %v2742
      %3545 = vmatpush.bf16.msra.mxu0 %v2741
      %3546 = vmatpush.bf16.msra.mxu0 %v2740
      %3547 = vmatmul.bf16.gmra.mxu0 %v1041
      %v3548 = vpop.f32.mrf.mxu0
      %v3549 = vadd.f32 %v3536, %v3548
      %v3550 = vpop.f32.mrf.mxu0
      %3551 = vdwg.mxu0
      %3552 = vmatpush.bf16.msra.mxu0 %v2755
      %3553 = vmatpush.bf16.msra.mxu0 %v2754
      %3554 = vmatpush.bf16.msra.mxu0 %v2753
      %3555 = vmatpush.bf16.msra.mxu0 %v2752
      %3556 = vmatpush.bf16.msra.mxu0 %v2751
      %3557 = vmatpush.bf16.msra.mxu0 %v2750
      %3558 = vmatpush.bf16.msra.mxu0 %v2749
      %3559 = vmatpush.bf16.msra.mxu0 %v2748
      %3560 = vmatmul.bf16.gmra.mxu0 %v1042
      %v3561 = vpop.f32.mrf.mxu0
      %v3562 = vadd.f32 %v3549, %v3561
      %v3563 = vpop.f32.mrf.mxu0
      %3564 = vdwg.mxu0
      %3565 = vmatpush.bf16.msra.mxu0 %v2763
      %3566 = vmatpush.bf16.msra.mxu0 %v2762
      %3567 = vmatpush.bf16.msra.mxu0 %v2761
      %3568 = vmatpush.bf16.msra.mxu0 %v2760
      %3569 = vmatpush.bf16.msra.mxu0 %v2759
      %3570 = vmatpush.bf16.msra.mxu0 %v2758
      %3571 = vmatpush.bf16.msra.mxu0 %v2757
      %3572 = vmatpush.bf16.msra.mxu0 %v2756
      %3573 = vmatmul.bf16.gmra.mxu0 %v1043
      %v3574 = vpop.f32.mrf.mxu0
      %v3575 = vadd.f32 %v3562, %v3574
      %v3576 = vpop.f32.mrf.mxu0
      %3577 = vdwg.mxu0
      %3578 = vmatpush.bf16.msra.mxu0 %v2771
      %3579 = vmatpush.bf16.msra.mxu0 %v2770
      %3580 = vmatpush.bf16.msra.mxu0 %v2769
      %3581 = vmatpush.bf16.msra.mxu0 %v2768
      %3582 = vmatpush.bf16.msra.mxu0 %v2767
      %3583 = vmatpush.bf16.msra.mxu0 %v2766
      %3584 = vmatpush.bf16.msra.mxu0 %v2765
      %3585 = vmatpush.bf16.msra.mxu0 %v2764
      %3586 = vmatmul.bf16.gmra.mxu0 %v1044
      %v3587 = vpop.f32.mrf.mxu0
      %v3588 = vadd.f32 %v3575, %v3587
      %v3589 = vpop.f32.mrf.mxu0
      %3590 = vdwg.mxu0
      %3591 = vmatpush.bf16.msra.mxu0 %v2779
      %3592 = vmatpush.bf16.msra.mxu0 %v2778
      %3593 = vmatpush.bf16.msra.mxu0 %v2777
      %3594 = vmatpush.bf16.msra.mxu0 %v2776
      %3595 = vmatpush.bf16.msra.mxu0 %v2775
      %3596 = vmatpush.bf16.msra.mxu0 %v2774
      %3597 = vmatpush.bf16.msra.mxu0 %v2773
      %3598 = vmatpush.bf16.msra.mxu0 %v2772
      %3599 = vmatmul.bf16.gmra.mxu0 %v1045
      %v3600 = vpop.f32.mrf.mxu0
      %v3601 = vadd.f32 %v3588, %v3600
      %v3602 = vpop.f32.mrf.mxu0
      %3603 = vdwg.mxu0
      %3604 = vmatpush.bf16.msra.mxu0 %v2787
      %3605 = vmatpush.bf16.msra.mxu0 %v2786
      %3606 = vmatpush.bf16.msra.mxu0 %v2785
      %3607 = vmatpush.bf16.msra.mxu0 %v2784
      %3608 = vmatpush.bf16.msra.mxu0 %v2783
      %3609 = vmatpush.bf16.msra.mxu0 %v2782
      %3610 = vmatpush.bf16.msra.mxu0 %v2781
      %3611 = vmatpush.bf16.msra.mxu0 %v2780
      %3612 = vmatmul.bf16.gmra.mxu0 %v1048
      %v3613 = vpop.f32.mrf.mxu0
      %v3614 = vadd.f32 %v3601, %v3613
      %v3615 = vpop.f32.mrf.mxu0
      %3616 = vdwg.mxu0
      %3617 = vmatpush.bf16.msra.mxu0 %v2795
      %3618 = vmatpush.bf16.msra.mxu0 %v2794
      %3619 = vmatpush.bf16.msra.mxu0 %v2793
      %3620 = vmatpush.bf16.msra.mxu0 %v2792
      %3621 = vmatpush.bf16.msra.mxu0 %v2791
      %3622 = vmatpush.bf16.msra.mxu0 %v2790
      %3623 = vmatpush.bf16.msra.mxu0 %v2789
      %3624 = vmatpush.bf16.msra.mxu0 %v2788
      %3625 = vmatmul.bf16.gmra.mxu0 %v1049
      %v3626 = vpop.f32.mrf.mxu0
      %v3627 = vadd.f32 %v3614, %v3626
      %v3628 = vpop.f32.mrf.mxu0
      %3629 = vdwg.mxu0
      %3630 = vmatpush.bf16.msra.mxu0 %v2803
      %3631 = vmatpush.bf16.msra.mxu0 %v2802
      %3632 = vmatpush.bf16.msra.mxu0 %v2801
      %3633 = vmatpush.bf16.msra.mxu0 %v2800
      %3634 = vmatpush.bf16.msra.mxu0 %v2799
      %3635 = vmatpush.bf16.msra.mxu0 %v2798
      %3636 = vmatpush.bf16.msra.mxu0 %v2797
      %3637 = vmatpush.bf16.msra.mxu0 %v2796
      %3638 = vmatmul.bf16.gmra.mxu0 %v1050
      %v3639 = vpop.f32.mrf.mxu0
      %v3640 = vadd.f32 %v3627, %v3639
      %v3641 = vpop.f32.mrf.mxu0
      %3642 = vdwg.mxu0
      %3643 = vmatpush.bf16.msra.mxu0 %v2811
      %3644 = vmatpush.bf16.msra.mxu0 %v2810
      %3645 = vmatpush.bf16.msra.mxu0 %v2809
      %3646 = vmatpush.bf16.msra.mxu0 %v2808
      %3647 = vmatpush.bf16.msra.mxu0 %v2807
      %3648 = vmatpush.bf16.msra.mxu0 %v2806
      %3649 = vmatpush.bf16.msra.mxu0 %v2805
      %3650 = vmatpush.bf16.msra.mxu0 %v2804
      %3651 = vmatmul.bf16.gmra.mxu0 %v1051
      %v3652 = vpop.f32.mrf.mxu0
      %v3653 = vadd.f32 %v3640, %v3652
      %v3654 = vpop.f32.mrf.mxu0
      %3655 = vdwg.mxu0
      %3656 = vmatpush.bf16.msra.mxu0 %v2819
      %3657 = vmatpush.bf16.msra.mxu0 %v2818
      %3658 = vmatpush.bf16.msra.mxu0 %v2817
      %3659 = vmatpush.bf16.msra.mxu0 %v2816
      %3660 = vmatpush.bf16.msra.mxu0 %v2815
      %3661 = vmatpush.bf16.msra.mxu0 %v2814
      %3662 = vmatpush.bf16.msra.mxu0 %v2813
      %3663 = vmatpush.bf16.msra.mxu0 %v2812
      %3664 = vmatmul.bf16.gmra.mxu0 %v1052
      %v3665 = vpop.f32.mrf.mxu0
      %v3666 = vadd.f32 %v3653, %v3665
      %v3667 = vpop.f32.mrf.mxu0
      %3668 = vdwg.mxu0
      %3669 = vmatpush.bf16.msra.mxu0 %v2827
      %3670 = vmatpush.bf16.msra.mxu0 %v2826
      %3671 = vmatpush.bf16.msra.mxu0 %v2825
      %3672 = vmatpush.bf16.msra.mxu0 %v2824
      %3673 = vmatpush.bf16.msra.mxu0 %v2823
      %3674 = vmatpush.bf16.msra.mxu0 %v2822
      %3675 = vmatpush.bf16.msra.mxu0 %v2821
      %3676 = vmatpush.bf16.msra.mxu0 %v2820
      %3677 = vmatmul.bf16.gmra.mxu0 %v1053
      %v3678 = vpop.f32.mrf.mxu0
      %v3679 = vadd.f32 %v3666, %v3678
      %v3680 = vpop.f32.mrf.mxu0
      %3681 = vdwg.mxu0
      %3682 = vmatpush.bf16.msra.mxu0 %v2835
      %3683 = vmatpush.bf16.msra.mxu0 %v2834
      %3684 = vmatpush.bf16.msra.mxu0 %v2833
      %3685 = vmatpush.bf16.msra.mxu0 %v2832
      %3686 = vmatpush.bf16.msra.mxu0 %v2831
      %3687 = vmatpush.bf16.msra.mxu0 %v2830
      %3688 = vmatpush.bf16.msra.mxu0 %v2829
      %3689 = vmatpush.bf16.msra.mxu0 %v2828
      %3690 = vmatmul.bf16.gmra.mxu0 %v1054
      %v3691 = vpop.f32.mrf.mxu0
      %v3692 = vadd.f32 %v3679, %v3691
      %v3693 = vpop.f32.mrf.mxu0
      %3694 = vdwg.mxu0
      %3695 = vmatpush.bf16.msra.mxu0 %v2843
      %3696 = vmatpush.bf16.msra.mxu0 %v2842
      %3697 = vmatpush.bf16.msra.mxu0 %v2841
      %3698 = vmatpush.bf16.msra.mxu0 %v2840
      %3699 = vmatpush.bf16.msra.mxu0 %v2839
      %3700 = vmatpush.bf16.msra.mxu0 %v2838
      %3701 = vmatpush.bf16.msra.mxu0 %v2837
      %3702 = vmatpush.bf16.msra.mxu0 %v2836
      %3703 = vmatmul.bf16.gmra.mxu0 %v1055
      %v3704 = vpop.f32.mrf.mxu0
      %v3705 = vadd.f32 %v3692, %v3704
      %v3706 = vpop.f32.mrf.mxu0
      %3707 = vdwg.mxu0
      %3708 = vmatpush.bf16.msra.mxu0 %v2851
      %3709 = vmatpush.bf16.msra.mxu0 %v2850
      %3710 = vmatpush.bf16.msra.mxu0 %v2849
      %3711 = vmatpush.bf16.msra.mxu0 %v2848
      %3712 = vmatpush.bf16.msra.mxu0 %v2847
      %3713 = vmatpush.bf16.msra.mxu0 %v2846
      %3714 = vmatpush.bf16.msra.mxu0 %v2845
      %3715 = vmatpush.bf16.msra.mxu0 %v2844
      %3716 = vmatmul.bf16.gmra.mxu0 %v1058
      %v3717 = vpop.f32.mrf.mxu0
      %v3718 = vadd.f32 %v3705, %v3717
      %v3719 = vpop.f32.mrf.mxu0
      %3720 = vdwg.mxu0
      %3721 = vmatpush.bf16.msra.mxu0 %v2859
      %3722 = vmatpush.bf16.msra.mxu0 %v2858
      %3723 = vmatpush.bf16.msra.mxu0 %v2857
      %3724 = vmatpush.bf16.msra.mxu0 %v2856
      %3725 = vmatpush.bf16.msra.mxu0 %v2855
      %3726 = vmatpush.bf16.msra.mxu0 %v2854
      %3727 = vmatpush.bf16.msra.mxu0 %v2853
      %3728 = vmatpush.bf16.msra.mxu0 %v2852
      %3729 = vmatmul.bf16.gmra.mxu0 %v1059
      %v3730 = vpop.f32.mrf.mxu0
      %v3731 = vadd.f32 %v3718, %v3730
      %v3732 = vpop.f32.mrf.mxu0
      %3733 = vdwg.mxu0
      %3734 = vmatpush.bf16.msra.mxu0 %v2867
      %3735 = vmatpush.bf16.msra.mxu0 %v2866
      %3736 = vmatpush.bf16.msra.mxu0 %v2865
      %3737 = vmatpush.bf16.msra.mxu0 %v2864
      %3738 = vmatpush.bf16.msra.mxu0 %v2863
      %3739 = vmatpush.bf16.msra.mxu0 %v2862
      %3740 = vmatpush.bf16.msra.mxu0 %v2861
      %3741 = vmatpush.bf16.msra.mxu0 %v2860
      %3742 = vmatmul.bf16.gmra.mxu0 %v1060
      %v3743 = vpop.f32.mrf.mxu0
      %v3744 = vadd.f32 %v3731, %v3743
      %v3745 = vpop.f32.mrf.mxu0
      %3746 = vdwg.mxu0
      %3747 = vmatpush.bf16.msra.mxu0 %v2875
      %3748 = vmatpush.bf16.msra.mxu0 %v2874
      %3749 = vmatpush.bf16.msra.mxu0 %v2873
      %3750 = vmatpush.bf16.msra.mxu0 %v2872
      %3751 = vmatpush.bf16.msra.mxu0 %v2871
      %3752 = vmatpush.bf16.msra.mxu0 %v2870
      %3753 = vmatpush.bf16.msra.mxu0 %v2869
      %3754 = vmatpush.bf16.msra.mxu0 %v2868
      %3755 = vmatmul.bf16.gmra.mxu0 %v1061
      %v3756 = vpop.f32.mrf.mxu0
      %v3757 = vadd.f32 %v3744, %v3756
      %v3758 = vpop.f32.mrf.mxu0
      %3759 = vdwg.mxu0
      %3760 = vmatpush.bf16.msra.mxu0 %v2883
      %3761 = vmatpush.bf16.msra.mxu0 %v2882
      %3762 = vmatpush.bf16.msra.mxu0 %v2881
      %3763 = vmatpush.bf16.msra.mxu0 %v2880
      %3764 = vmatpush.bf16.msra.mxu0 %v2879
      %3765 = vmatpush.bf16.msra.mxu0 %v2878
      %3766 = vmatpush.bf16.msra.mxu0 %v2877
      %3767 = vmatpush.bf16.msra.mxu0 %v2876
      %3768 = vmatmul.bf16.gmra.mxu0 %v1062
      %v3769 = vpop.f32.mrf.mxu0
      %v3770 = vadd.f32 %v3757, %v3769
      %v3771 = vpop.f32.mrf.mxu0
      %3772 = vdwg.mxu0
      %3773 = vmatpush.bf16.msra.mxu0 %v2891
      %3774 = vmatpush.bf16.msra.mxu0 %v2890
      %3775 = vmatpush.bf16.msra.mxu0 %v2889
      %3776 = vmatpush.bf16.msra.mxu0 %v2888
      %3777 = vmatpush.bf16.msra.mxu0 %v2887
      %3778 = vmatpush.bf16.msra.mxu0 %v2886
      %3779 = vmatpush.bf16.msra.mxu0 %v2885
      %3780 = vmatpush.bf16.msra.mxu0 %v2884
      %3781 = vmatmul.bf16.gmra.mxu0 %v1063
      %v3782 = vpop.f32.mrf.mxu0
      %v3783 = vadd.f32 %v3770, %v3782
      %v3784 = vpop.f32.mrf.mxu0
      %3785 = vdwg.mxu0
      %3786 = vmatpush.bf16.msra.mxu0 %v2899
      %3787 = vmatpush.bf16.msra.mxu0 %v2898
      %3788 = vmatpush.bf16.msra.mxu0 %v2897
      %3789 = vmatpush.bf16.msra.mxu0 %v2896
      %3790 = vmatpush.bf16.msra.mxu0 %v2895
      %3791 = vmatpush.bf16.msra.mxu0 %v2894
      %3792 = vmatpush.bf16.msra.mxu0 %v2893
      %3793 = vmatpush.bf16.msra.mxu0 %v2892
      %3794 = vmatmul.bf16.gmra.mxu0 %v1064
      %v3795 = vpop.f32.mrf.mxu0
      %v3796 = vadd.f32 %v3783, %v3795
      %v3797 = vpop.f32.mrf.mxu0
      %3798 = vdwg.mxu0
      %3799 = vmatpush.bf16.msra.mxu0 %v2907
      %3800 = vmatpush.bf16.msra.mxu0 %v2906
      %3801 = vmatpush.bf16.msra.mxu0 %v2905
      %3802 = vmatpush.bf16.msra.mxu0 %v2904
      %3803 = vmatpush.bf16.msra.mxu0 %v2903
      %3804 = vmatpush.bf16.msra.mxu0 %v2902
      %3805 = vmatpush.bf16.msra.mxu0 %v2901
      %3806 = vmatpush.bf16.msra.mxu0 %v2900
      %3807 = vmatmul.bf16.gmra.mxu0 %v1065
      %v3808 = vpop.f32.mrf.mxu0
      %v3809 = vadd.f32 %v3796, %v3808
      %v3810 = vpop.f32.mrf.mxu0
      %3811 = vdwg.mxu0
      %3812 = vmatpush.bf16.msra.mxu0 %v2915
      %3813 = vmatpush.bf16.msra.mxu0 %v2914
      %3814 = vmatpush.bf16.msra.mxu0 %v2913
      %3815 = vmatpush.bf16.msra.mxu0 %v2912
      %3816 = vmatpush.bf16.msra.mxu0 %v2911
      %3817 = vmatpush.bf16.msra.mxu0 %v2910
      %3818 = vmatpush.bf16.msra.mxu0 %v2909
      %3819 = vmatpush.bf16.msra.mxu0 %v2908
      %3820 = vmatmul.bf16.gmra.mxu0 %v1068
      %v3821 = vpop.f32.mrf.mxu0
      %v3822 = vadd.f32 %v3809, %v3821
      %v3823 = vpop.f32.mrf.mxu0
      %3824 = vdwg.mxu0
      %3825 = vmatpush.bf16.msra.mxu0 %v2923
      %3826 = vmatpush.bf16.msra.mxu0 %v2922
      %3827 = vmatpush.bf16.msra.mxu0 %v2921
      %3828 = vmatpush.bf16.msra.mxu0 %v2920
      %3829 = vmatpush.bf16.msra.mxu0 %v2919
      %3830 = vmatpush.bf16.msra.mxu0 %v2918
      %3831 = vmatpush.bf16.msra.mxu0 %v2917
      %3832 = vmatpush.bf16.msra.mxu0 %v2916
      %3833 = vmatmul.bf16.gmra.mxu0 %v1069
      %v3834 = vpop.f32.mrf.mxu0
      %v3835 = vadd.f32 %v3822, %v3834
      %v3836 = vpop.f32.mrf.mxu0
      %3837 = vdwg.mxu0
      %3838 = vmatpush.bf16.msra.mxu0 %v2931
      %3839 = vmatpush.bf16.msra.mxu0 %v2930
      %3840 = vmatpush.bf16.msra.mxu0 %v2929
      %3841 = vmatpush.bf16.msra.mxu0 %v2928
      %3842 = vmatpush.bf16.msra.mxu0 %v2927
      %3843 = vmatpush.bf16.msra.mxu0 %v2926
      %3844 = vmatpush.bf16.msra.mxu0 %v2925
      %3845 = vmatpush.bf16.msra.mxu0 %v2924
      %3846 = vmatmul.bf16.gmra.mxu0 %v1070
      %v3847 = vpop.f32.mrf.mxu0
      %v3848 = vadd.f32 %v3835, %v3847
      %v3849 = vpop.f32.mrf.mxu0
      %3850 = vdwg.mxu0
      %3851 = vmatpush.bf16.msra.mxu0 %v2939
      %3852 = vmatpush.bf16.msra.mxu0 %v2938
      %3853 = vmatpush.bf16.msra.mxu0 %v2937
      %3854 = vmatpush.bf16.msra.mxu0 %v2936
      %3855 = vmatpush.bf16.msra.mxu0 %v2935
      %3856 = vmatpush.bf16.msra.mxu0 %v2934
      %3857 = vmatpush.bf16.msra.mxu0 %v2933
      %3858 = vmatpush.bf16.msra.mxu0 %v2932
      %3859 = vmatmul.bf16.gmra.mxu0 %v1071
      %v3860 = vpop.f32.mrf.mxu0
      %v3861 = vadd.f32 %v3848, %v3860
      %v3862 = vpop.f32.mrf.mxu0
      %3863 = vdwg.mxu0
      %3864 = vmatpush.bf16.msra.mxu0 %v2947
      %3865 = vmatpush.bf16.msra.mxu0 %v2946
      %3866 = vmatpush.bf16.msra.mxu0 %v2945
      %3867 = vmatpush.bf16.msra.mxu0 %v2944
      %3868 = vmatpush.bf16.msra.mxu0 %v2943
      %3869 = vmatpush.bf16.msra.mxu0 %v2942
      %3870 = vmatpush.bf16.msra.mxu0 %v2941
      %3871 = vmatpush.bf16.msra.mxu0 %v2940
      %3872 = vmatmul.bf16.gmra.mxu0 %v1072
      %v3873 = vpop.f32.mrf.mxu0
      %v3874 = vadd.f32 %v3861, %v3873
      %v3875 = vpop.f32.mrf.mxu0
      %3876 = vdwg.mxu0
      %3877 = vmatpush.bf16.msra.mxu0 %v2955
      %3878 = vmatpush.bf16.msra.mxu0 %v2954
      %3879 = vmatpush.bf16.msra.mxu0 %v2953
      %3880 = vmatpush.bf16.msra.mxu0 %v2952
      %3881 = vmatpush.bf16.msra.mxu0 %v2951
      %3882 = vmatpush.bf16.msra.mxu0 %v2950
      %3883 = vmatpush.bf16.msra.mxu0 %v2949
      %3884 = vmatpush.bf16.msra.mxu0 %v2948
      %3885 = vmatmul.bf16.gmra.mxu0 %v1073
      %v3886 = vpop.f32.mrf.mxu0
      %v3887 = vadd.f32 %v3874, %v3886
      %v3888 = vpop.f32.mrf.mxu0
      %3889 = vdwg.mxu0
      %3890 = vmatpush.bf16.msra.mxu0 %v2963
      %3891 = vmatpush.bf16.msra.mxu0 %v2962
      %3892 = vmatpush.bf16.msra.mxu0 %v2961
      %3893 = vmatpush.bf16.msra.mxu0 %v2960
      %3894 = vmatpush.bf16.msra.mxu0 %v2959
      %3895 = vmatpush.bf16.msra.mxu0 %v2958
      %3896 = vmatpush.bf16.msra.mxu0 %v2957
      %3897 = vmatpush.bf16.msra.mxu0 %v2956
      %3898 = vmatmul.bf16.gmra.mxu0 %v1074
      %v3899 = vpop.f32.mrf.mxu0
      %v3900 = vadd.f32 %v3887, %v3899
      %v3901 = vpop.f32.mrf.mxu0
      %3902 = vdwg.mxu0
      %3903 = vmatpush.bf16.msra.mxu0 %v2971
      %3904 = vmatpush.bf16.msra.mxu0 %v2970
      %3905 = vmatpush.bf16.msra.mxu0 %v2969
      %3906 = vmatpush.bf16.msra.mxu0 %v2968
      %3907 = vmatpush.bf16.msra.mxu0 %v2967
      %3908 = vmatpush.bf16.msra.mxu0 %v2966
      %3909 = vmatpush.bf16.msra.mxu0 %v2965
      %3910 = vmatpush.bf16.msra.mxu0 %v2964
      %3911 = vmatmul.bf16.gmra.mxu0 %v1075
      %v3912 = vpop.f32.mrf.mxu0
      %v3913 = vadd.f32 %v3900, %v3912
      %v3914 = vpop.f32.mrf.mxu0
      %3915 = vdwg.mxu0
      %3916 = vmatpush.bf16.msra.mxu0 %v2979
      %3917 = vmatpush.bf16.msra.mxu0 %v2978
      %3918 = vmatpush.bf16.msra.mxu0 %v2977
      %3919 = vmatpush.bf16.msra.mxu0 %v2976
      %3920 = vmatpush.bf16.msra.mxu0 %v2975
      %3921 = vmatpush.bf16.msra.mxu0 %v2974
      %3922 = vmatpush.bf16.msra.mxu0 %v2973
      %3923 = vmatpush.bf16.msra.mxu0 %v2972
      %3924 = vmatmul.bf16.gmra.mxu0 %v1078
      %v3925 = vpop.f32.mrf.mxu0
      %v3926 = vadd.f32 %v3913, %v3925
      %v3927 = vpop.f32.mrf.mxu0
      %3928 = vdwg.mxu0
      %3929 = vmatpush.bf16.msra.mxu0 %v2987
      %3930 = vmatpush.bf16.msra.mxu0 %v2986
      %3931 = vmatpush.bf16.msra.mxu0 %v2985
      %3932 = vmatpush.bf16.msra.mxu0 %v2984
      %3933 = vmatpush.bf16.msra.mxu0 %v2983
      %3934 = vmatpush.bf16.msra.mxu0 %v2982
      %3935 = vmatpush.bf16.msra.mxu0 %v2981
      %3936 = vmatpush.bf16.msra.mxu0 %v2980
      %3937 = vmatmul.bf16.gmra.mxu0 %v1079
      %v3938 = vpop.f32.mrf.mxu0
      %v3939 = vadd.f32 %v3926, %v3938
      %v3940 = vpop.f32.mrf.mxu0
      %3941 = vdwg.mxu0
      %3942 = vmatpush.bf16.msra.mxu0 %v2995
      %3943 = vmatpush.bf16.msra.mxu0 %v2994
      %3944 = vmatpush.bf16.msra.mxu0 %v2993
      %3945 = vmatpush.bf16.msra.mxu0 %v2992
      %3946 = vmatpush.bf16.msra.mxu0 %v2991
      %3947 = vmatpush.bf16.msra.mxu0 %v2990
      %3948 = vmatpush.bf16.msra.mxu0 %v2989
      %3949 = vmatpush.bf16.msra.mxu0 %v2988
      %3950 = vmatmul.bf16.gmra.mxu0 %v1080
      %v3951 = vpop.f32.mrf.mxu0
      %v3952 = vadd.f32 %v3939, %v3951
      %v3953 = vpop.f32.mrf.mxu0
      %3954 = vdwg.mxu0
      %3955 = vmatpush.bf16.msra.mxu0 %v3003
      %3956 = vmatpush.bf16.msra.mxu0 %v3002
      %3957 = vmatpush.bf16.msra.mxu0 %v3001
      %3958 = vmatpush.bf16.msra.mxu0 %v3000
      %3959 = vmatpush.bf16.msra.mxu0 %v2999
      %3960 = vmatpush.bf16.msra.mxu0 %v2998
      %3961 = vmatpush.bf16.msra.mxu0 %v2997
      %3962 = vmatpush.bf16.msra.mxu0 %v2996
      %3963 = vmatmul.bf16.gmra.mxu0 %v1081
      %v3964 = vpop.f32.mrf.mxu0
      %v3965 = vadd.f32 %v3952, %v3964
      %v3966 = vpop.f32.mrf.mxu0
      %3967 = vdwg.mxu0
      %3968 = vmatpush.bf16.msra.mxu0 %v3011
      %3969 = vmatpush.bf16.msra.mxu0 %v3010
      %3970 = vmatpush.bf16.msra.mxu0 %v3009
      %3971 = vmatpush.bf16.msra.mxu0 %v3008
      %3972 = vmatpush.bf16.msra.mxu0 %v3007
      %3973 = vmatpush.bf16.msra.mxu0 %v3006
      %3974 = vmatpush.bf16.msra.mxu0 %v3005
      %3975 = vmatpush.bf16.msra.mxu0 %v3004
      %3976 = vmatmul.bf16.gmra.mxu0 %v1082
      %v3977 = vpop.f32.mrf.mxu0
      %v3978 = vadd.f32 %v3965, %v3977
      %v3979 = vpop.f32.mrf.mxu0
      %3980 = vdwg.mxu0
      %3981 = vmatpush.bf16.msra.mxu0 %v3019
      %3982 = vmatpush.bf16.msra.mxu0 %v3018
      %3983 = vmatpush.bf16.msra.mxu0 %v3017
      %3984 = vmatpush.bf16.msra.mxu0 %v3016
      %3985 = vmatpush.bf16.msra.mxu0 %v3015
      %3986 = vmatpush.bf16.msra.mxu0 %v3014
      %3987 = vmatpush.bf16.msra.mxu0 %v3013
      %3988 = vmatpush.bf16.msra.mxu0 %v3012
      %3989 = vmatmul.bf16.gmra.mxu0 %v1083
      %v3990 = vpop.f32.mrf.mxu0
      %v3991 = vadd.f32 %v3978, %v3990
      %v3992 = vpop.f32.mrf.mxu0
      %3993 = vdwg.mxu0
      %3994 = vmatpush.bf16.msra.mxu0 %v3027
      %3995 = vmatpush.bf16.msra.mxu0 %v3026
      %3996 = vmatpush.bf16.msra.mxu0 %v3025
      %3997 = vmatpush.bf16.msra.mxu0 %v3024
      %3998 = vmatpush.bf16.msra.mxu0 %v3023
      %3999 = vmatpush.bf16.msra.mxu0 %v3022
      %4000 = vmatpush.bf16.msra.mxu0 %v3021
      %4001 = vmatpush.bf16.msra.mxu0 %v3020
      %4002 = vmatmul.bf16.gmra.mxu0 %v1084
      %v4003 = vpop.f32.mrf.mxu0
      %v4004 = vadd.f32 %v3991, %v4003
      %v4005 = vpop.f32.mrf.mxu0
      %4006 = vdwg.mxu0
      %4007 = vmatpush.bf16.msra.mxu0 %v3035
      %4008 = vmatpush.bf16.msra.mxu0 %v3034
      %4009 = vmatpush.bf16.msra.mxu0 %v3033
      %4010 = vmatpush.bf16.msra.mxu0 %v3032
      %4011 = vmatpush.bf16.msra.mxu0 %v3031
      %4012 = vmatpush.bf16.msra.mxu0 %v3030
      %4013 = vmatpush.bf16.msra.mxu0 %v3029
      %4014 = vmatpush.bf16.msra.mxu0 %v3028
      %4015 = vmatmul.bf16.gmra.mxu0 %v1085
      %v4016 = vpop.f32.mrf.mxu0
      %v4017 = vadd.f32 %v4004, %v4016
      %v4018 = vpop.f32.mrf.mxu0
      %4019 = vdwg.mxu0
      %4020 = vmatpush.bf16.msra.mxu0 %v3043
      %4021 = vmatpush.bf16.msra.mxu0 %v3042
      %4022 = vmatpush.bf16.msra.mxu0 %v3041
      %4023 = vmatpush.bf16.msra.mxu0 %v3040
      %4024 = vmatpush.bf16.msra.mxu0 %v3039
      %4025 = vmatpush.bf16.msra.mxu0 %v3038
      %4026 = vmatpush.bf16.msra.mxu0 %v3037
      %4027 = vmatpush.bf16.msra.mxu0 %v3036
      %4028 = vmatmul.bf16.gmra.mxu0 %v1088
      %v4029 = vpop.f32.mrf.mxu0
      %v4030 = vadd.f32 %v4017, %v4029
      %v4031 = vpop.f32.mrf.mxu0
      %4032 = vdwg.mxu0
      %4033 = vmatpush.bf16.msra.mxu0 %v3051
      %4034 = vmatpush.bf16.msra.mxu0 %v3050
      %4035 = vmatpush.bf16.msra.mxu0 %v3049
      %4036 = vmatpush.bf16.msra.mxu0 %v3048
      %4037 = vmatpush.bf16.msra.mxu0 %v3047
      %4038 = vmatpush.bf16.msra.mxu0 %v3046
      %4039 = vmatpush.bf16.msra.mxu0 %v3045
      %4040 = vmatpush.bf16.msra.mxu0 %v3044
      %4041 = vmatmul.bf16.gmra.mxu0 %v1089
      %v4042 = vpop.f32.mrf.mxu0
      %v4043 = vadd.f32 %v4030, %v4042
      %v4044 = vpop.f32.mrf.mxu0
      %4045 = vdwg.mxu0
      %4046 = vmatpush.bf16.msra.mxu0 %v3059
      %4047 = vmatpush.bf16.msra.mxu0 %v3058
      %4048 = vmatpush.bf16.msra.mxu0 %v3057
      %4049 = vmatpush.bf16.msra.mxu0 %v3056
      %4050 = vmatpush.bf16.msra.mxu0 %v3055
      %4051 = vmatpush.bf16.msra.mxu0 %v3054
      %4052 = vmatpush.bf16.msra.mxu0 %v3053
      %4053 = vmatpush.bf16.msra.mxu0 %v3052
      %4054 = vmatmul.bf16.gmra.mxu0 %v1090
      %v4055 = vpop.f32.mrf.mxu0
      %v4056 = vadd.f32 %v4043, %v4055
      %v4057 = vpop.f32.mrf.mxu0
      %4058 = vdwg.mxu0
      %4059 = vmatpush.bf16.msra.mxu0 %v3067
      %4060 = vmatpush.bf16.msra.mxu0 %v3066
      %4061 = vmatpush.bf16.msra.mxu0 %v3065
      %4062 = vmatpush.bf16.msra.mxu0 %v3064
      %4063 = vmatpush.bf16.msra.mxu0 %v3063
      %4064 = vmatpush.bf16.msra.mxu0 %v3062
      %4065 = vmatpush.bf16.msra.mxu0 %v3061
      %4066 = vmatpush.bf16.msra.mxu0 %v3060
      %4067 = vmatmul.bf16.gmra.mxu0 %v1091
      %v4068 = vpop.f32.mrf.mxu0
      %v4069 = vadd.f32 %v4056, %v4068
      %v4070 = vpop.f32.mrf.mxu0
      %4071 = vdwg.mxu0
      %4072 = vmatpush.bf16.msra.mxu0 %v3075
      %4073 = vmatpush.bf16.msra.mxu0 %v3074
      %4074 = vmatpush.bf16.msra.mxu0 %v3073
      %4075 = vmatpush.bf16.msra.mxu0 %v3072
      %4076 = vmatpush.bf16.msra.mxu0 %v3071
      %4077 = vmatpush.bf16.msra.mxu0 %v3070
      %4078 = vmatpush.bf16.msra.mxu0 %v3069
      %4079 = vmatpush.bf16.msra.mxu0 %v3068
      %4080 = vmatmul.bf16.gmra.mxu0 %v1092
      %v4081 = vpop.f32.mrf.mxu0
      %v4082 = vadd.f32 %v4069, %v4081
      %v4083 = vpop.f32.mrf.mxu0
      %4084 = vdwg.mxu0
      %4085 = vmatpush.bf16.msra.mxu0 %v3083
      %4086 = vmatpush.bf16.msra.mxu0 %v3082
      %4087 = vmatpush.bf16.msra.mxu0 %v3081
      %4088 = vmatpush.bf16.msra.mxu0 %v3080
      %4089 = vmatpush.bf16.msra.mxu0 %v3079
      %4090 = vmatpush.bf16.msra.mxu0 %v3078
      %4091 = vmatpush.bf16.msra.mxu0 %v3077
      %4092 = vmatpush.bf16.msra.mxu0 %v3076
      %4093 = vmatmul.bf16.gmra.mxu0 %v1093
      %v4094 = vpop.f32.mrf.mxu0
      %v4095 = vadd.f32 %v4082, %v4094
      %v4096 = vpop.f32.mrf.mxu0
      %4097 = vdwg.mxu0
      %4098 = vmatpush.bf16.msra.mxu0 %v3091
      %4099 = vmatpush.bf16.msra.mxu0 %v3090
      %4100 = vmatpush.bf16.msra.mxu0 %v3089
      %4101 = vmatpush.bf16.msra.mxu0 %v3088
      %4102 = vmatpush.bf16.msra.mxu0 %v3087
      %4103 = vmatpush.bf16.msra.mxu0 %v3086
      %4104 = vmatpush.bf16.msra.mxu0 %v3085
      %4105 = vmatpush.bf16.msra.mxu0 %v3084
      %4106 = vmatmul.bf16.gmra.mxu0 %v1094
      %v4107 = vpop.f32.mrf.mxu0
      %v4108 = vadd.f32 %v4095, %v4107
      %v4109 = vpop.f32.mrf.mxu0
      %4110 = vdwg.mxu0
      %4111 = vmatpush.bf16.msra.mxu0 %v3099
      %4112 = vmatpush.bf16.msra.mxu0 %v3098
      %4113 = vmatpush.bf16.msra.mxu0 %v3097
      %4114 = vmatpush.bf16.msra.mxu0 %v3096
      %4115 = vmatpush.bf16.msra.mxu0 %v3095
      %4116 = vmatpush.bf16.msra.mxu0 %v3094
      %4117 = vmatpush.bf16.msra.mxu0 %v3093
      %4118 = vmatpush.bf16.msra.mxu0 %v3092
      %4119 = vmatmul.bf16.gmra.mxu0 %v1095
      %v4120 = vpop.f32.mrf.mxu0
      %v4121 = vadd.f32 %v4108, %v4120
      %v4122 = vpop.f32.mrf.mxu0
      %4123 = vdwg.mxu0
      %4124 = vmatpush.bf16.msra.mxu0 %v3107
      %4125 = vmatpush.bf16.msra.mxu0 %v3106
      %4126 = vmatpush.bf16.msra.mxu0 %v3105
      %4127 = vmatpush.bf16.msra.mxu0 %v3104
      %4128 = vmatpush.bf16.msra.mxu0 %v3103
      %4129 = vmatpush.bf16.msra.mxu0 %v3102
      %4130 = vmatpush.bf16.msra.mxu0 %v3101
      %4131 = vmatpush.bf16.msra.mxu0 %v3100
      %4132 = vmatmul.bf16.gmra.mxu0 %v1098
      %v4133 = vpop.f32.mrf.mxu0
      %v4134 = vadd.f32 %v4121, %v4133
      %v4135 = vpop.f32.mrf.mxu0
      %4136 = vdwg.mxu0
      %v4137 = vadd.f32 %v244, %v4134
      %4138 = vst [vmem:[%s229] sm:$0x3] %v4137
      %p4139 = scmp.lt.s32.totalorder %s18, 1
      %s4140 = scalar_select %p4139, %s18, 1
      %s4141 = smul.addr %s4140, 2
      %s4142 = scalar_lea.vmem %s3, %s4141
      // Predicated region
      $region37: #{forward.1} parent=31 // pred_check
        %p4143 = pneg %p125
      $region38: #{forward.1} parent=31 // pred_check_branch
        %4145 = sbr.rel (%p4143) target = $region40
      $region39: #{forward.1} parent=31 // pred_region
        _
      $region40: #{forward.1} parent=31 // pred_fallthru
        _
    $region32: #{forward.1} parent=5 // pred_fallthru
      _
    %p4146 = scmp.le.s32.totalorder 2, %s9
    // Predicated region
    $region41: #{forward.1} parent=5 // pred_check
      %p4147 = pneg %p4146
    $region42: #{forward.1} parent=5 // pred_check_branch
      %4149 = sbr.rel (%p4147) target = $region44
    $region43: #{forward.1} parent=5 // pred_region
      %s4150 = ssub.s32 %s9, 2
      // Predicated region
      $region45: #{forward.1} parent=43 // pred_check
        %p4151 = pneg %p131
      $region46: #{forward.1} parent=43 // pred_check_branch
        %4153 = sbr.rel (%p4151) target = $region48
      $region47: #{forward.1} parent=43 // pred_region
        %p4154 = scmp.lt.s32.totalorder %s20, 1
        %s4155 = scalar_select %p4154, %s20, 1
        %s4156 = smul.addr %s4155, 2
        %s4157 = scalar_lea.vmem %s3, %s4156
      $region48: #{forward.1} parent=43 // pred_fallthru
        _
    $region44: #{forward.1} parent=5 // pred_fallthru
      _
  $region6: #{forward.1} parent=0 // loop_footer
    %s13 = sadd.s32 1, %s9
  $region7: #{forward.1} parent=0 // loop_footer_branch
    %8 = sbr.rel target = $region3
  $region8: #{forward.1} parent=0 // loop_exit
    _

</llo_original>
